<compile_context>
chip_gen: v7x
topology: tpu7x:2x2x1
jax: 0.10.0
libtpu: 0.0.40
codegen_flags: <defaults>
</compile_context>

<pallas_src>
import functools

import jax
import jax.numpy as jnp
from jax.experimental import pallas as pl
from jax.experimental.pallas import tpu as pltpu

_TB_MIN = 8                            # sublane granularity of the batch tile
_LANE = 128                            # lane-dense output width
_UNROLL_T = 16                         # full-unroll threshold for the recurrence
_VMEM_ROW_BUDGET = 24 * 1024 * 1024    # VMEM budget driving the batch-tile cap


def _sel_agg_kernel(
    q_ref,          # (TB, T, d_in) bf16  question embeddings (batch tile)
    lens_ref,       # (TB, 1) i32         question lengths
    wih_ref,        # (d_in, 8H) bf16     [wih_f | wih_b], gate order (i,f,o,g)
    bf_ref, bb_ref,                       # (1, 4H) f32
    whhf_ref, whhb_ref,                   # (H, 4H) f32, gate order (i,f,o,g)
    h0f_ref, c0f_ref, h0b_ref, c0b_ref,   # (1, H) learned init states
    wattf_ref, wattb_ref,                 # (1, H) attention vector halves
    batt_ref,                             # (1, 1)
    w1f_ref, w1b_ref,                     # (H, d_h) W_out[0] halves
    b1_ref,                               # (1, d_h)
    w2_ref, b2_ref,                       # (d_h, 128), (1, 128) lane-padded
    out_ref,                              # (TB, 128) f32 logits (lane-padded)
    *scratch,
    T, TB, H, unrolled,
):
    if unrolled:
        encf_ref, encb_ref = scratch
        gxf_ref = gxb_ref = None
    else:
        gxf_ref, gxb_ref, encf_ref, encb_ref = scratch

    lens = lens_ref[...]                                    # (TB, 1) i32

    # ---- hoisted input projection: ONE bf16 MXU matmul for both directions --
    # batch-major matmul; only the narrow (8H-wide) gate result is relayouted
    # to time-major (much cheaper than transposing the d_in-wide q block).
    q2 = q_ref[...].reshape(TB * T, -1)                     # bf16 (TB*T, d_in)
    gx = jnp.dot(q2, wih_ref[...], preferred_element_type=jnp.float32)
    gx = pltpu.einshape("btg->tbg", gx.reshape(TB, T, 8 * H))   # (T, TB, 8H)
    gxf = gx[:, :, :4 * H] + bf_ref[...]                    # (T, TB, 4H)
    gxb = gx[:, :, 4 * H:] + bb_ref[...]

    # Recurrent weights stay f32: the per-step matmul is tiny & latency-bound
    # and f32 keeps the carried state numerically clean.
    whh_f = whhf_ref[...]
    whh_b = whhb_ref[...]

    # gate order (i, f, o, g): one wide sigmoid + one tanh per direction/step.
    def gates(g, c):
        s = jax.nn.sigmoid(g[:, :3 * H])
        gg = jnp.tanh(g[:, 3 * H:])
        c_new = s[:, H:2 * H] * c + s[:, :H] * gg
        h_new = s[:, 2 * H:3 * H] * jnp.tanh(c_new)
        return h_new, c_new

    # fwd (time t) and bwd (time T-1-t) steps share one loop iteration so their
    # independent matmul + EUP chains overlap on the serial critical path.
    def step(t, tb, gf_in, gb_in, h_f, c_f, h_b, c_b):
        gf = gf_in + jnp.dot(h_f, whh_f, preferred_element_type=jnp.float32)
        gb = gb_in + jnp.dot(h_b, whh_b, preferred_element_type=jnp.float32)
        hf_n, cf_n = gates(gf, c_f)
        hb_n, cb_n = gates(gb, c_b)
        vf = lens > t                                       # (TB, 1)
        vb = lens > tb
        h_f = jnp.where(vf, hf_n, h_f)                      # freeze past length
        c_f = jnp.where(vf, cf_n, c_f)
        h_b = jnp.where(vb, hb_n, h_b)
        c_b = jnp.where(vb, cb_n, c_b)
        encf_ref[t] = jnp.where(vf, hf_n, 0.0)              # padded steps -> 0
        encb_ref[tb] = jnp.where(vb, hb_n, 0.0)
        return h_f, c_f, h_b, c_b

    h_f = jnp.broadcast_to(h0f_ref[...], (TB, H))
    c_f = jnp.broadcast_to(c0f_ref[...], (TB, H))
    h_b = jnp.broadcast_to(h0b_ref[...], (TB, H))
    c_b = jnp.broadcast_to(c0b_ref[...], (TB, H))

    if unrolled:
        # small T: hoisted gates stay in registers (no scratch round-trip) and
        # every step is visible to the LLO scheduler.
        for t in range(T):
            tb = T - 1 - t
            h_f, c_f, h_b, c_b = step(t, tb, gxf[t], gxb[tb], h_f, c_f, h_b, c_b)
    else:
        # large T: gates go to VMEM scratch; fori_loop bounds live ranges,
        # unroll=4 lets next-step loads/stores issue under the dot+EUP chain.
        gxf_ref[...] = gxf
        gxb_ref[...] = gxb

        def body(t, carry):
            tb = T - 1 - t
            return step(t, tb, gxf_ref[t], gxb_ref[tb], *carry)

        jax.lax.fori_loop(0, T, body, (h_f, c_f, h_b, c_b), unroll=4)

    # ---- attention: fused scores + length-masked softmax + pooled context ---
    enc_f = encf_ref[...]                                   # (T, TB, H)
    enc_b = encb_ref[...]
    wf = wattf_ref[...].reshape(1, 1, H)
    wb = wattb_ref[...].reshape(1, 1, H)
    scores = (jnp.sum(enc_f * wf, axis=-1, keepdims=True)
              + jnp.sum(enc_b * wb, axis=-1, keepdims=True)
              + batt_ref[...].reshape(1, 1, 1))             # (T, TB, 1)
    t_idx = jax.lax.broadcasted_iota(jnp.int32, (T, TB, 1), 0)
    valid = t_idx < lens[None, :, :]                        # (T, TB, 1)
    scores = jnp.where(valid, scores, -1e30)                # finite mask (NaN-safe)
    m = jnp.max(scores, axis=0, keepdims=True)
    e = jnp.where(valid, jnp.exp(scores - m), 0.0)
    l = jnp.sum(e, axis=0, keepdims=True)
    l = jnp.where(l > 0.0, l, 1.0)                          # guard len == 0 rows
    att = e * pl.reciprocal(l, approx=True)                 # (T, TB, 1)

    ctx_f = jnp.sum(att * enc_f, axis=0)                    # (TB, H)
    ctx_b = jnp.sum(att * enc_b, axis=0)

    # ---- W_out: Linear -> Tanh -> Linear (lane-padded to 128) ---------------
    hid = jnp.tanh(
        jnp.dot(ctx_f, w1f_ref[...], preferred_element_type=jnp.float32)
        + jnp.dot(ctx_b, w1b_ref[...], preferred_element_type=jnp.float32)
        + b1_ref[...])
    out_ref[...] = (jnp.dot(hid, w2_ref[...], preferred_element_type=jnp.float32)
                    + b2_ref[...])


def _rep_spec(shape):
    shape = tuple(int(s) for s in shape)
    return pl.BlockSpec(shape, lambda i, _n=len(shape): (0,) * _n)


def _reorder_gates(w, H):
    """Reorder gate columns (i, f, g, o) [PyTorch layout] -> (i, f, o, g)."""
    return jnp.concatenate(
        [w[..., :2 * H], w[..., 3 * H:], w[..., 2 * H:3 * H]], axis=-1)


def _round_up(x, m):
    return ((x + m - 1) // m) * m


def _pick_batch_tile(B, T, d_in, H):
    """Largest batch tile that (a) needs at most TWO programs (one per v7x
    TensorCore) and (b) keeps the per-program VMEM footprint (double-buffered
    bf16 q tile + f32 gate/encoder scratch) inside budget on v5e/v6e/v7x."""
    per_row = 4 * T * d_in + 40 * T * H           # bytes of VMEM per batch row
    cap = max(_TB_MIN, (_VMEM_ROW_BUDGET // max(per_row, 1)) // _TB_MIN * _TB_MIN)
    want = _round_up(-(-B // 2), _TB_MIN) if B > _TB_MIN else _TB_MIN
    tb = min(want, cap)
    n_prog = -(-B // tb)
    return tb, n_prog


def select_aggregation_forward(q_emb, q_lens, p):
    """q_emb: (B, T, d_in) f32, q_lens: (B,) int -> logits (B, n_agg)."""
    B, T, d_in = q_emb.shape
    H = p["wih_f"].shape[1] // 4
    d_h = 2 * H
    n_agg = p["w2"].shape[1]

    TB, n_prog = _pick_batch_tile(B, T, d_in, H)
    B_pad = TB * n_prog
    unrolled = T <= _UNROLL_T

    # bf16 question tile (halves the dominant HBM->VMEM DMA); padded rows have
    # len = 0 (NaN-safe, bias-only logits) and are sliced away below.
    q = jnp.zeros((B_pad, T, d_in), jnp.bfloat16).at[:B].set(
        q_emb.astype(jnp.bfloat16))
    lens = jnp.zeros((B_pad, 1), jnp.int32).at[:B, 0].set(q_lens.astype(jnp.int32))

    # fuse both directions' input projections into one bf16 MXU operand and
    # reorder gate columns to (i, f, o, g).
    wih_cat = jnp.concatenate(
        [_reorder_gates(p["wih_f"], H), _reorder_gates(p["wih_b"], H)],
        axis=1).astype(jnp.bfloat16)                          # (d_in, 8H)
    bf_r = _reorder_gates(p["b_f"], H)
    bb_r = _reorder_gates(p["b_b"], H)
    whhf_r = _reorder_gates(p["whh_f"], H)
    whhb_r = _reorder_gates(p["whh_b"], H)

    # split attention vector / first head layer into fwd/bwd halves, lane-pad
    # the final layer so the kernel output is 128-lane dense.
    watt_f = p["watt"][:H].reshape(1, H)
    watt_b = p["watt"][H:].reshape(1, H)
    w1_f = p["w1"][:H]
    w1_b = p["w1"][H:]
    w2p = jnp.zeros((d_h, _LANE), jnp.float32).at[:, :n_agg].set(p["w2"])
    b2p = jnp.zeros((1, _LANE), jnp.float32).at[:, :n_agg].set(p["b2"])

    args = (q, lens, wih_cat, bf_r, bb_r, whhf_r, whhb_r,
            p["h0_f"], p["c0_f"], p["h0_b"], p["c0_b"],
            watt_f, watt_b, p["batt"],
            w1_f, w1_b, p["b1"], w2p, b2p)

    in_specs = [
        pl.BlockSpec((TB, T, d_in), lambda i: (i, 0, 0)),
        pl.BlockSpec((TB, 1), lambda i: (i, 0)),
        _rep_spec((d_in, 8 * H)),
        _rep_spec((1, 4 * H)), _rep_spec((1, 4 * H)),
        _rep_spec((H, 4 * H)), _rep_spec((H, 4 * H)),
        _rep_spec((1, H)), _rep_spec((1, H)), _rep_spec((1, H)), _rep_spec((1, H)),
        _rep_spec((1, H)), _rep_spec((1, H)),
        _rep_spec((1, 1)),
        _rep_spec((H, d_h)), _rep_spec((H, d_h)),
        _rep_spec((1, d_h)),
        _rep_spec((d_h, _LANE)), _rep_spec((1, _LANE)),
    ]

    scratch_shapes = []
    if not unrolled:
        scratch_shapes += [pltpu.VMEM((T, TB, 4 * H), jnp.float32),   # gates fwd
                           pltpu.VMEM((T, TB, 4 * H), jnp.float32)]   # gates bwd
    scratch_shapes += [pltpu.VMEM((T, TB, H), jnp.float32),           # enc fwd
                       pltpu.VMEM((T, TB, H), jnp.float32)]           # enc bwd

    out = pl.pallas_call(
        functools.partial(_sel_agg_kernel, T=T, TB=TB, H=H, unrolled=unrolled),
        grid=(B_pad // TB,),
        in_specs=in_specs,
        out_specs=pl.BlockSpec((TB, _LANE), lambda i: (i, 0)),
        out_shape=jax.ShapeDtypeStruct((B_pad, _LANE), jnp.float32),
        scratch_shapes=scratch_shapes,
        compiler_params=pltpu.CompilerParams(
            # at most 2 programs -> one per v7x TensorCore; v5e/v6e run 1-2.
            dimension_semantics=("parallel",),
            vmem_limit_bytes=32 * 1024 * 1024,
        ),
    )(*args)
    return out[:B, :n_agg]


def init_params(key, d_in, d_h, n_agg=3):
    """Deterministic synthetic parameters (shapes follow the module layout)."""
    H = d_h // 2
    ks = jax.random.split(key, 16)
    u = lambda k, shape, lim: jax.random.uniform(k, shape, jnp.float32, -lim, lim)
    s_lstm = 1.0 / float(H) ** 0.5
    s_lin = 1.0 / float(d_h) ** 0.5
    return dict(
        # bidirectional LSTM (d_in -> H per direction), gate order i,f,g,o
        wih_f=u(ks[0], (d_in, 4 * H), s_lstm), whh_f=u(ks[1], (H, 4 * H), s_lstm),
        b_f=u(ks[2], (1, 4 * H), s_lstm),
        h0_f=u(ks[3], (1, H), 0.01), c0_f=u(ks[4], (1, H), 0.01),
        wih_b=u(ks[5], (d_in, 4 * H), s_lstm), whh_b=u(ks[6], (H, 4 * H), s_lstm),
        b_b=u(ks[7], (1, 4 * H), s_lstm),
        h0_b=u(ks[8], (1, H), 0.01), c0_b=u(ks[9], (1, H), 0.01),
        # attention projection
        watt=u(ks[10], (d_h, 1), s_lin), batt=u(ks[11], (1, 1), s_lin),
        # W_out : Linear(d_h, d_h) -> Tanh -> Linear(d_h, n_agg)
        w1=u(ks[12], (d_h, d_h), s_lin), b1=u(ks[13], (1, d_h), s_lin),
        w2=u(ks[14], (d_h, n_agg), s_lin), b2=u(ks[15], (1, n_agg), s_lin),
    )


def reference_forward(q_emb, q_lens, p):
    """Pure-JAX f32 reference with identical math (for sanity checks)."""
    B, T, _ = q_emb.shape
    H = p["wih_f"].shape[1] // 4
    lens = q_lens.reshape(B, 1)

    def cell(x, h, c, wih, whh, b):
        g = x @ wih + h @ whh + b
        i = jax.nn.sigmoid(g[:, :H]); f = jax.nn.sigmoid(g[:, H:2 * H])
        gg = jnp.tanh(g[:, 2 * H:3 * H]); o = jax.nn.sigmoid(g[:, 3 * H:])
        c_new = f * c + i * gg
        return o * jnp.tanh(c_new), c_new

    h = jnp.broadcast_to(p["h0_f"], (B, H)); c = jnp.broadcast_to(p["c0_f"], (B, H))
    enc_f = []
    for t in range(T):
        valid = lens > t
        hn, cn = cell(q_emb[:, t, :], h, c, p["wih_f"], p["whh_f"], p["b_f"])
        h = jnp.where(valid, hn, h); c = jnp.where(valid, cn, c)
        enc_f.append(jnp.where(valid, hn, 0.0))
    h = jnp.broadcast_to(p["h0_b"], (B, H)); c = jnp.broadcast_to(p["c0_b"], (B, H))
    enc_b = [None] * T
    for t in range(T - 1, -1, -1):
        valid = lens > t
        hn, cn = cell(q_emb[:, t, :], h, c, p["wih_b"], p["whh_b"], p["b_b"])
        h = jnp.where(valid, hn, h); c = jnp.where(valid, cn, c)
        enc_b[t] = jnp.where(valid, hn, 0.0)
    enc = jnp.stack([jnp.concatenate([enc_f[t], enc_b[t]], -1) for t in range(T)], axis=1)
    scores = (enc @ p["watt"])[..., 0] + p["batt"][0, 0]
    mask = jnp.arange(T)[None, :] < lens
    scores = jnp.where(mask, scores, -jnp.inf)
    m = jnp.max(scores, axis=1, keepdims=True)
    e = jnp.exp(scores - m)
    att = e / jnp.sum(e, axis=1, keepdims=True)
    ctx = jnp.sum(att[..., None] * enc, axis=1)
    hid = jnp.tanh(ctx @ p["w1"] + p["b1"])
    return hid @ p["w2"] + p["b2"]


def _check(out, ref, tag):
    assert bool(jnp.all(jnp.isfinite(out))), f"{tag}: non-finite output"
    # tolerance accounts for bf16 MXU operands in the hoisted input projection
    if not jnp.allclose(out, ref, rtol=2e-2, atol=2e-2):
        raise AssertionError(f"{tag}: Pallas output mismatch:\n{out}\nvs\n{ref}")


if __name__ == "__main__":
    # case 1: small T -> fully unrolled recurrence, single program, batch 2 -> 8
    B, T, d_in, d_h, n_agg = 2, 8, 32, 32, 3
    kp, kx = jax.random.split(jax.random.PRNGKey(0))
    params = init_params(kp, d_in, d_h, n_agg)
    q_emb = jax.random.normal(kx, (B, T, d_in), jnp.float32)
    q_lens = jnp.array([8, 5], jnp.int32)
    out = jax.block_until_ready(select_aggregation_forward(q_emb, q_lens, params))
    assert out.shape == (B, n_agg)
    _check(out, reference_forward(q_emb, q_lens, params), "case1")

    # case 2: long T -> fori_loop recurrence path + ragged lengths
    B2, T2 = 3, 24
    kp2, kx2 = jax.random.split(jax.random.PRNGKey(1))
    params2 = init_params(kp2, d_in, d_h, n_agg)
    q_emb2 = jax.random.normal(kx2, (B2, T2, d_in), jnp.float32)
    q_lens2 = jnp.array([24, 1, 13], jnp.int32)
    out2 = jax.block_until_ready(select_aggregation_forward(q_emb2, q_lens2, params2))
    assert out2.shape == (B2, n_agg)
    _check(out2, reference_forward(q_emb2, q_lens2, params2), "case2")

    # case 3: bigger batch -> TB > 8 and two programs (one per v7x TensorCore)
    B3, T3 = 20, 20
    kp3, kx3, kl3 = jax.random.split(jax.random.PRNGKey(2), 3)
    params3 = init_params(kp3, d_in, d_h, n_agg)
    q_emb3 = jax.random.normal(kx3, (B3, T3, d_in), jnp.float32)
    q_lens3 = jax.random.randint(kl3, (B3,), 1, T3 + 1).astype(jnp.int32)
    out3 = jax.block_until_ready(select_aggregation_forward(q_emb3, q_lens3, params3))
    assert out3.shape == (B3, n_agg)
    _check(out3, reference_forward(q_emb3, q_lens3, params3), "case3")

    print("KERNEL_OK")
</pallas_src>

<mosaic_0001>
module attributes {stable_mosaic.version = 11 : i64} {
  func.func @_sel_agg_kernel(%arg0: i32, %arg1: memref<8x8x32xbf16, #tpu.memory_space<vmem>>, %arg2: memref<8x1xi32, #tpu.memory_space<vmem>>, %arg3: memref<32x128xbf16, #tpu.memory_space<vmem>>, %arg4: memref<1x64xf32, #tpu.memory_space<vmem>>, %arg5: memref<1x64xf32, #tpu.memory_space<vmem>>, %arg6: memref<16x64xf32, #tpu.memory_space<vmem>>, %arg7: memref<16x64xf32, #tpu.memory_space<vmem>>, %arg8: memref<1x16xf32, #tpu.memory_space<vmem>>, %arg9: memref<1x16xf32, #tpu.memory_space<vmem>>, %arg10: memref<1x16xf32, #tpu.memory_space<vmem>>, %arg11: memref<1x16xf32, #tpu.memory_space<vmem>>, %arg12: memref<1x16xf32, #tpu.memory_space<vmem>>, %arg13: memref<1x16xf32, #tpu.memory_space<vmem>>, %arg14: memref<1x1xf32, #tpu.memory_space<vmem>>, %arg15: memref<16x32xf32, #tpu.memory_space<vmem>>, %arg16: memref<16x32xf32, #tpu.memory_space<vmem>>, %arg17: memref<1x32xf32, #tpu.memory_space<vmem>>, %arg18: memref<32x128xf32, #tpu.memory_space<vmem>>, %arg19: memref<1x128xf32, #tpu.memory_space<vmem>>, %arg20: memref<8x128xf32, #tpu.memory_space<vmem>>, %arg21: memref<8x8x16xf32, #tpu.memory_space<vmem>>, %arg22: memref<8x8x16xf32, #tpu.memory_space<vmem>>) attributes {dimension_semantics = [#tpu.dimension_semantics<parallel>], iteration_bounds = array<i64: 1>, scalar_prefetch = 0 : i64, scratch_operands = 2 : i64, tpu.core_type = #tpu.core_type<tc>, window_params = [{transform_indices = @transform_0, window_bounds = array<i64: 8, 8, 32>}, {transform_indices = @transform_1, window_bounds = array<i64: 8, 1>}, {pipeline_mode = #tpu.pipeline_mode<synchronous>, transform_indices = @transform_2, window_bounds = array<i64: 32, 128>}, {pipeline_mode = #tpu.pipeline_mode<synchronous>, transform_indices = @transform_3, window_bounds = array<i64: 1, 64>}, {pipeline_mode = #tpu.pipeline_mode<synchronous>, transform_indices = @transform_4, window_bounds = array<i64: 1, 64>}, {pipeline_mode = #tpu.pipeline_mode<synchronous>, transform_indices = @transform_5, window_bounds = array<i64: 16, 64>}, {pipeline_mode = #tpu.pipeline_mode<synchronous>, transform_indices = @transform_6, window_bounds = array<i64: 16, 64>}, {pipeline_mode = #tpu.pipeline_mode<synchronous>, transform_indices = @transform_7, window_bounds = array<i64: 1, 16>}, {pipeline_mode = #tpu.pipeline_mode<synchronous>, transform_indices = @transform_8, window_bounds = array<i64: 1, 16>}, {pipeline_mode = #tpu.pipeline_mode<synchronous>, transform_indices = @transform_9, window_bounds = array<i64: 1, 16>}, {pipeline_mode = #tpu.pipeline_mode<synchronous>, transform_indices = @transform_10, window_bounds = array<i64: 1, 16>}, {pipeline_mode = #tpu.pipeline_mode<synchronous>, transform_indices = @transform_11, window_bounds = array<i64: 1, 16>}, {pipeline_mode = #tpu.pipeline_mode<synchronous>, transform_indices = @transform_12, window_bounds = array<i64: 1, 16>}, {pipeline_mode = #tpu.pipeline_mode<synchronous>, transform_indices = @transform_13, window_bounds = array<i64: 1, 1>}, {pipeline_mode = #tpu.pipeline_mode<synchronous>, transform_indices = @transform_14, window_bounds = array<i64: 16, 32>}, {pipeline_mode = #tpu.pipeline_mode<synchronous>, transform_indices = @transform_15, window_bounds = array<i64: 16, 32>}, {pipeline_mode = #tpu.pipeline_mode<synchronous>, transform_indices = @transform_16, window_bounds = array<i64: 1, 32>}, {pipeline_mode = #tpu.pipeline_mode<synchronous>, transform_indices = @transform_17, window_bounds = array<i64: 32, 128>}, {pipeline_mode = #tpu.pipeline_mode<synchronous>, transform_indices = @transform_18, window_bounds = array<i64: 1, 128>}, {transform_indices = @transform_19, window_bounds = array<i64: 8, 128>}]} {
    %c0 = arith.constant 0 : index
    %c0_0 = arith.constant 0 : index
    %0 = vector.load %arg2[%c0, %c0_0] : memref<8x1xi32, #tpu.memory_space<vmem>>, vector<8x1xi32>
    %c0_1 = arith.constant 0 : index
    %c0_2 = arith.constant 0 : index
    %c0_3 = arith.constant 0 : index
    %1 = vector.load %arg1[%c0_1, %c0_2, %c0_3] : memref<8x8x32xbf16, #tpu.memory_space<vmem>>, vector<8x8x32xbf16>
    %2 = vector.shape_cast %1 : vector<8x8x32xbf16> to vector<64x32xbf16>
    %c0_4 = arith.constant 0 : index
    %c0_5 = arith.constant 0 : index
    %3 = vector.load %arg3[%c0_4, %c0_5] : memref<32x128xbf16, #tpu.memory_space<vmem>>, vector<32x128xbf16>
    %cst = arith.constant dense<0.000000e+00> : vector<64x128xf32>
    %4 = tpu.matmul %2, %3, %cst {dimension_numbers = #tpu.dot_dimension_numbers<[1], [0], [0], [1], [0, 0, 1, 1], [], []>} : vector<64x32xbf16>, vector<32x128xbf16>, vector<64x128xf32> -> vector<64x128xf32>
    %5 = vector.shape_cast %4 : vector<64x128xf32> to vector<8x8x128xf32>
    %6 = tpu.transpose %5, [1, 0, 2] : vector<8x8x128xf32> -> vector<8x8x128xf32>
    %7 = vector.extract_strided_slice %6 {offsets = [0, 0, 0], sizes = [8, 8, 64], strides = [1, 1, 1]} : vector<8x8x128xf32> to vector<8x8x64xf32>
    %c0_6 = arith.constant 0 : index
    %c0_7 = arith.constant 0 : index
    %8 = vector.load %arg4[%c0_6, %c0_7] : memref<1x64xf32, #tpu.memory_space<vmem>>, vector<1x64xf32>
    %9 = vector.shape_cast %8 : vector<1x64xf32> to vector<1x1x64xf32>
    %10 = vector.broadcast %9 : vector<1x1x64xf32> to vector<8x8x64xf32>
    %11 = arith.addf %7, %10 : vector<8x8x64xf32>
    %12 = vector.extract_strided_slice %6 {offsets = [0, 0, 64], sizes = [8, 8, 64], strides = [1, 1, 1]} : vector<8x8x128xf32> to vector<8x8x64xf32>
    %c0_8 = arith.constant 0 : index
    %c0_9 = arith.constant 0 : index
    %13 = vector.load %arg5[%c0_8, %c0_9] : memref<1x64xf32, #tpu.memory_space<vmem>>, vector<1x64xf32>
    %14 = vector.shape_cast %13 : vector<1x64xf32> to vector<1x1x64xf32>
    %15 = vector.broadcast %14 : vector<1x1x64xf32> to vector<8x8x64xf32>
    %16 = arith.addf %12, %15 : vector<8x8x64xf32>
    %c0_10 = arith.constant 0 : index
    %c0_11 = arith.constant 0 : index
    %17 = vector.load %arg6[%c0_10, %c0_11] : memref<16x64xf32, #tpu.memory_space<vmem>>, vector<16x64xf32>
    %c0_12 = arith.constant 0 : index
    %c0_13 = arith.constant 0 : index
    %18 = vector.load %arg7[%c0_12, %c0_13] : memref<16x64xf32, #tpu.memory_space<vmem>>, vector<16x64xf32>
    %c0_14 = arith.constant 0 : index
    %c0_15 = arith.constant 0 : index
    %19 = vector.load %arg8[%c0_14, %c0_15] : memref<1x16xf32, #tpu.memory_space<vmem>>, vector<1x16xf32>
    %20 = vector.shape_cast %19 : vector<1x16xf32> to vector<1x16xf32>
    %21 = vector.broadcast %20 : vector<1x16xf32> to vector<8x16xf32>
    %c0_16 = arith.constant 0 : index
    %c0_17 = arith.constant 0 : index
    %22 = vector.load %arg9[%c0_16, %c0_17] : memref<1x16xf32, #tpu.memory_space<vmem>>, vector<1x16xf32>
    %23 = vector.shape_cast %22 : vector<1x16xf32> to vector<1x16xf32>
    %24 = vector.broadcast %23 : vector<1x16xf32> to vector<8x16xf32>
    %c0_18 = arith.constant 0 : index
    %c0_19 = arith.constant 0 : index
    %25 = vector.load %arg10[%c0_18, %c0_19] : memref<1x16xf32, #tpu.memory_space<vmem>>, vector<1x16xf32>
    %26 = vector.shape_cast %25 : vector<1x16xf32> to vector<1x16xf32>
    %27 = vector.broadcast %26 : vector<1x16xf32> to vector<8x16xf32>
    %c0_20 = arith.constant 0 : index
    %c0_21 = arith.constant 0 : index
    %28 = vector.load %arg11[%c0_20, %c0_21] : memref<1x16xf32, #tpu.memory_space<vmem>>, vector<1x16xf32>
    %29 = vector.shape_cast %28 : vector<1x16xf32> to vector<1x16xf32>
    %30 = vector.broadcast %29 : vector<1x16xf32> to vector<8x16xf32>
    %31 = vector.extract_strided_slice %11 {offsets = [0, 0, 0], sizes = [1, 8, 64], strides = [1, 1, 1]} : vector<8x8x64xf32> to vector<1x8x64xf32>
    %32 = vector.shape_cast %31 : vector<1x8x64xf32> to vector<8x64xf32>
    %33 = vector.extract_strided_slice %16 {offsets = [7, 0, 0], sizes = [1, 8, 64], strides = [1, 1, 1]} : vector<8x8x64xf32> to vector<1x8x64xf32>
    %34 = vector.shape_cast %33 : vector<1x8x64xf32> to vector<8x64xf32>
    %cst_22 = arith.constant dense<0.000000e+00> : vector<8x64xf32>
    %35 = tpu.matmul %21, %17, %cst_22 {dimension_numbers = #tpu.dot_dimension_numbers<[1], [0], [0], [1], [0, 0, 1, 1], [], []>} : vector<8x16xf32>, vector<16x64xf32>, vector<8x64xf32> -> vector<8x64xf32>
    %36 = arith.addf %32, %35 : vector<8x64xf32>
    %cst_23 = arith.constant dense<0.000000e+00> : vector<8x64xf32>
    %37 = tpu.matmul %27, %18, %cst_23 {dimension_numbers = #tpu.dot_dimension_numbers<[1], [0], [0], [1], [0, 0, 1, 1], [], []>} : vector<8x16xf32>, vector<16x64xf32>, vector<8x64xf32> -> vector<8x64xf32>
    %38 = arith.addf %34, %37 : vector<8x64xf32>
    %39 = vector.extract_strided_slice %36 {offsets = [0, 0], sizes = [8, 48], strides = [1, 1]} : vector<8x64xf32> to vector<8x48xf32>
    %40 = arith.negf %39 : vector<8x48xf32>
    %41 = math.exp %40 : vector<8x48xf32>
    %cst_24 = arith.constant 1.000000e+00 : f32
    %42 = vector.broadcast %cst_24 : f32 to vector<8x48xf32>
    %43 = arith.addf %42, %41 : vector<8x48xf32>
    %44 = arith.divf %42, %43 : vector<8x48xf32>
    %45 = vector.extract_strided_slice %36 {offsets = [0, 48], sizes = [8, 16], strides = [1, 1]} : vector<8x64xf32> to vector<8x16xf32>
    %46 = math.tanh %45 : vector<8x16xf32>
    %47 = vector.extract_strided_slice %44 {offsets = [0, 16], sizes = [8, 16], strides = [1, 1]} : vector<8x48xf32> to vector<8x16xf32>
    %48 = arith.mulf %47, %24 : vector<8x16xf32>
    %49 = vector.extract_strided_slice %44 {offsets = [0, 0], sizes = [8, 16], strides = [1, 1]} : vector<8x48xf32> to vector<8x16xf32>
    %50 = arith.mulf %49, %46 : vector<8x16xf32>
    %51 = arith.addf %48, %50 : vector<8x16xf32>
    %52 = vector.extract_strided_slice %44 {offsets = [0, 32], sizes = [8, 16], strides = [1, 1]} : vector<8x48xf32> to vector<8x16xf32>
    %53 = math.tanh %51 : vector<8x16xf32>
    %54 = arith.mulf %52, %53 : vector<8x16xf32>
    %55 = vector.extract_strided_slice %38 {offsets = [0, 0], sizes = [8, 48], strides = [1, 1]} : vector<8x64xf32> to vector<8x48xf32>
    %56 = arith.negf %55 : vector<8x48xf32>
    %57 = math.exp %56 : vector<8x48xf32>
    %cst_25 = arith.constant 1.000000e+00 : f32
    %58 = vector.broadcast %cst_25 : f32 to vector<8x48xf32>
    %59 = arith.addf %58, %57 : vector<8x48xf32>
    %60 = arith.divf %58, %59 : vector<8x48xf32>
    %61 = vector.extract_strided_slice %38 {offsets = [0, 48], sizes = [8, 16], strides = [1, 1]} : vector<8x64xf32> to vector<8x16xf32>
    %62 = math.tanh %61 : vector<8x16xf32>
    %63 = vector.extract_strided_slice %60 {offsets = [0, 16], sizes = [8, 16], strides = [1, 1]} : vector<8x48xf32> to vector<8x16xf32>
    %64 = arith.mulf %63, %30 : vector<8x16xf32>
    %65 = vector.extract_strided_slice %60 {offsets = [0, 0], sizes = [8, 16], strides = [1, 1]} : vector<8x48xf32> to vector<8x16xf32>
    %66 = arith.mulf %65, %62 : vector<8x16xf32>
    %67 = arith.addf %64, %66 : vector<8x16xf32>
    %68 = vector.extract_strided_slice %60 {offsets = [0, 32], sizes = [8, 16], strides = [1, 1]} : vector<8x48xf32> to vector<8x16xf32>
    %69 = math.tanh %67 : vector<8x16xf32>
    %70 = arith.mulf %68, %69 : vector<8x16xf32>
    %c0_i32 = arith.constant 0 : i32
    %71 = vector.broadcast %c0_i32 : i32 to vector<8x1xi32>
    %72 = arith.cmpi sgt, %0, %71 : vector<8x1xi32>
    %c7_i32 = arith.constant 7 : i32
    %73 = vector.broadcast %c7_i32 : i32 to vector<8x1xi32>
    %74 = arith.cmpi sgt, %0, %73 : vector<8x1xi32>
    %75 = vector.shape_cast %72 : vector<8x1xi1> to vector<8x1xi1>
    %76 = vector.broadcast %75 : vector<8x1xi1> to vector<8x16xi1>
    %77 = arith.select %76, %54, %21 : vector<8x16xi1>, vector<8x16xf32>
    %78 = vector.shape_cast %72 : vector<8x1xi1> to vector<8x1xi1>
    %79 = vector.broadcast %78 : vector<8x1xi1> to vector<8x16xi1>
    %80 = arith.select %79, %51, %24 : vector<8x16xi1>, vector<8x16xf32>
    %81 = vector.shape_cast %74 : vector<8x1xi1> to vector<8x1xi1>
    %82 = vector.broadcast %81 : vector<8x1xi1> to vector<8x16xi1>
    %83 = arith.select %82, %70, %27 : vector<8x16xi1>, vector<8x16xf32>
    %84 = vector.shape_cast %74 : vector<8x1xi1> to vector<8x1xi1>
    %85 = vector.broadcast %84 : vector<8x1xi1> to vector<8x16xi1>
    %86 = arith.select %85, %67, %30 : vector<8x16xi1>, vector<8x16xf32>
    %cst_26 = arith.constant 0.000000e+00 : f32
    %87 = vector.shape_cast %72 : vector<8x1xi1> to vector<8x1xi1>
    %88 = vector.broadcast %87 : vector<8x1xi1> to vector<8x16xi1>
    %89 = vector.broadcast %cst_26 : f32 to vector<8x16xf32>
    %90 = arith.select %88, %54, %89 : vector<8x16xi1>, vector<8x16xf32>
    %c0_27 = arith.constant 0 : index
    %c0_28 = arith.constant 0 : index
    %c0_29 = arith.constant 0 : index
    %91 = vector.load %arg21[%c0_27, %c0_28, %c0_29] : memref<8x8x16xf32, #tpu.memory_space<vmem>>, vector<1x8x16xf32>
    %92 = vector.shape_cast %91 : vector<1x8x16xf32> to vector<8x16xf32>
    %93 = vector.shape_cast %90 : vector<8x16xf32> to vector<1x8x16xf32>
    tpu.vector_store %arg21[%c0_27, %c0_28, %c0_29], %93 {strides = array<i32>} : memref<8x8x16xf32, #tpu.memory_space<vmem>>, vector<1x8x16xf32>,
    %cst_30 = arith.constant 0.000000e+00 : f32
    %94 = vector.shape_cast %74 : vector<8x1xi1> to vector<8x1xi1>
    %95 = vector.broadcast %94 : vector<8x1xi1> to vector<8x16xi1>
    %96 = vector.broadcast %cst_30 : f32 to vector<8x16xf32>
    %97 = arith.select %95, %70, %96 : vector<8x16xi1>, vector<8x16xf32>
    %c7 = arith.constant 7 : index
    %c0_31 = arith.constant 0 : index
    %c0_32 = arith.constant 0 : index
    %98 = vector.load %arg22[%c7, %c0_31, %c0_32] : memref<8x8x16xf32, #tpu.memory_space<vmem>>, vector<1x8x16xf32>
    %99 = vector.shape_cast %98 : vector<1x8x16xf32> to vector<8x16xf32>
    %100 = vector.shape_cast %97 : vector<8x16xf32> to vector<1x8x16xf32>
    tpu.vector_store %arg22[%c7, %c0_31, %c0_32], %100 {strides = array<i32>} : memref<8x8x16xf32, #tpu.memory_space<vmem>>, vector<1x8x16xf32>,
    %101 = vector.extract_strided_slice %11 {offsets = [1, 0, 0], sizes = [1, 8, 64], strides = [1, 1, 1]} : vector<8x8x64xf32> to vector<1x8x64xf32>
    %102 = vector.shape_cast %101 : vector<1x8x64xf32> to vector<8x64xf32>
    %103 = vector.extract_strided_slice %16 {offsets = [6, 0, 0], sizes = [1, 8, 64], strides = [1, 1, 1]} : vector<8x8x64xf32> to vector<1x8x64xf32>
    %104 = vector.shape_cast %103 : vector<1x8x64xf32> to vector<8x64xf32>
    %cst_33 = arith.constant dense<0.000000e+00> : vector<8x64xf32>
    %105 = tpu.matmul %77, %17, %cst_33 {dimension_numbers = #tpu.dot_dimension_numbers<[1], [0], [0], [1], [0, 0, 1, 1], [], []>} : vector<8x16xf32>, vector<16x64xf32>, vector<8x64xf32> -> vector<8x64xf32>
    %106 = arith.addf %102, %105 : vector<8x64xf32>
    %cst_34 = arith.constant dense<0.000000e+00> : vector<8x64xf32>
    %107 = tpu.matmul %83, %18, %cst_34 {dimension_numbers = #tpu.dot_dimension_numbers<[1], [0], [0], [1], [0, 0, 1, 1], [], []>} : vector<8x16xf32>, vector<16x64xf32>, vector<8x64xf32> -> vector<8x64xf32>
    %108 = arith.addf %104, %107 : vector<8x64xf32>
    %109 = vector.extract_strided_slice %106 {offsets = [0, 0], sizes = [8, 48], strides = [1, 1]} : vector<8x64xf32> to vector<8x48xf32>
    %110 = arith.negf %109 : vector<8x48xf32>
    %111 = math.exp %110 : vector<8x48xf32>
    %cst_35 = arith.constant 1.000000e+00 : f32
    %112 = vector.broadcast %cst_35 : f32 to vector<8x48xf32>
    %113 = arith.addf %112, %111 : vector<8x48xf32>
    %114 = arith.divf %112, %113 : vector<8x48xf32>
    %115 = vector.extract_strided_slice %106 {offsets = [0, 48], sizes = [8, 16], strides = [1, 1]} : vector<8x64xf32> to vector<8x16xf32>
    %116 = math.tanh %115 : vector<8x16xf32>
    %117 = vector.extract_strided_slice %114 {offsets = [0, 16], sizes = [8, 16], strides = [1, 1]} : vector<8x48xf32> to vector<8x16xf32>
    %118 = arith.mulf %117, %80 : vector<8x16xf32>
    %119 = vector.extract_strided_slice %114 {offsets = [0, 0], sizes = [8, 16], strides = [1, 1]} : vector<8x48xf32> to vector<8x16xf32>
    %120 = arith.mulf %119, %116 : vector<8x16xf32>
    %121 = arith.addf %118, %120 : vector<8x16xf32>
    %122 = vector.extract_strided_slice %114 {offsets = [0, 32], sizes = [8, 16], strides = [1, 1]} : vector<8x48xf32> to vector<8x16xf32>
    %123 = math.tanh %121 : vector<8x16xf32>
    %124 = arith.mulf %122, %123 : vector<8x16xf32>
    %125 = vector.extract_strided_slice %108 {offsets = [0, 0], sizes = [8, 48], strides = [1, 1]} : vector<8x64xf32> to vector<8x48xf32>
    %126 = arith.negf %125 : vector<8x48xf32>
    %127 = math.exp %126 : vector<8x48xf32>
    %cst_36 = arith.constant 1.000000e+00 : f32
    %128 = vector.broadcast %cst_36 : f32 to vector<8x48xf32>
    %129 = arith.addf %128, %127 : vector<8x48xf32>
    %130 = arith.divf %128, %129 : vector<8x48xf32>
    %131 = vector.extract_strided_slice %108 {offsets = [0, 48], sizes = [8, 16], strides = [1, 1]} : vector<8x64xf32> to vector<8x16xf32>
    %132 = math.tanh %131 : vector<8x16xf32>
    %133 = vector.extract_strided_slice %130 {offsets = [0, 16], sizes = [8, 16], strides = [1, 1]} : vector<8x48xf32> to vector<8x16xf32>
    %134 = arith.mulf %133, %86 : vector<8x16xf32>
    %135 = vector.extract_strided_slice %130 {offsets = [0, 0], sizes = [8, 16], strides = [1, 1]} : vector<8x48xf32> to vector<8x16xf32>
    %136 = arith.mulf %135, %132 : vector<8x16xf32>
    %137 = arith.addf %134, %136 : vector<8x16xf32>
    %138 = vector.extract_strided_slice %130 {offsets = [0, 32], sizes = [8, 16], strides = [1, 1]} : vector<8x48xf32> to vector<8x16xf32>
    %139 = math.tanh %137 : vector<8x16xf32>
    %140 = arith.mulf %138, %139 : vector<8x16xf32>
    %c1_i32 = arith.constant 1 : i32
    %141 = vector.broadcast %c1_i32 : i32 to vector<8x1xi32>
    %142 = arith.cmpi sgt, %0, %141 : vector<8x1xi32>
    %c6_i32 = arith.constant 6 : i32
    %143 = vector.broadcast %c6_i32 : i32 to vector<8x1xi32>
    %144 = arith.cmpi sgt, %0, %143 : vector<8x1xi32>
    %145 = vector.shape_cast %142 : vector<8x1xi1> to vector<8x1xi1>
    %146 = vector.broadcast %145 : vector<8x1xi1> to vector<8x16xi1>
    %147 = arith.select %146, %124, %77 : vector<8x16xi1>, vector<8x16xf32>
    %148 = vector.shape_cast %142 : vector<8x1xi1> to vector<8x1xi1>
    %149 = vector.broadcast %148 : vector<8x1xi1> to vector<8x16xi1>
    %150 = arith.select %149, %121, %80 : vector<8x16xi1>, vector<8x16xf32>
    %151 = vector.shape_cast %144 : vector<8x1xi1> to vector<8x1xi1>
    %152 = vector.broadcast %151 : vector<8x1xi1> to vector<8x16xi1>
    %153 = arith.select %152, %140, %83 : vector<8x16xi1>, vector<8x16xf32>
    %154 = vector.shape_cast %144 : vector<8x1xi1> to vector<8x1xi1>
    %155 = vector.broadcast %154 : vector<8x1xi1> to vector<8x16xi1>
    %156 = arith.select %155, %137, %86 : vector<8x16xi1>, vector<8x16xf32>
    %cst_37 = arith.constant 0.000000e+00 : f32
    %157 = vector.shape_cast %142 : vector<8x1xi1> to vector<8x1xi1>
    %158 = vector.broadcast %157 : vector<8x1xi1> to vector<8x16xi1>
    %159 = vector.broadcast %cst_37 : f32 to vector<8x16xf32>
    %160 = arith.select %158, %124, %159 : vector<8x16xi1>, vector<8x16xf32>
    %c1 = arith.constant 1 : index
    %c0_38 = arith.constant 0 : index
    %c0_39 = arith.constant 0 : index
    %161 = vector.load %arg21[%c1, %c0_38, %c0_39] : memref<8x8x16xf32, #tpu.memory_space<vmem>>, vector<1x8x16xf32>
    %162 = vector.shape_cast %161 : vector<1x8x16xf32> to vector<8x16xf32>
    %163 = vector.shape_cast %160 : vector<8x16xf32> to vector<1x8x16xf32>
    tpu.vector_store %arg21[%c1, %c0_38, %c0_39], %163 {strides = array<i32>} : memref<8x8x16xf32, #tpu.memory_space<vmem>>, vector<1x8x16xf32>,
    %cst_40 = arith.constant 0.000000e+00 : f32
    %164 = vector.shape_cast %144 : vector<8x1xi1> to vector<8x1xi1>
    %165 = vector.broadcast %164 : vector<8x1xi1> to vector<8x16xi1>
    %166 = vector.broadcast %cst_40 : f32 to vector<8x16xf32>
    %167 = arith.select %165, %140, %166 : vector<8x16xi1>, vector<8x16xf32>
    %c6 = arith.constant 6 : index
    %c0_41 = arith.constant 0 : index
    %c0_42 = arith.constant 0 : index
    %168 = vector.load %arg22[%c6, %c0_41, %c0_42] : memref<8x8x16xf32, #tpu.memory_space<vmem>>, vector<1x8x16xf32>
    %169 = vector.shape_cast %168 : vector<1x8x16xf32> to vector<8x16xf32>
    %170 = vector.shape_cast %167 : vector<8x16xf32> to vector<1x8x16xf32>
    tpu.vector_store %arg22[%c6, %c0_41, %c0_42], %170 {strides = array<i32>} : memref<8x8x16xf32, #tpu.memory_space<vmem>>, vector<1x8x16xf32>,
    %171 = vector.extract_strided_slice %11 {offsets = [2, 0, 0], sizes = [1, 8, 64], strides = [1, 1, 1]} : vector<8x8x64xf32> to vector<1x8x64xf32>
    %172 = vector.shape_cast %171 : vector<1x8x64xf32> to vector<8x64xf32>
    %173 = vector.extract_strided_slice %16 {offsets = [5, 0, 0], sizes = [1, 8, 64], strides = [1, 1, 1]} : vector<8x8x64xf32> to vector<1x8x64xf32>
    %174 = vector.shape_cast %173 : vector<1x8x64xf32> to vector<8x64xf32>
    %cst_43 = arith.constant dense<0.000000e+00> : vector<8x64xf32>
    %175 = tpu.matmul %147, %17, %cst_43 {dimension_numbers = #tpu.dot_dimension_numbers<[1], [0], [0], [1], [0, 0, 1, 1], [], []>} : vector<8x16xf32>, vector<16x64xf32>, vector<8x64xf32> -> vector<8x64xf32>
    %176 = arith.addf %172, %175 : vector<8x64xf32>
    %cst_44 = arith.constant dense<0.000000e+00> : vector<8x64xf32>
    %177 = tpu.matmul %153, %18, %cst_44 {dimension_numbers = #tpu.dot_dimension_numbers<[1], [0], [0], [1], [0, 0, 1, 1], [], []>} : vector<8x16xf32>, vector<16x64xf32>, vector<8x64xf32> -> vector<8x64xf32>
    %178 = arith.addf %174, %177 : vector<8x64xf32>
    %179 = vector.extract_strided_slice %176 {offsets = [0, 0], sizes = [8, 48], strides = [1, 1]} : vector<8x64xf32> to vector<8x48xf32>
    %180 = arith.negf %179 : vector<8x48xf32>
    %181 = math.exp %180 : vector<8x48xf32>
    %cst_45 = arith.constant 1.000000e+00 : f32
    %182 = vector.broadcast %cst_45 : f32 to vector<8x48xf32>
    %183 = arith.addf %182, %181 : vector<8x48xf32>
    %184 = arith.divf %182, %183 : vector<8x48xf32>
    %185 = vector.extract_strided_slice %176 {offsets = [0, 48], sizes = [8, 16], strides = [1, 1]} : vector<8x64xf32> to vector<8x16xf32>
    %186 = math.tanh %185 : vector<8x16xf32>
    %187 = vector.extract_strided_slice %184 {offsets = [0, 16], sizes = [8, 16], strides = [1, 1]} : vector<8x48xf32> to vector<8x16xf32>
    %188 = arith.mulf %187, %150 : vector<8x16xf32>
    %189 = vector.extract_strided_slice %184 {offsets = [0, 0], sizes = [8, 16], strides = [1, 1]} : vector<8x48xf32> to vector<8x16xf32>
    %190 = arith.mulf %189, %186 : vector<8x16xf32>
    %191 = arith.addf %188, %190 : vector<8x16xf32>
    %192 = vector.extract_strided_slice %184 {offsets = [0, 32], sizes = [8, 16], strides = [1, 1]} : vector<8x48xf32> to vector<8x16xf32>
    %193 = math.tanh %191 : vector<8x16xf32>
    %194 = arith.mulf %192, %193 : vector<8x16xf32>
    %195 = vector.extract_strided_slice %178 {offsets = [0, 0], sizes = [8, 48], strides = [1, 1]} : vector<8x64xf32> to vector<8x48xf32>
    %196 = arith.negf %195 : vector<8x48xf32>
    %197 = math.exp %196 : vector<8x48xf32>
    %cst_46 = arith.constant 1.000000e+00 : f32
    %198 = vector.broadcast %cst_46 : f32 to vector<8x48xf32>
    %199 = arith.addf %198, %197 : vector<8x48xf32>
    %200 = arith.divf %198, %199 : vector<8x48xf32>
    %201 = vector.extract_strided_slice %178 {offsets = [0, 48], sizes = [8, 16], strides = [1, 1]} : vector<8x64xf32> to vector<8x16xf32>
    %202 = math.tanh %201 : vector<8x16xf32>
    %203 = vector.extract_strided_slice %200 {offsets = [0, 16], sizes = [8, 16], strides = [1, 1]} : vector<8x48xf32> to vector<8x16xf32>
    %204 = arith.mulf %203, %156 : vector<8x16xf32>
    %205 = vector.extract_strided_slice %200 {offsets = [0, 0], sizes = [8, 16], strides = [1, 1]} : vector<8x48xf32> to vector<8x16xf32>
    %206 = arith.mulf %205, %202 : vector<8x16xf32>
    %207 = arith.addf %204, %206 : vector<8x16xf32>
    %208 = vector.extract_strided_slice %200 {offsets = [0, 32], sizes = [8, 16], strides = [1, 1]} : vector<8x48xf32> to vector<8x16xf32>
    %209 = math.tanh %207 : vector<8x16xf32>
    %210 = arith.mulf %208, %209 : vector<8x16xf32>
    %c2_i32 = arith.constant 2 : i32
    %211 = vector.broadcast %c2_i32 : i32 to vector<8x1xi32>
    %212 = arith.cmpi sgt, %0, %211 : vector<8x1xi32>
    %c5_i32 = arith.constant 5 : i32
    %213 = vector.broadcast %c5_i32 : i32 to vector<8x1xi32>
    %214 = arith.cmpi sgt, %0, %213 : vector<8x1xi32>
    %215 = vector.shape_cast %212 : vector<8x1xi1> to vector<8x1xi1>
    %216 = vector.broadcast %215 : vector<8x1xi1> to vector<8x16xi1>
    %217 = arith.select %216, %194, %147 : vector<8x16xi1>, vector<8x16xf32>
    %218 = vector.shape_cast %212 : vector<8x1xi1> to vector<8x1xi1>
    %219 = vector.broadcast %218 : vector<8x1xi1> to vector<8x16xi1>
    %220 = arith.select %219, %191, %150 : vector<8x16xi1>, vector<8x16xf32>
    %221 = vector.shape_cast %214 : vector<8x1xi1> to vector<8x1xi1>
    %222 = vector.broadcast %221 : vector<8x1xi1> to vector<8x16xi1>
    %223 = arith.select %222, %210, %153 : vector<8x16xi1>, vector<8x16xf32>
    %224 = vector.shape_cast %214 : vector<8x1xi1> to vector<8x1xi1>
    %225 = vector.broadcast %224 : vector<8x1xi1> to vector<8x16xi1>
    %226 = arith.select %225, %207, %156 : vector<8x16xi1>, vector<8x16xf32>
    %cst_47 = arith.constant 0.000000e+00 : f32
    %227 = vector.shape_cast %212 : vector<8x1xi1> to vector<8x1xi1>
    %228 = vector.broadcast %227 : vector<8x1xi1> to vector<8x16xi1>
    %229 = vector.broadcast %cst_47 : f32 to vector<8x16xf32>
    %230 = arith.select %228, %194, %229 : vector<8x16xi1>, vector<8x16xf32>
    %c2 = arith.constant 2 : index
    %c0_48 = arith.constant 0 : index
    %c0_49 = arith.constant 0 : index
    %231 = vector.load %arg21[%c2, %c0_48, %c0_49] : memref<8x8x16xf32, #tpu.memory_space<vmem>>, vector<1x8x16xf32>
    %232 = vector.shape_cast %231 : vector<1x8x16xf32> to vector<8x16xf32>
    %233 = vector.shape_cast %230 : vector<8x16xf32> to vector<1x8x16xf32>
    tpu.vector_store %arg21[%c2, %c0_48, %c0_49], %233 {strides = array<i32>} : memref<8x8x16xf32, #tpu.memory_space<vmem>>, vector<1x8x16xf32>,
    %cst_50 = arith.constant 0.000000e+00 : f32
    %234 = vector.shape_cast %214 : vector<8x1xi1> to vector<8x1xi1>
    %235 = vector.broadcast %234 : vector<8x1xi1> to vector<8x16xi1>
    %236 = vector.broadcast %cst_50 : f32 to vector<8x16xf32>
    %237 = arith.select %235, %210, %236 : vector<8x16xi1>, vector<8x16xf32>
    %c5 = arith.constant 5 : index
    %c0_51 = arith.constant 0 : index
    %c0_52 = arith.constant 0 : index
    %238 = vector.load %arg22[%c5, %c0_51, %c0_52] : memref<8x8x16xf32, #tpu.memory_space<vmem>>, vector<1x8x16xf32>
    %239 = vector.shape_cast %238 : vector<1x8x16xf32> to vector<8x16xf32>
    %240 = vector.shape_cast %237 : vector<8x16xf32> to vector<1x8x16xf32>
    tpu.vector_store %arg22[%c5, %c0_51, %c0_52], %240 {strides = array<i32>} : memref<8x8x16xf32, #tpu.memory_space<vmem>>, vector<1x8x16xf32>,
    %241 = vector.extract_strided_slice %11 {offsets = [3, 0, 0], sizes = [1, 8, 64], strides = [1, 1, 1]} : vector<8x8x64xf32> to vector<1x8x64xf32>
    %242 = vector.shape_cast %241 : vector<1x8x64xf32> to vector<8x64xf32>
    %243 = vector.extract_strided_slice %16 {offsets = [4, 0, 0], sizes = [1, 8, 64], strides = [1, 1, 1]} : vector<8x8x64xf32> to vector<1x8x64xf32>
    %244 = vector.shape_cast %243 : vector<1x8x64xf32> to vector<8x64xf32>
    %cst_53 = arith.constant dense<0.000000e+00> : vector<8x64xf32>
    %245 = tpu.matmul %217, %17, %cst_53 {dimension_numbers = #tpu.dot_dimension_numbers<[1], [0], [0], [1], [0, 0, 1, 1], [], []>} : vector<8x16xf32>, vector<16x64xf32>, vector<8x64xf32> -> vector<8x64xf32>
    %246 = arith.addf %242, %245 : vector<8x64xf32>
    %cst_54 = arith.constant dense<0.000000e+00> : vector<8x64xf32>
    %247 = tpu.matmul %223, %18, %cst_54 {dimension_numbers = #tpu.dot_dimension_numbers<[1], [0], [0], [1], [0, 0, 1, 1], [], []>} : vector<8x16xf32>, vector<16x64xf32>, vector<8x64xf32> -> vector<8x64xf32>
    %248 = arith.addf %244, %247 : vector<8x64xf32>
    %249 = vector.extract_strided_slice %246 {offsets = [0, 0], sizes = [8, 48], strides = [1, 1]} : vector<8x64xf32> to vector<8x48xf32>
    %250 = arith.negf %249 : vector<8x48xf32>
    %251 = math.exp %250 : vector<8x48xf32>
    %cst_55 = arith.constant 1.000000e+00 : f32
    %252 = vector.broadcast %cst_55 : f32 to vector<8x48xf32>
    %253 = arith.addf %252, %251 : vector<8x48xf32>
    %254 = arith.divf %252, %253 : vector<8x48xf32>
    %255 = vector.extract_strided_slice %246 {offsets = [0, 48], sizes = [8, 16], strides = [1, 1]} : vector<8x64xf32> to vector<8x16xf32>
    %256 = math.tanh %255 : vector<8x16xf32>
    %257 = vector.extract_strided_slice %254 {offsets = [0, 16], sizes = [8, 16], strides = [1, 1]} : vector<8x48xf32> to vector<8x16xf32>
    %258 = arith.mulf %257, %220 : vector<8x16xf32>
    %259 = vector.extract_strided_slice %254 {offsets = [0, 0], sizes = [8, 16], strides = [1, 1]} : vector<8x48xf32> to vector<8x16xf32>
    %260 = arith.mulf %259, %256 : vector<8x16xf32>
    %261 = arith.addf %258, %260 : vector<8x16xf32>
    %262 = vector.extract_strided_slice %254 {offsets = [0, 32], sizes = [8, 16], strides = [1, 1]} : vector<8x48xf32> to vector<8x16xf32>
    %263 = math.tanh %261 : vector<8x16xf32>
    %264 = arith.mulf %262, %263 : vector<8x16xf32>
    %265 = vector.extract_strided_slice %248 {offsets = [0, 0], sizes = [8, 48], strides = [1, 1]} : vector<8x64xf32> to vector<8x48xf32>
    %266 = arith.negf %265 : vector<8x48xf32>
    %267 = math.exp %266 : vector<8x48xf32>
    %cst_56 = arith.constant 1.000000e+00 : f32
    %268 = vector.broadcast %cst_56 : f32 to vector<8x48xf32>
    %269 = arith.addf %268, %267 : vector<8x48xf32>
    %270 = arith.divf %268, %269 : vector<8x48xf32>
    %271 = vector.extract_strided_slice %248 {offsets = [0, 48], sizes = [8, 16], strides = [1, 1]} : vector<8x64xf32> to vector<8x16xf32>
    %272 = math.tanh %271 : vector<8x16xf32>
    %273 = vector.extract_strided_slice %270 {offsets = [0, 16], sizes = [8, 16], strides = [1, 1]} : vector<8x48xf32> to vector<8x16xf32>
    %274 = arith.mulf %273, %226 : vector<8x16xf32>
    %275 = vector.extract_strided_slice %270 {offsets = [0, 0], sizes = [8, 16], strides = [1, 1]} : vector<8x48xf32> to vector<8x16xf32>
    %276 = arith.mulf %275, %272 : vector<8x16xf32>
    %277 = arith.addf %274, %276 : vector<8x16xf32>
    %278 = vector.extract_strided_slice %270 {offsets = [0, 32], sizes = [8, 16], strides = [1, 1]} : vector<8x48xf32> to vector<8x16xf32>
    %279 = math.tanh %277 : vector<8x16xf32>
    %280 = arith.mulf %278, %279 : vector<8x16xf32>
    %c3_i32 = arith.constant 3 : i32
    %281 = vector.broadcast %c3_i32 : i32 to vector<8x1xi32>
    %282 = arith.cmpi sgt, %0, %281 : vector<8x1xi32>
    %c4_i32 = arith.constant 4 : i32
    %283 = vector.broadcast %c4_i32 : i32 to vector<8x1xi32>
    %284 = arith.cmpi sgt, %0, %283 : vector<8x1xi32>
    %285 = vector.shape_cast %282 : vector<8x1xi1> to vector<8x1xi1>
    %286 = vector.broadcast %285 : vector<8x1xi1> to vector<8x16xi1>
    %287 = arith.select %286, %264, %217 : vector<8x16xi1>, vector<8x16xf32>
    %288 = vector.shape_cast %282 : vector<8x1xi1> to vector<8x1xi1>
    %289 = vector.broadcast %288 : vector<8x1xi1> to vector<8x16xi1>
    %290 = arith.select %289, %261, %220 : vector<8x16xi1>, vector<8x16xf32>
    %291 = vector.shape_cast %284 : vector<8x1xi1> to vector<8x1xi1>
    %292 = vector.broadcast %291 : vector<8x1xi1> to vector<8x16xi1>
    %293 = arith.select %292, %280, %223 : vector<8x16xi1>, vector<8x16xf32>
    %294 = vector.shape_cast %284 : vector<8x1xi1> to vector<8x1xi1>
    %295 = vector.broadcast %294 : vector<8x1xi1> to vector<8x16xi1>
    %296 = arith.select %295, %277, %226 : vector<8x16xi1>, vector<8x16xf32>
    %cst_57 = arith.constant 0.000000e+00 : f32
    %297 = vector.shape_cast %282 : vector<8x1xi1> to vector<8x1xi1>
    %298 = vector.broadcast %297 : vector<8x1xi1> to vector<8x16xi1>
    %299 = vector.broadcast %cst_57 : f32 to vector<8x16xf32>
    %300 = arith.select %298, %264, %299 : vector<8x16xi1>, vector<8x16xf32>
    %c3 = arith.constant 3 : index
    %c0_58 = arith.constant 0 : index
    %c0_59 = arith.constant 0 : index
    %301 = vector.load %arg21[%c3, %c0_58, %c0_59] : memref<8x8x16xf32, #tpu.memory_space<vmem>>, vector<1x8x16xf32>
    %302 = vector.shape_cast %301 : vector<1x8x16xf32> to vector<8x16xf32>
    %303 = vector.shape_cast %300 : vector<8x16xf32> to vector<1x8x16xf32>
    tpu.vector_store %arg21[%c3, %c0_58, %c0_59], %303 {strides = array<i32>} : memref<8x8x16xf32, #tpu.memory_space<vmem>>, vector<1x8x16xf32>,
    %cst_60 = arith.constant 0.000000e+00 : f32
    %304 = vector.shape_cast %284 : vector<8x1xi1> to vector<8x1xi1>
    %305 = vector.broadcast %304 : vector<8x1xi1> to vector<8x16xi1>
    %306 = vector.broadcast %cst_60 : f32 to vector<8x16xf32>
    %307 = arith.select %305, %280, %306 : vector<8x16xi1>, vector<8x16xf32>
    %c4 = arith.constant 4 : index
    %c0_61 = arith.constant 0 : index
    %c0_62 = arith.constant 0 : index
    %308 = vector.load %arg22[%c4, %c0_61, %c0_62] : memref<8x8x16xf32, #tpu.memory_space<vmem>>, vector<1x8x16xf32>
    %309 = vector.shape_cast %308 : vector<1x8x16xf32> to vector<8x16xf32>
    %310 = vector.shape_cast %307 : vector<8x16xf32> to vector<1x8x16xf32>
    tpu.vector_store %arg22[%c4, %c0_61, %c0_62], %310 {strides = array<i32>} : memref<8x8x16xf32, #tpu.memory_space<vmem>>, vector<1x8x16xf32>,
    %311 = vector.extract_strided_slice %11 {offsets = [4, 0, 0], sizes = [1, 8, 64], strides = [1, 1, 1]} : vector<8x8x64xf32> to vector<1x8x64xf32>
    %312 = vector.shape_cast %311 : vector<1x8x64xf32> to vector<8x64xf32>
    %313 = vector.extract_strided_slice %16 {offsets = [3, 0, 0], sizes = [1, 8, 64], strides = [1, 1, 1]} : vector<8x8x64xf32> to vector<1x8x64xf32>
    %314 = vector.shape_cast %313 : vector<1x8x64xf32> to vector<8x64xf32>
    %cst_63 = arith.constant dense<0.000000e+00> : vector<8x64xf32>
    %315 = tpu.matmul %287, %17, %cst_63 {dimension_numbers = #tpu.dot_dimension_numbers<[1], [0], [0], [1], [0, 0, 1, 1], [], []>} : vector<8x16xf32>, vector<16x64xf32>, vector<8x64xf32> -> vector<8x64xf32>
    %316 = arith.addf %312, %315 : vector<8x64xf32>
    %cst_64 = arith.constant dense<0.000000e+00> : vector<8x64xf32>
    %317 = tpu.matmul %293, %18, %cst_64 {dimension_numbers = #tpu.dot_dimension_numbers<[1], [0], [0], [1], [0, 0, 1, 1], [], []>} : vector<8x16xf32>, vector<16x64xf32>, vector<8x64xf32> -> vector<8x64xf32>
    %318 = arith.addf %314, %317 : vector<8x64xf32>
    %319 = vector.extract_strided_slice %316 {offsets = [0, 0], sizes = [8, 48], strides = [1, 1]} : vector<8x64xf32> to vector<8x48xf32>
    %320 = arith.negf %319 : vector<8x48xf32>
    %321 = math.exp %320 : vector<8x48xf32>
    %cst_65 = arith.constant 1.000000e+00 : f32
    %322 = vector.broadcast %cst_65 : f32 to vector<8x48xf32>
    %323 = arith.addf %322, %321 : vector<8x48xf32>
    %324 = arith.divf %322, %323 : vector<8x48xf32>
    %325 = vector.extract_strided_slice %316 {offsets = [0, 48], sizes = [8, 16], strides = [1, 1]} : vector<8x64xf32> to vector<8x16xf32>
    %326 = math.tanh %325 : vector<8x16xf32>
    %327 = vector.extract_strided_slice %324 {offsets = [0, 16], sizes = [8, 16], strides = [1, 1]} : vector<8x48xf32> to vector<8x16xf32>
    %328 = arith.mulf %327, %290 : vector<8x16xf32>
    %329 = vector.extract_strided_slice %324 {offsets = [0, 0], sizes = [8, 16], strides = [1, 1]} : vector<8x48xf32> to vector<8x16xf32>
    %330 = arith.mulf %329, %326 : vector<8x16xf32>
    %331 = arith.addf %328, %330 : vector<8x16xf32>
    %332 = vector.extract_strided_slice %324 {offsets = [0, 32], sizes = [8, 16], strides = [1, 1]} : vector<8x48xf32> to vector<8x16xf32>
    %333 = math.tanh %331 : vector<8x16xf32>
    %334 = arith.mulf %332, %333 : vector<8x16xf32>
    %335 = vector.extract_strided_slice %318 {offsets = [0, 0], sizes = [8, 48], strides = [1, 1]} : vector<8x64xf32> to vector<8x48xf32>
    %336 = arith.negf %335 : vector<8x48xf32>
    %337 = math.exp %336 : vector<8x48xf32>
    %cst_66 = arith.constant 1.000000e+00 : f32
    %338 = vector.broadcast %cst_66 : f32 to vector<8x48xf32>
    %339 = arith.addf %338, %337 : vector<8x48xf32>
    %340 = arith.divf %338, %339 : vector<8x48xf32>
    %341 = vector.extract_strided_slice %318 {offsets = [0, 48], sizes = [8, 16], strides = [1, 1]} : vector<8x64xf32> to vector<8x16xf32>
    %342 = math.tanh %341 : vector<8x16xf32>
    %343 = vector.extract_strided_slice %340 {offsets = [0, 16], sizes = [8, 16], strides = [1, 1]} : vector<8x48xf32> to vector<8x16xf32>
    %344 = arith.mulf %343, %296 : vector<8x16xf32>
    %345 = vector.extract_strided_slice %340 {offsets = [0, 0], sizes = [8, 16], strides = [1, 1]} : vector<8x48xf32> to vector<8x16xf32>
    %346 = arith.mulf %345, %342 : vector<8x16xf32>
    %347 = arith.addf %344, %346 : vector<8x16xf32>
    %348 = vector.extract_strided_slice %340 {offsets = [0, 32], sizes = [8, 16], strides = [1, 1]} : vector<8x48xf32> to vector<8x16xf32>
    %349 = math.tanh %347 : vector<8x16xf32>
    %350 = arith.mulf %348, %349 : vector<8x16xf32>
    %c4_i32_67 = arith.constant 4 : i32
    %351 = vector.broadcast %c4_i32_67 : i32 to vector<8x1xi32>
    %352 = arith.cmpi sgt, %0, %351 : vector<8x1xi32>
    %c3_i32_68 = arith.constant 3 : i32
    %353 = vector.broadcast %c3_i32_68 : i32 to vector<8x1xi32>
    %354 = arith.cmpi sgt, %0, %353 : vector<8x1xi32>
    %355 = vector.shape_cast %352 : vector<8x1xi1> to vector<8x1xi1>
    %356 = vector.broadcast %355 : vector<8x1xi1> to vector<8x16xi1>
    %357 = arith.select %356, %334, %287 : vector<8x16xi1>, vector<8x16xf32>
    %358 = vector.shape_cast %352 : vector<8x1xi1> to vector<8x1xi1>
    %359 = vector.broadcast %358 : vector<8x1xi1> to vector<8x16xi1>
    %360 = arith.select %359, %331, %290 : vector<8x16xi1>, vector<8x16xf32>
    %361 = vector.shape_cast %354 : vector<8x1xi1> to vector<8x1xi1>
    %362 = vector.broadcast %361 : vector<8x1xi1> to vector<8x16xi1>
    %363 = arith.select %362, %350, %293 : vector<8x16xi1>, vector<8x16xf32>
    %364 = vector.shape_cast %354 : vector<8x1xi1> to vector<8x1xi1>
    %365 = vector.broadcast %364 : vector<8x1xi1> to vector<8x16xi1>
    %366 = arith.select %365, %347, %296 : vector<8x16xi1>, vector<8x16xf32>
    %cst_69 = arith.constant 0.000000e+00 : f32
    %367 = vector.shape_cast %352 : vector<8x1xi1> to vector<8x1xi1>
    %368 = vector.broadcast %367 : vector<8x1xi1> to vector<8x16xi1>
    %369 = vector.broadcast %cst_69 : f32 to vector<8x16xf32>
    %370 = arith.select %368, %334, %369 : vector<8x16xi1>, vector<8x16xf32>
    %c4_70 = arith.constant 4 : index
    %c0_71 = arith.constant 0 : index
    %c0_72 = arith.constant 0 : index
    %371 = vector.load %arg21[%c4_70, %c0_71, %c0_72] : memref<8x8x16xf32, #tpu.memory_space<vmem>>, vector<1x8x16xf32>
    %372 = vector.shape_cast %371 : vector<1x8x16xf32> to vector<8x16xf32>
    %373 = vector.shape_cast %370 : vector<8x16xf32> to vector<1x8x16xf32>
    tpu.vector_store %arg21[%c4_70, %c0_71, %c0_72], %373 {strides = array<i32>} : memref<8x8x16xf32, #tpu.memory_space<vmem>>, vector<1x8x16xf32>,
    %cst_73 = arith.constant 0.000000e+00 : f32
    %374 = vector.shape_cast %354 : vector<8x1xi1> to vector<8x1xi1>
    %375 = vector.broadcast %374 : vector<8x1xi1> to vector<8x16xi1>
    %376 = vector.broadcast %cst_73 : f32 to vector<8x16xf32>
    %377 = arith.select %375, %350, %376 : vector<8x16xi1>, vector<8x16xf32>
    %c3_74 = arith.constant 3 : index
    %c0_75 = arith.constant 0 : index
    %c0_76 = arith.constant 0 : index
    %378 = vector.load %arg22[%c3_74, %c0_75, %c0_76] : memref<8x8x16xf32, #tpu.memory_space<vmem>>, vector<1x8x16xf32>
    %379 = vector.shape_cast %378 : vector<1x8x16xf32> to vector<8x16xf32>
    %380 = vector.shape_cast %377 : vector<8x16xf32> to vector<1x8x16xf32>
    tpu.vector_store %arg22[%c3_74, %c0_75, %c0_76], %380 {strides = array<i32>} : memref<8x8x16xf32, #tpu.memory_space<vmem>>, vector<1x8x16xf32>,
    %381 = vector.extract_strided_slice %11 {offsets = [5, 0, 0], sizes = [1, 8, 64], strides = [1, 1, 1]} : vector<8x8x64xf32> to vector<1x8x64xf32>
    %382 = vector.shape_cast %381 : vector<1x8x64xf32> to vector<8x64xf32>
    %383 = vector.extract_strided_slice %16 {offsets = [2, 0, 0], sizes = [1, 8, 64], strides = [1, 1, 1]} : vector<8x8x64xf32> to vector<1x8x64xf32>
    %384 = vector.shape_cast %383 : vector<1x8x64xf32> to vector<8x64xf32>
    %cst_77 = arith.constant dense<0.000000e+00> : vector<8x64xf32>
    %385 = tpu.matmul %357, %17, %cst_77 {dimension_numbers = #tpu.dot_dimension_numbers<[1], [0], [0], [1], [0, 0, 1, 1], [], []>} : vector<8x16xf32>, vector<16x64xf32>, vector<8x64xf32> -> vector<8x64xf32>
    %386 = arith.addf %382, %385 : vector<8x64xf32>
    %cst_78 = arith.constant dense<0.000000e+00> : vector<8x64xf32>
    %387 = tpu.matmul %363, %18, %cst_78 {dimension_numbers = #tpu.dot_dimension_numbers<[1], [0], [0], [1], [0, 0, 1, 1], [], []>} : vector<8x16xf32>, vector<16x64xf32>, vector<8x64xf32> -> vector<8x64xf32>
    %388 = arith.addf %384, %387 : vector<8x64xf32>
    %389 = vector.extract_strided_slice %386 {offsets = [0, 0], sizes = [8, 48], strides = [1, 1]} : vector<8x64xf32> to vector<8x48xf32>
    %390 = arith.negf %389 : vector<8x48xf32>
    %391 = math.exp %390 : vector<8x48xf32>
    %cst_79 = arith.constant 1.000000e+00 : f32
    %392 = vector.broadcast %cst_79 : f32 to vector<8x48xf32>
    %393 = arith.addf %392, %391 : vector<8x48xf32>
    %394 = arith.divf %392, %393 : vector<8x48xf32>
    %395 = vector.extract_strided_slice %386 {offsets = [0, 48], sizes = [8, 16], strides = [1, 1]} : vector<8x64xf32> to vector<8x16xf32>
    %396 = math.tanh %395 : vector<8x16xf32>
    %397 = vector.extract_strided_slice %394 {offsets = [0, 16], sizes = [8, 16], strides = [1, 1]} : vector<8x48xf32> to vector<8x16xf32>
    %398 = arith.mulf %397, %360 : vector<8x16xf32>
    %399 = vector.extract_strided_slice %394 {offsets = [0, 0], sizes = [8, 16], strides = [1, 1]} : vector<8x48xf32> to vector<8x16xf32>
    %400 = arith.mulf %399, %396 : vector<8x16xf32>
    %401 = arith.addf %398, %400 : vector<8x16xf32>
    %402 = vector.extract_strided_slice %394 {offsets = [0, 32], sizes = [8, 16], strides = [1, 1]} : vector<8x48xf32> to vector<8x16xf32>
    %403 = math.tanh %401 : vector<8x16xf32>
    %404 = arith.mulf %402, %403 : vector<8x16xf32>
    %405 = vector.extract_strided_slice %388 {offsets = [0, 0], sizes = [8, 48], strides = [1, 1]} : vector<8x64xf32> to vector<8x48xf32>
    %406 = arith.negf %405 : vector<8x48xf32>
    %407 = math.exp %406 : vector<8x48xf32>
    %cst_80 = arith.constant 1.000000e+00 : f32
    %408 = vector.broadcast %cst_80 : f32 to vector<8x48xf32>
    %409 = arith.addf %408, %407 : vector<8x48xf32>
    %410 = arith.divf %408, %409 : vector<8x48xf32>
    %411 = vector.extract_strided_slice %388 {offsets = [0, 48], sizes = [8, 16], strides = [1, 1]} : vector<8x64xf32> to vector<8x16xf32>
    %412 = math.tanh %411 : vector<8x16xf32>
    %413 = vector.extract_strided_slice %410 {offsets = [0, 16], sizes = [8, 16], strides = [1, 1]} : vector<8x48xf32> to vector<8x16xf32>
    %414 = arith.mulf %413, %366 : vector<8x16xf32>
    %415 = vector.extract_strided_slice %410 {offsets = [0, 0], sizes = [8, 16], strides = [1, 1]} : vector<8x48xf32> to vector<8x16xf32>
    %416 = arith.mulf %415, %412 : vector<8x16xf32>
    %417 = arith.addf %414, %416 : vector<8x16xf32>
    %418 = vector.extract_strided_slice %410 {offsets = [0, 32], sizes = [8, 16], strides = [1, 1]} : vector<8x48xf32> to vector<8x16xf32>
    %419 = math.tanh %417 : vector<8x16xf32>
    %420 = arith.mulf %418, %419 : vector<8x16xf32>
    %c5_i32_81 = arith.constant 5 : i32
    %421 = vector.broadcast %c5_i32_81 : i32 to vector<8x1xi32>
    %422 = arith.cmpi sgt, %0, %421 : vector<8x1xi32>
    %c2_i32_82 = arith.constant 2 : i32
    %423 = vector.broadcast %c2_i32_82 : i32 to vector<8x1xi32>
    %424 = arith.cmpi sgt, %0, %423 : vector<8x1xi32>
    %425 = vector.shape_cast %422 : vector<8x1xi1> to vector<8x1xi1>
    %426 = vector.broadcast %425 : vector<8x1xi1> to vector<8x16xi1>
    %427 = arith.select %426, %404, %357 : vector<8x16xi1>, vector<8x16xf32>
    %428 = vector.shape_cast %422 : vector<8x1xi1> to vector<8x1xi1>
    %429 = vector.broadcast %428 : vector<8x1xi1> to vector<8x16xi1>
    %430 = arith.select %429, %401, %360 : vector<8x16xi1>, vector<8x16xf32>
    %431 = vector.shape_cast %424 : vector<8x1xi1> to vector<8x1xi1>
    %432 = vector.broadcast %431 : vector<8x1xi1> to vector<8x16xi1>
    %433 = arith.select %432, %420, %363 : vector<8x16xi1>, vector<8x16xf32>
    %434 = vector.shape_cast %424 : vector<8x1xi1> to vector<8x1xi1>
    %435 = vector.broadcast %434 : vector<8x1xi1> to vector<8x16xi1>
    %436 = arith.select %435, %417, %366 : vector<8x16xi1>, vector<8x16xf32>
    %cst_83 = arith.constant 0.000000e+00 : f32
    %437 = vector.shape_cast %422 : vector<8x1xi1> to vector<8x1xi1>
    %438 = vector.broadcast %437 : vector<8x1xi1> to vector<8x16xi1>
    %439 = vector.broadcast %cst_83 : f32 to vector<8x16xf32>
    %440 = arith.select %438, %404, %439 : vector<8x16xi1>, vector<8x16xf32>
    %c5_84 = arith.constant 5 : index
    %c0_85 = arith.constant 0 : index
    %c0_86 = arith.constant 0 : index
    %441 = vector.load %arg21[%c5_84, %c0_85, %c0_86] : memref<8x8x16xf32, #tpu.memory_space<vmem>>, vector<1x8x16xf32>
    %442 = vector.shape_cast %441 : vector<1x8x16xf32> to vector<8x16xf32>
    %443 = vector.shape_cast %440 : vector<8x16xf32> to vector<1x8x16xf32>
    tpu.vector_store %arg21[%c5_84, %c0_85, %c0_86], %443 {strides = array<i32>} : memref<8x8x16xf32, #tpu.memory_space<vmem>>, vector<1x8x16xf32>,
    %cst_87 = arith.constant 0.000000e+00 : f32
    %444 = vector.shape_cast %424 : vector<8x1xi1> to vector<8x1xi1>
    %445 = vector.broadcast %444 : vector<8x1xi1> to vector<8x16xi1>
    %446 = vector.broadcast %cst_87 : f32 to vector<8x16xf32>
    %447 = arith.select %445, %420, %446 : vector<8x16xi1>, vector<8x16xf32>
    %c2_88 = arith.constant 2 : index
    %c0_89 = arith.constant 0 : index
    %c0_90 = arith.constant 0 : index
    %448 = vector.load %arg22[%c2_88, %c0_89, %c0_90] : memref<8x8x16xf32, #tpu.memory_space<vmem>>, vector<1x8x16xf32>
    %449 = vector.shape_cast %448 : vector<1x8x16xf32> to vector<8x16xf32>
    %450 = vector.shape_cast %447 : vector<8x16xf32> to vector<1x8x16xf32>
    tpu.vector_store %arg22[%c2_88, %c0_89, %c0_90], %450 {strides = array<i32>} : memref<8x8x16xf32, #tpu.memory_space<vmem>>, vector<1x8x16xf32>,
    %451 = vector.extract_strided_slice %11 {offsets = [6, 0, 0], sizes = [1, 8, 64], strides = [1, 1, 1]} : vector<8x8x64xf32> to vector<1x8x64xf32>
    %452 = vector.shape_cast %451 : vector<1x8x64xf32> to vector<8x64xf32>
    %453 = vector.extract_strided_slice %16 {offsets = [1, 0, 0], sizes = [1, 8, 64], strides = [1, 1, 1]} : vector<8x8x64xf32> to vector<1x8x64xf32>
    %454 = vector.shape_cast %453 : vector<1x8x64xf32> to vector<8x64xf32>
    %cst_91 = arith.constant dense<0.000000e+00> : vector<8x64xf32>
    %455 = tpu.matmul %427, %17, %cst_91 {dimension_numbers = #tpu.dot_dimension_numbers<[1], [0], [0], [1], [0, 0, 1, 1], [], []>} : vector<8x16xf32>, vector<16x64xf32>, vector<8x64xf32> -> vector<8x64xf32>
    %456 = arith.addf %452, %455 : vector<8x64xf32>
    %cst_92 = arith.constant dense<0.000000e+00> : vector<8x64xf32>
    %457 = tpu.matmul %433, %18, %cst_92 {dimension_numbers = #tpu.dot_dimension_numbers<[1], [0], [0], [1], [0, 0, 1, 1], [], []>} : vector<8x16xf32>, vector<16x64xf32>, vector<8x64xf32> -> vector<8x64xf32>
    %458 = arith.addf %454, %457 : vector<8x64xf32>
    %459 = vector.extract_strided_slice %456 {offsets = [0, 0], sizes = [8, 48], strides = [1, 1]} : vector<8x64xf32> to vector<8x48xf32>
    %460 = arith.negf %459 : vector<8x48xf32>
    %461 = math.exp %460 : vector<8x48xf32>
    %cst_93 = arith.constant 1.000000e+00 : f32
    %462 = vector.broadcast %cst_93 : f32 to vector<8x48xf32>
    %463 = arith.addf %462, %461 : vector<8x48xf32>
    %464 = arith.divf %462, %463 : vector<8x48xf32>
    %465 = vector.extract_strided_slice %456 {offsets = [0, 48], sizes = [8, 16], strides = [1, 1]} : vector<8x64xf32> to vector<8x16xf32>
    %466 = math.tanh %465 : vector<8x16xf32>
    %467 = vector.extract_strided_slice %464 {offsets = [0, 16], sizes = [8, 16], strides = [1, 1]} : vector<8x48xf32> to vector<8x16xf32>
    %468 = arith.mulf %467, %430 : vector<8x16xf32>
    %469 = vector.extract_strided_slice %464 {offsets = [0, 0], sizes = [8, 16], strides = [1, 1]} : vector<8x48xf32> to vector<8x16xf32>
    %470 = arith.mulf %469, %466 : vector<8x16xf32>
    %471 = arith.addf %468, %470 : vector<8x16xf32>
    %472 = vector.extract_strided_slice %464 {offsets = [0, 32], sizes = [8, 16], strides = [1, 1]} : vector<8x48xf32> to vector<8x16xf32>
    %473 = math.tanh %471 : vector<8x16xf32>
    %474 = arith.mulf %472, %473 : vector<8x16xf32>
    %475 = vector.extract_strided_slice %458 {offsets = [0, 0], sizes = [8, 48], strides = [1, 1]} : vector<8x64xf32> to vector<8x48xf32>
    %476 = arith.negf %475 : vector<8x48xf32>
    %477 = math.exp %476 : vector<8x48xf32>
    %cst_94 = arith.constant 1.000000e+00 : f32
    %478 = vector.broadcast %cst_94 : f32 to vector<8x48xf32>
    %479 = arith.addf %478, %477 : vector<8x48xf32>
    %480 = arith.divf %478, %479 : vector<8x48xf32>
    %481 = vector.extract_strided_slice %458 {offsets = [0, 48], sizes = [8, 16], strides = [1, 1]} : vector<8x64xf32> to vector<8x16xf32>
    %482 = math.tanh %481 : vector<8x16xf32>
    %483 = vector.extract_strided_slice %480 {offsets = [0, 16], sizes = [8, 16], strides = [1, 1]} : vector<8x48xf32> to vector<8x16xf32>
    %484 = arith.mulf %483, %436 : vector<8x16xf32>
    %485 = vector.extract_strided_slice %480 {offsets = [0, 0], sizes = [8, 16], strides = [1, 1]} : vector<8x48xf32> to vector<8x16xf32>
    %486 = arith.mulf %485, %482 : vector<8x16xf32>
    %487 = arith.addf %484, %486 : vector<8x16xf32>
    %488 = vector.extract_strided_slice %480 {offsets = [0, 32], sizes = [8, 16], strides = [1, 1]} : vector<8x48xf32> to vector<8x16xf32>
    %489 = math.tanh %487 : vector<8x16xf32>
    %490 = arith.mulf %488, %489 : vector<8x16xf32>
    %c6_i32_95 = arith.constant 6 : i32
    %491 = vector.broadcast %c6_i32_95 : i32 to vector<8x1xi32>
    %492 = arith.cmpi sgt, %0, %491 : vector<8x1xi32>
    %c1_i32_96 = arith.constant 1 : i32
    %493 = vector.broadcast %c1_i32_96 : i32 to vector<8x1xi32>
    %494 = arith.cmpi sgt, %0, %493 : vector<8x1xi32>
    %495 = vector.shape_cast %492 : vector<8x1xi1> to vector<8x1xi1>
    %496 = vector.broadcast %495 : vector<8x1xi1> to vector<8x16xi1>
    %497 = arith.select %496, %474, %427 : vector<8x16xi1>, vector<8x16xf32>
    %498 = vector.shape_cast %492 : vector<8x1xi1> to vector<8x1xi1>
    %499 = vector.broadcast %498 : vector<8x1xi1> to vector<8x16xi1>
    %500 = arith.select %499, %471, %430 : vector<8x16xi1>, vector<8x16xf32>
    %501 = vector.shape_cast %494 : vector<8x1xi1> to vector<8x1xi1>
    %502 = vector.broadcast %501 : vector<8x1xi1> to vector<8x16xi1>
    %503 = arith.select %502, %490, %433 : vector<8x16xi1>, vector<8x16xf32>
    %504 = vector.shape_cast %494 : vector<8x1xi1> to vector<8x1xi1>
    %505 = vector.broadcast %504 : vector<8x1xi1> to vector<8x16xi1>
    %506 = arith.select %505, %487, %436 : vector<8x16xi1>, vector<8x16xf32>
    %cst_97 = arith.constant 0.000000e+00 : f32
    %507 = vector.shape_cast %492 : vector<8x1xi1> to vector<8x1xi1>
    %508 = vector.broadcast %507 : vector<8x1xi1> to vector<8x16xi1>
    %509 = vector.broadcast %cst_97 : f32 to vector<8x16xf32>
    %510 = arith.select %508, %474, %509 : vector<8x16xi1>, vector<8x16xf32>
    %c6_98 = arith.constant 6 : index
    %c0_99 = arith.constant 0 : index
    %c0_100 = arith.constant 0 : index
    %511 = vector.load %arg21[%c6_98, %c0_99, %c0_100] : memref<8x8x16xf32, #tpu.memory_space<vmem>>, vector<1x8x16xf32>
    %512 = vector.shape_cast %511 : vector<1x8x16xf32> to vector<8x16xf32>
    %513 = vector.shape_cast %510 : vector<8x16xf32> to vector<1x8x16xf32>
    tpu.vector_store %arg21[%c6_98, %c0_99, %c0_100], %513 {strides = array<i32>} : memref<8x8x16xf32, #tpu.memory_space<vmem>>, vector<1x8x16xf32>,
    %cst_101 = arith.constant 0.000000e+00 : f32
    %514 = vector.shape_cast %494 : vector<8x1xi1> to vector<8x1xi1>
    %515 = vector.broadcast %514 : vector<8x1xi1> to vector<8x16xi1>
    %516 = vector.broadcast %cst_101 : f32 to vector<8x16xf32>
    %517 = arith.select %515, %490, %516 : vector<8x16xi1>, vector<8x16xf32>
    %c1_102 = arith.constant 1 : index
    %c0_103 = arith.constant 0 : index
    %c0_104 = arith.constant 0 : index
    %518 = vector.load %arg22[%c1_102, %c0_103, %c0_104] : memref<8x8x16xf32, #tpu.memory_space<vmem>>, vector<1x8x16xf32>
    %519 = vector.shape_cast %518 : vector<1x8x16xf32> to vector<8x16xf32>
    %520 = vector.shape_cast %517 : vector<8x16xf32> to vector<1x8x16xf32>
    tpu.vector_store %arg22[%c1_102, %c0_103, %c0_104], %520 {strides = array<i32>} : memref<8x8x16xf32, #tpu.memory_space<vmem>>, vector<1x8x16xf32>,
    %521 = vector.extract_strided_slice %11 {offsets = [7, 0, 0], sizes = [1, 8, 64], strides = [1, 1, 1]} : vector<8x8x64xf32> to vector<1x8x64xf32>
    %522 = vector.shape_cast %521 : vector<1x8x64xf32> to vector<8x64xf32>
    %523 = vector.extract_strided_slice %16 {offsets = [0, 0, 0], sizes = [1, 8, 64], strides = [1, 1, 1]} : vector<8x8x64xf32> to vector<1x8x64xf32>
    %524 = vector.shape_cast %523 : vector<1x8x64xf32> to vector<8x64xf32>
    %cst_105 = arith.constant dense<0.000000e+00> : vector<8x64xf32>
    %525 = tpu.matmul %497, %17, %cst_105 {dimension_numbers = #tpu.dot_dimension_numbers<[1], [0], [0], [1], [0, 0, 1, 1], [], []>} : vector<8x16xf32>, vector<16x64xf32>, vector<8x64xf32> -> vector<8x64xf32>
    %526 = arith.addf %522, %525 : vector<8x64xf32>
    %cst_106 = arith.constant dense<0.000000e+00> : vector<8x64xf32>
    %527 = tpu.matmul %503, %18, %cst_106 {dimension_numbers = #tpu.dot_dimension_numbers<[1], [0], [0], [1], [0, 0, 1, 1], [], []>} : vector<8x16xf32>, vector<16x64xf32>, vector<8x64xf32> -> vector<8x64xf32>
    %528 = arith.addf %524, %527 : vector<8x64xf32>
    %529 = vector.extract_strided_slice %526 {offsets = [0, 0], sizes = [8, 48], strides = [1, 1]} : vector<8x64xf32> to vector<8x48xf32>
    %530 = arith.negf %529 : vector<8x48xf32>
    %531 = math.exp %530 : vector<8x48xf32>
    %cst_107 = arith.constant 1.000000e+00 : f32
    %532 = vector.broadcast %cst_107 : f32 to vector<8x48xf32>
    %533 = arith.addf %532, %531 : vector<8x48xf32>
    %534 = arith.divf %532, %533 : vector<8x48xf32>
    %535 = vector.extract_strided_slice %526 {offsets = [0, 48], sizes = [8, 16], strides = [1, 1]} : vector<8x64xf32> to vector<8x16xf32>
    %536 = math.tanh %535 : vector<8x16xf32>
    %537 = vector.extract_strided_slice %534 {offsets = [0, 16], sizes = [8, 16], strides = [1, 1]} : vector<8x48xf32> to vector<8x16xf32>
    %538 = arith.mulf %537, %500 : vector<8x16xf32>
    %539 = vector.extract_strided_slice %534 {offsets = [0, 0], sizes = [8, 16], strides = [1, 1]} : vector<8x48xf32> to vector<8x16xf32>
    %540 = arith.mulf %539, %536 : vector<8x16xf32>
    %541 = arith.addf %538, %540 : vector<8x16xf32>
    %542 = vector.extract_strided_slice %534 {offsets = [0, 32], sizes = [8, 16], strides = [1, 1]} : vector<8x48xf32> to vector<8x16xf32>
    %543 = math.tanh %541 : vector<8x16xf32>
    %544 = arith.mulf %542, %543 : vector<8x16xf32>
    %545 = vector.extract_strided_slice %528 {offsets = [0, 0], sizes = [8, 48], strides = [1, 1]} : vector<8x64xf32> to vector<8x48xf32>
    %546 = arith.negf %545 : vector<8x48xf32>
    %547 = math.exp %546 : vector<8x48xf32>
    %cst_108 = arith.constant 1.000000e+00 : f32
    %548 = vector.broadcast %cst_108 : f32 to vector<8x48xf32>
    %549 = arith.addf %548, %547 : vector<8x48xf32>
    %550 = arith.divf %548, %549 : vector<8x48xf32>
    %551 = vector.extract_strided_slice %528 {offsets = [0, 48], sizes = [8, 16], strides = [1, 1]} : vector<8x64xf32> to vector<8x16xf32>
    %552 = math.tanh %551 : vector<8x16xf32>
    %553 = vector.extract_strided_slice %550 {offsets = [0, 16], sizes = [8, 16], strides = [1, 1]} : vector<8x48xf32> to vector<8x16xf32>
    %554 = arith.mulf %553, %506 : vector<8x16xf32>
    %555 = vector.extract_strided_slice %550 {offsets = [0, 0], sizes = [8, 16], strides = [1, 1]} : vector<8x48xf32> to vector<8x16xf32>
    %556 = arith.mulf %555, %552 : vector<8x16xf32>
    %557 = arith.addf %554, %556 : vector<8x16xf32>
    %558 = vector.extract_strided_slice %550 {offsets = [0, 32], sizes = [8, 16], strides = [1, 1]} : vector<8x48xf32> to vector<8x16xf32>
    %559 = math.tanh %557 : vector<8x16xf32>
    %560 = arith.mulf %558, %559 : vector<8x16xf32>
    %c7_i32_109 = arith.constant 7 : i32
    %561 = vector.broadcast %c7_i32_109 : i32 to vector<8x1xi32>
    %562 = arith.cmpi sgt, %0, %561 : vector<8x1xi32>
    %c0_i32_110 = arith.constant 0 : i32
    %563 = vector.broadcast %c0_i32_110 : i32 to vector<8x1xi32>
    %564 = arith.cmpi sgt, %0, %563 : vector<8x1xi32>
    %cst_111 = arith.constant 0.000000e+00 : f32
    %565 = vector.shape_cast %562 : vector<8x1xi1> to vector<8x1xi1>
    %566 = vector.broadcast %565 : vector<8x1xi1> to vector<8x16xi1>
    %567 = vector.broadcast %cst_111 : f32 to vector<8x16xf32>
    %568 = arith.select %566, %544, %567 : vector<8x16xi1>, vector<8x16xf32>
    %c7_112 = arith.constant 7 : index
    %c0_113 = arith.constant 0 : index
    %c0_114 = arith.constant 0 : index
    %569 = vector.load %arg21[%c7_112, %c0_113, %c0_114] : memref<8x8x16xf32, #tpu.memory_space<vmem>>, vector<1x8x16xf32>
    %570 = vector.shape_cast %569 : vector<1x8x16xf32> to vector<8x16xf32>
    %571 = vector.shape_cast %568 : vector<8x16xf32> to vector<1x8x16xf32>
    tpu.vector_store %arg21[%c7_112, %c0_113, %c0_114], %571 {strides = array<i32>} : memref<8x8x16xf32, #tpu.memory_space<vmem>>, vector<1x8x16xf32>,
    %cst_115 = arith.constant 0.000000e+00 : f32
    %572 = vector.shape_cast %564 : vector<8x1xi1> to vector<8x1xi1>
    %573 = vector.broadcast %572 : vector<8x1xi1> to vector<8x16xi1>
    %574 = vector.broadcast %cst_115 : f32 to vector<8x16xf32>
    %575 = arith.select %573, %560, %574 : vector<8x16xi1>, vector<8x16xf32>
    %c0_116 = arith.constant 0 : index
    %c0_117 = arith.constant 0 : index
    %c0_118 = arith.constant 0 : index
    %576 = vector.load %arg22[%c0_116, %c0_117, %c0_118] : memref<8x8x16xf32, #tpu.memory_space<vmem>>, vector<1x8x16xf32>
    %577 = vector.shape_cast %576 : vector<1x8x16xf32> to vector<8x16xf32>
    %578 = vector.shape_cast %575 : vector<8x16xf32> to vector<1x8x16xf32>
    tpu.vector_store %arg22[%c0_116, %c0_117, %c0_118], %578 {strides = array<i32>} : memref<8x8x16xf32, #tpu.memory_space<vmem>>, vector<1x8x16xf32>,
    %c0_119 = arith.constant 0 : index
    %c0_120 = arith.constant 0 : index
    %c0_121 = arith.constant 0 : index
    %579 = vector.load %arg21[%c0_119, %c0_120, %c0_121] : memref<8x8x16xf32, #tpu.memory_space<vmem>>, vector<8x8x16xf32>
    %c0_122 = arith.constant 0 : index
    %c0_123 = arith.constant 0 : index
    %c0_124 = arith.constant 0 : index
    %580 = vector.load %arg22[%c0_122, %c0_123, %c0_124] : memref<8x8x16xf32, #tpu.memory_space<vmem>>, vector<8x8x16xf32>
    %c0_125 = arith.constant 0 : index
    %c0_126 = arith.constant 0 : index
    %581 = vector.load %arg12[%c0_125, %c0_126] : memref<1x16xf32, #tpu.memory_space<vmem>>, vector<1x16xf32>
    %582 = vector.shape_cast %581 : vector<1x16xf32> to vector<1x1x16xf32>
    %c0_127 = arith.constant 0 : index
    %c0_128 = arith.constant 0 : index
    %583 = vector.load %arg13[%c0_127, %c0_128] : memref<1x16xf32, #tpu.memory_space<vmem>>, vector<1x16xf32>
    %584 = vector.shape_cast %583 : vector<1x16xf32> to vector<1x1x16xf32>
    %585 = vector.broadcast %582 : vector<1x1x16xf32> to vector<8x8x16xf32>
    %586 = arith.mulf %579, %585 : vector<8x8x16xf32>
    %cst_129 = arith.constant dense<0.000000e+00> : vector<8x8xf32>
    %587 = vector.multi_reduction <add>, %586, %cst_129 [2] : vector<8x8x16xf32> to vector<8x8xf32>
    %588 = vector.shape_cast %587 : vector<8x8xf32> to vector<8x8x1xf32>
    %589 = vector.broadcast %584 : vector<1x1x16xf32> to vector<8x8x16xf32>
    %590 = arith.mulf %580, %589 : vector<8x8x16xf32>
    %cst_130 = arith.constant dense<0.000000e+00> : vector<8x8xf32>
    %591 = vector.multi_reduction <add>, %590, %cst_130 [2] : vector<8x8x16xf32> to vector<8x8xf32>
    %592 = vector.shape_cast %591 : vector<8x8xf32> to vector<8x8x1xf32>
    %593 = arith.addf %588, %592 : vector<8x8x1xf32>
    %c0_131 = arith.constant 0 : index
    %c0_132 = arith.constant 0 : index
    %594 = vector.load %arg14[%c0_131, %c0_132] : memref<1x1xf32, #tpu.memory_space<vmem>>, vector<1x1xf32>
    %595 = vector.shape_cast %594 : vector<1x1xf32> to vector<1x1x1xf32>
    %596 = vector.broadcast %595 : vector<1x1x1xf32> to vector<8x8x1xf32>
    %597 = arith.addf %593, %596 : vector<8x8x1xf32>
    %598 = tpu.iota {dimensions = array<i32: 0>} : vector<8x8x1xi32>
    %599 = vector.shape_cast %0 : vector<8x1xi32> to vector<1x8x1xi32>
    %600 = vector.broadcast %599 : vector<1x8x1xi32> to vector<8x8x1xi32>
    %601 = arith.cmpi slt, %598, %600 : vector<8x8x1xi32>
    %cst_133 = arith.constant -1.000000e+30 : f32
    %602 = vector.broadcast %cst_133 : f32 to vector<8x8x1xf32>
    %603 = arith.select %601, %597, %602 : vector<8x8x1xi1>, vector<8x8x1xf32>
    %cst_134 = arith.constant dense<0xFF800000> : vector<8x1xf32>
    %604 = vector.multi_reduction <maximumf>, %603, %cst_134 [0] : vector<8x8x1xf32> to vector<8x1xf32>
    %605 = vector.shape_cast %604 : vector<8x1xf32> to vector<1x8x1xf32>
    %606 = vector.broadcast %605 : vector<1x8x1xf32> to vector<8x8x1xf32>
    %607 = arith.subf %603, %606 : vector<8x8x1xf32>
    %608 = math.exp %607 : vector<8x8x1xf32>
    %cst_135 = arith.constant 0.000000e+00 : f32
    %609 = vector.broadcast %cst_135 : f32 to vector<8x8x1xf32>
    %610 = arith.select %601, %608, %609 : vector<8x8x1xi1>, vector<8x8x1xf32>
    %cst_136 = arith.constant dense<0.000000e+00> : vector<8x1xf32>
    %611 = vector.multi_reduction <add>, %610, %cst_136 [0] : vector<8x8x1xf32> to vector<8x1xf32>
    %612 = vector.shape_cast %611 : vector<8x1xf32> to vector<1x8x1xf32>
    %cst_137 = arith.constant 0.000000e+00 : f32
    %613 = vector.broadcast %cst_137 : f32 to vector<1x8x1xf32>
    %614 = arith.cmpf ogt, %612, %613 : vector<1x8x1xf32>
    %cst_138 = arith.constant 1.000000e+00 : f32
    %615 = vector.broadcast %cst_138 : f32 to vector<1x8x1xf32>
    %616 = arith.select %614, %612, %615 : vector<1x8x1xi1>, vector<1x8x1xf32>
    %617 = tpu.reciprocal %616 {approx = true} : vector<1x8x1xf32> -> vector<1x8x1xf32>
    %618 = vector.broadcast %617 : vector<1x8x1xf32> to vector<8x8x1xf32>
    %619 = arith.mulf %610, %618 : vector<8x8x1xf32>
    %620 = vector.broadcast %619 : vector<8x8x1xf32> to vector<8x8x16xf32>
    %621 = arith.mulf %620, %579 : vector<8x8x16xf32>
    %cst_139 = arith.constant dense<0.000000e+00> : vector<8x16xf32>
    %622 = vector.multi_reduction <add>, %621, %cst_139 [0] : vector<8x8x16xf32> to vector<8x16xf32>
    %623 = vector.broadcast %619 : vector<8x8x1xf32> to vector<8x8x16xf32>
    %624 = arith.mulf %623, %580 : vector<8x8x16xf32>
    %cst_140 = arith.constant dense<0.000000e+00> : vector<8x16xf32>
    %625 = vector.multi_reduction <add>, %624, %cst_140 [0] : vector<8x8x16xf32> to vector<8x16xf32>
    %c0_141 = arith.constant 0 : index
    %c0_142 = arith.constant 0 : index
    %626 = vector.load %arg15[%c0_141, %c0_142] : memref<16x32xf32, #tpu.memory_space<vmem>>, vector<16x32xf32>
    %cst_143 = arith.constant dense<0.000000e+00> : vector<8x32xf32>
    %627 = tpu.matmul %622, %626, %cst_143 {dimension_numbers = #tpu.dot_dimension_numbers<[1], [0], [0], [1], [0, 0, 1, 1], [], []>} : vector<8x16xf32>, vector<16x32xf32>, vector<8x32xf32> -> vector<8x32xf32>
    %c0_144 = arith.constant 0 : index
    %c0_145 = arith.constant 0 : index
    %628 = vector.load %arg16[%c0_144, %c0_145] : memref<16x32xf32, #tpu.memory_space<vmem>>, vector<16x32xf32>
    %cst_146 = arith.constant dense<0.000000e+00> : vector<8x32xf32>
    %629 = tpu.matmul %625, %628, %cst_146 {dimension_numbers = #tpu.dot_dimension_numbers<[1], [0], [0], [1], [0, 0, 1, 1], [], []>} : vector<8x16xf32>, vector<16x32xf32>, vector<8x32xf32> -> vector<8x32xf32>
    %630 = arith.addf %627, %629 : vector<8x32xf32>
    %c0_147 = arith.constant 0 : index
    %c0_148 = arith.constant 0 : index
    %631 = vector.load %arg17[%c0_147, %c0_148] : memref<1x32xf32, #tpu.memory_space<vmem>>, vector<1x32xf32>
    %632 = vector.broadcast %631 : vector<1x32xf32> to vector<8x32xf32>
    %633 = arith.addf %630, %632 : vector<8x32xf32>
    %634 = math.tanh %633 : vector<8x32xf32>
    %c0_149 = arith.constant 0 : index
    %c0_150 = arith.constant 0 : index
    %635 = vector.load %arg18[%c0_149, %c0_150] : memref<32x128xf32, #tpu.memory_space<vmem>>, vector<32x128xf32>
    %cst_151 = arith.constant dense<0.000000e+00> : vector<8x128xf32>
    %636 = tpu.matmul %634, %635, %cst_151 {dimension_numbers = #tpu.dot_dimension_numbers<[1], [0], [0], [1], [0, 0, 1, 1], [], []>} : vector<8x32xf32>, vector<32x128xf32>, vector<8x128xf32> -> vector<8x128xf32>
    %c0_152 = arith.constant 0 : index
    %c0_153 = arith.constant 0 : index
    %637 = vector.load %arg19[%c0_152, %c0_153] : memref<1x128xf32, #tpu.memory_space<vmem>>, vector<1x128xf32>
    %638 = vector.broadcast %637 : vector<1x128xf32> to vector<8x128xf32>
    %639 = arith.addf %636, %638 : vector<8x128xf32>
    %c0_154 = arith.constant 0 : index
    %c0_155 = arith.constant 0 : index
    %640 = vector.load %arg20[%c0_154, %c0_155] : memref<8x128xf32, #tpu.memory_space<vmem>>, vector<8x128xf32>
    tpu.vector_store %arg20[%c0_154, %c0_155], %639 {strides = array<i32>} : memref<8x128xf32, #tpu.memory_space<vmem>>, vector<8x128xf32>,
    return
  }
  func.func @transform_0(%arg0: i32) -> (i32, i32, i32) {
    %c0_i32 = arith.constant 0 : i32
    %c0_i32_0 = arith.constant 0 : i32
    %c0_i32_1 = arith.constant 0 : i32
    return %arg0, %c0_i32, %c0_i32_0 : i32, i32, i32
  }
  func.func @transform_1(%arg0: i32) -> (i32, i32) {
    %c0_i32 = arith.constant 0 : i32
    %c0_i32_0 = arith.constant 0 : i32
    return %arg0, %c0_i32 : i32, i32
  }
  func.func @transform_2(%arg0: i32) -> (i32, i32) {
    %c0_i32 = arith.constant 0 : i32
    %c0_i32_0 = arith.constant 0 : i32
    %c0_i32_1 = arith.constant 0 : i32
    return %c0_i32, %c0_i32_0 : i32, i32
  }
  func.func @transform_3(%arg0: i32) -> (i32, i32) {
    %c0_i32 = arith.constant 0 : i32
    %c0_i32_0 = arith.constant 0 : i32
    %c0_i32_1 = arith.constant 0 : i32
    return %c0_i32, %c0_i32_0 : i32, i32
  }
  func.func @transform_4(%arg0: i32) -> (i32, i32) {
    %c0_i32 = arith.constant 0 : i32
    %c0_i32_0 = arith.constant 0 : i32
    %c0_i32_1 = arith.constant 0 : i32
    return %c0_i32, %c0_i32_0 : i32, i32
  }
  func.func @transform_5(%arg0: i32) -> (i32, i32) {
    %c0_i32 = arith.constant 0 : i32
    %c0_i32_0 = arith.constant 0 : i32
    %c0_i32_1 = arith.constant 0 : i32
    return %c0_i32, %c0_i32_0 : i32, i32
  }
  func.func @transform_6(%arg0: i32) -> (i32, i32) {
    %c0_i32 = arith.constant 0 : i32
    %c0_i32_0 = arith.constant 0 : i32
    %c0_i32_1 = arith.constant 0 : i32
    return %c0_i32, %c0_i32_0 : i32, i32
  }
  func.func @transform_7(%arg0: i32) -> (i32, i32) {
    %c0_i32 = arith.constant 0 : i32
    %c0_i32_0 = arith.constant 0 : i32
    %c0_i32_1 = arith.constant 0 : i32
    return %c0_i32, %c0_i32_0 : i32, i32
  }
  func.func @transform_8(%arg0: i32) -> (i32, i32) {
    %c0_i32 = arith.constant 0 : i32
    %c0_i32_0 = arith.constant 0 : i32
    %c0_i32_1 = arith.constant 0 : i32
    return %c0_i32, %c0_i32_0 : i32, i32
  }
  func.func @transform_9(%arg0: i32) -> (i32, i32) {
    %c0_i32 = arith.constant 0 : i32
    %c0_i32_0 = arith.constant 0 : i32
    %c0_i32_1 = arith.constant 0 : i32
    return %c0_i32, %c0_i32_0 : i32, i32
  }
  func.func @transform_10(%arg0: i32) -> (i32, i32) {
    %c0_i32 = arith.constant 0 : i32
    %c0_i32_0 = arith.constant 0 : i32
    %c0_i32_1 = arith.constant 0 : i32
    return %c0_i32, %c0_i32_0 : i32, i32
  }
  func.func @transform_11(%arg0: i32) -> (i32, i32) {
    %c0_i32 = arith.constant 0 : i32
    %c0_i32_0 = arith.constant 0 : i32
    %c0_i32_1 = arith.constant 0 : i32
    return %c0_i32, %c0_i32_0 : i32, i32
  }
  func.func @transform_12(%arg0: i32) -> (i32, i32) {
    %c0_i32 = arith.constant 0 : i32
    %c0_i32_0 = arith.constant 0 : i32
    %c0_i32_1 = arith.constant 0 : i32
    return %c0_i32, %c0_i32_0 : i32, i32
  }
  func.func @transform_13(%arg0: i32) -> (i32, i32) {
    %c0_i32 = arith.constant 0 : i32
    %c0_i32_0 = arith.constant 0 : i32
    %c0_i32_1 = arith.constant 0 : i32
    return %c0_i32, %c0_i32_0 : i32, i32
  }
  func.func @transform_14(%arg0: i32) -> (i32, i32) {
    %c0_i32 = arith.constant 0 : i32
    %c0_i32_0 = arith.constant 0 : i32
    %c0_i32_1 = arith.constant 0 : i32
    return %c0_i32, %c0_i32_0 : i32, i32
  }
  func.func @transform_15(%arg0: i32) -> (i32, i32) {
    %c0_i32 = arith.constant 0 : i32
    %c0_i32_0 = arith.constant 0 : i32
    %c0_i32_1 = arith.constant 0 : i32
    return %c0_i32, %c0_i32_0 : i32, i32
  }
  func.func @transform_16(%arg0: i32) -> (i32, i32) {
    %c0_i32 = arith.constant 0 : i32
    %c0_i32_0 = arith.constant 0 : i32
    %c0_i32_1 = arith.constant 0 : i32
    return %c0_i32, %c0_i32_0 : i32, i32
  }
  func.func @transform_17(%arg0: i32) -> (i32, i32) {
    %c0_i32 = arith.constant 0 : i32
    %c0_i32_0 = arith.constant 0 : i32
    %c0_i32_1 = arith.constant 0 : i32
    return %c0_i32, %c0_i32_0 : i32, i32
  }
  func.func @transform_18(%arg0: i32) -> (i32, i32) {
    %c0_i32 = arith.constant 0 : i32
    %c0_i32_0 = arith.constant 0 : i32
    %c0_i32_1 = arith.constant 0 : i32
    return %c0_i32, %c0_i32_0 : i32, i32
  }
  func.func @transform_19(%arg0: i32) -> (i32, i32) {
    %c0_i32 = arith.constant 0 : i32
    %c0_i32_0 = arith.constant 0 : i32
    return %arg0, %c0_i32 : i32, i32
  }
}

</mosaic_0001>

<llo_original>
// kernel: tpu_custom_call.1
$region0: #{tpu_custom_call.1}
  #allocation0 [shape = 'u32[]', space=smem, size = 0x4, offset = 0x4, fixed_abs, tag = 'smem constant byte address 0x4 - core index']
  #allocation1 [shape = 'u32[144,128]{1,0:T(1,128)}', space=vmem, size = 0x12000, scoped, tag = 'internal scratch']
  #allocation2 [shape = 'f32[8,8,16]{2,1,0:T(8,128)}', space=vmem, size = 0x8000, scoped, tag = 'scratch operand']
  #allocation3 [shape = 'f32[8,8,16]{2,1,0:T(8,128)}', space=vmem, size = 0x8000, scoped, tag = 'scratch operand']
  #allocation4 [shape = 'f32[1,1]{1,0:T(1,128)S(1)}', space=vmem, size = 0x200, scoped, tag = 'scoped memory for tpu_custom_call.1']
  %s0 = inlined_call_operand.hbm [shape: bf16[8,8,32], index: 0, kind: input, shape index: {}]
  %s1 = inlined_call_operand.vmem [shape: s32[8,1], index: 1, kind: input, shape index: {}]
  %s2 = inlined_call_operand.vmem [shape: bf16[32,128], index: 2, kind: input, shape index: {}]
  %s3 = inlined_call_operand.vmem [shape: f32[1,64], index: 3, kind: input, shape index: {}]
  %s4 = inlined_call_operand.hbm [shape: f32[1,64], index: 4, kind: input, shape index: {}]
  %s5 = inlined_call_operand.hbm [shape: f32[16,64], index: 5, kind: input, shape index: {}]
  %s6 = inlined_call_operand.vmem [shape: f32[16,64], index: 6, kind: input, shape index: {}]
  %s7 = inlined_call_operand.hbm [shape: f32[1,16], index: 7, kind: input, shape index: {}]
  %s8 = inlined_call_operand.hbm [shape: f32[1,16], index: 8, kind: input, shape index: {}]
  %s9 = inlined_call_operand.hbm [shape: f32[1,16], index: 9, kind: input, shape index: {}]
  %s10 = inlined_call_operand.hbm [shape: f32[1,16], index: 10, kind: input, shape index: {}]
  %s11 = inlined_call_operand.hbm [shape: f32[1,16], index: 11, kind: input, shape index: {}]
  %s12 = inlined_call_operand.hbm [shape: f32[1,16], index: 12, kind: input, shape index: {}]
  %s13 = inlined_call_operand.<no memory space> [shape: f32[1,1], index: 13, kind: input, shape index: {}]
  %s14 = inlined_call_operand.hbm [shape: f32[16,32], index: 14, kind: input, shape index: {}]
  %s15 = inlined_call_operand.hbm [shape: f32[16,32], index: 15, kind: input, shape index: {}]
  %s16 = inlined_call_operand.vmem [shape: f32[1,32], index: 16, kind: input, shape index: {}]
  %s17 = inlined_call_operand.vmem [shape: f32[32,128], index: 17, kind: input, shape index: {}]
  %s18 = inlined_call_operand.vmem [shape: f32[1,128], index: 18, kind: input, shape index: {}]
  %s19 = inlined_call_operand.hbm [shape: f32[8,128], index: 19, kind: output, shape index: {}]
  %s20 = sld [smem:[#allocation0]]
  $region130: #{tpu_custom_call.1} parent=0
    _
  %s22 = ssub.s32 1, %s20
  %s23 = scalar_select 0, %s22, %s20
  %v24 = vstv %s13
  %25 = vst [vmem:[#allocation4] sm:$0x1] %v24
  $region1: #{tpu_custom_call.1} parent=0
    #allocation5 [shape = 'u8[16384]{0}', space=vmem, size = 0x4000, scoped, tag = 'input window, operand 0, single buffered']
    #allocation6 [shape = 's32[1]{0}', space=sflag, size = 0x4, scoped, tag = 'scoped memory for tpu_custom_call.1']
    #allocation7 [shape = 's32[1]{0}', space=sflag, size = 0x4, scoped, tag = 'scoped memory for tpu_custom_call.1']
    #allocation8 [shape = 'u8[512]{0}', space=vmem, size = 0x400, scoped, tag = 'input window, operand 4, single buffered']
    #allocation9 [shape = 's32[1]{0}', space=sflag, size = 0x4, scoped, tag = 'scoped memory for tpu_custom_call.1']
    #allocation10 [shape = 'u8[8192]{0}', space=vmem, size = 0x2000, scoped, tag = 'input window, operand 5, single buffered']
    #allocation11 [shape = 'u8[512]{0}', space=vmem, size = 0x400, scoped, tag = 'input window, operand 7, single buffered']
    #allocation12 [shape = 's32[1]{0}', space=sflag, size = 0x4, scoped, tag = 'scoped memory for tpu_custom_call.1']
    #allocation13 [shape = 'u8[512]{0}', space=vmem, size = 0x400, scoped, tag = 'input window, operand 8, single buffered']
    #allocation14 [shape = 'u8[512]{0}', space=vmem, size = 0x400, scoped, tag = 'input window, operand 9, single buffered']
    #allocation15 [shape = 's32[1]{0}', space=sflag, size = 0x4, scoped, tag = 'scoped memory for tpu_custom_call.1']
    #allocation16 [shape = 'u8[512]{0}', space=vmem, size = 0x400, scoped, tag = 'input window, operand 10, single buffered']
    #allocation17 [shape = 'u8[512]{0}', space=vmem, size = 0x400, scoped, tag = 'input window, operand 11, single buffered']
    #allocation18 [shape = 's32[1]{0}', space=sflag, size = 0x4, scoped, tag = 'scoped memory for tpu_custom_call.1']
    #allocation19 [shape = 'u8[512]{0}', space=vmem, size = 0x400, scoped, tag = 'input window, operand 12, single buffered']
    #allocation20 [shape = 'u8[8192]{0}', space=vmem, size = 0x2000, scoped, tag = 'input window, operand 14, single buffered']
    #allocation21 [shape = 's32[1]{0}', space=sflag, size = 0x4, scoped, tag = 'scoped memory for tpu_custom_call.1']
    #allocation22 [shape = 'u8[8192]{0}', space=vmem, size = 0x2000, scoped, tag = 'input window, operand 15, single buffered']
    #allocation23 [shape = 'u8[4096]{0}', space=vmem, size = 0x1000, scoped, tag = 'output window, operand 0, single buffered']
    %26 = vsyncpa [#allocation6], 0
    %27 = vsyncpa [#allocation9], 0
    %28 = vsyncpa [#allocation12], 0
    %29 = vsyncpa [#allocation15], 0
    %30 = vsyncpa [#allocation18], 0
    %31 = vsyncpa [#allocation21], 0
    %32 = vsyncpa [#allocation7], 0
    // Predicated region
    $region2: #{tpu_custom_call.1} parent=1 // pred_check
      _
    $region3: #{tpu_custom_call.1} parent=1 // pred_check_branch
      %34 = sbr.rel (0) target = $region5
    $region4: #{tpu_custom_call.1} parent=1 // pred_region
      %s36 = ssub.s32 512, 512
      %37 = vsyncadd [#allocation6], %s36
      %s38 = sshll.u32 [#allocation5], 4
      %s39 = int_to_ptr.vmem [resolvable:$true] %s38
      %44 = dma.hbm_to_vmem [thread:$0]  %s0, 512, %s39, [#allocation6], 64, 64, 4
    $region5: #{tpu_custom_call.1} parent=1 // pred_fallthru
      _
    // Predicated region
    $region6: #{tpu_custom_call.1} parent=1 // pred_check
      _
    $region7: #{tpu_custom_call.1} parent=1 // pred_check_branch
      %46 = sbr.rel (0) target = $region9
    $region8: #{tpu_custom_call.1} parent=1 // pred_region
      _
    $region9: #{tpu_custom_call.1} parent=1 // pred_fallthru
      _
    // Predicated region
    $region10: #{tpu_custom_call.1} parent=1 // pred_check
      _
    $region11: #{tpu_custom_call.1} parent=1 // pred_check_branch
      %48 = sbr.rel (0) target = $region13
    $region12: #{tpu_custom_call.1} parent=1 // pred_region
      _
    $region13: #{tpu_custom_call.1} parent=1 // pred_fallthru
      _
    // Predicated region
    $region14: #{tpu_custom_call.1} parent=1 // pred_check
      _
    $region15: #{tpu_custom_call.1} parent=1 // pred_check_branch
      %50 = sbr.rel (0) target = $region17
    $region16: #{tpu_custom_call.1} parent=1 // pred_region
      _
    $region17: #{tpu_custom_call.1} parent=1 // pred_fallthru
      _
    // Predicated region
    $region18: #{tpu_custom_call.1} parent=1 // pred_check
      _
    $region19: #{tpu_custom_call.1} parent=1 // pred_check_branch
      %52 = sbr.rel (0) target = $region21
    $region20: #{tpu_custom_call.1} parent=1 // pred_region
      %s54 = ssub.s32 16, 16
      %55 = vsyncadd [#allocation9], %s54
      %s57 = sshll.u32 [#allocation8], 4
      %s58 = int_to_ptr.vmem [resolvable:$true] %s57
      %60 = dma.hbm_to_vmem [thread:$0]  %s4, 16, %s58, [#allocation9]
    $region21: #{tpu_custom_call.1} parent=1 // pred_fallthru
      _
    // Predicated region
    $region22: #{tpu_custom_call.1} parent=1 // pred_check
      _
    $region23: #{tpu_custom_call.1} parent=1 // pred_check_branch
      %62 = sbr.rel (0) target = $region25
    $region24: #{tpu_custom_call.1} parent=1 // pred_region
      %s64 = ssub.s32 256, 256
      %65 = vsyncadd [#allocation9], %s64
      %s66 = sshll.u32 [#allocation10], 4
      %s67 = int_to_ptr.vmem [resolvable:$true] %s66
      %72 = dma.hbm_to_vmem [thread:$0]  %s5, 256, %s67, [#allocation9], 128, 128, 8
    $region25: #{tpu_custom_call.1} parent=1 // pred_fallthru
      _
    // Predicated region
    $region26: #{tpu_custom_call.1} parent=1 // pred_check
      _
    $region27: #{tpu_custom_call.1} parent=1 // pred_check_branch
      %74 = sbr.rel (0) target = $region29
    $region28: #{tpu_custom_call.1} parent=1 // pred_region
      _
    $region29: #{tpu_custom_call.1} parent=1 // pred_fallthru
      _
    // Predicated region
    $region30: #{tpu_custom_call.1} parent=1 // pred_check
      _
    $region31: #{tpu_custom_call.1} parent=1 // pred_check_branch
      %76 = sbr.rel (0) target = $region33
    $region32: #{tpu_custom_call.1} parent=1 // pred_region
      %s78 = ssub.s32 16, 16
      %79 = vsyncadd [#allocation12], %s78
      %s81 = sshll.u32 [#allocation11], 4
      %s82 = int_to_ptr.vmem [resolvable:$true] %s81
      %84 = dma.hbm_to_vmem [thread:$0]  %s7, 16, %s82, [#allocation12]
    $region33: #{tpu_custom_call.1} parent=1 // pred_fallthru
      _
    // Predicated region
    $region34: #{tpu_custom_call.1} parent=1 // pred_check
      _
    $region35: #{tpu_custom_call.1} parent=1 // pred_check_branch
      %86 = sbr.rel (0) target = $region37
    $region36: #{tpu_custom_call.1} parent=1 // pred_region
      %s88 = ssub.s32 16, 16
      %89 = vsyncadd [#allocation12], %s88
      %s91 = sshll.u32 [#allocation13], 4
      %s92 = int_to_ptr.vmem [resolvable:$true] %s91
      %94 = dma.hbm_to_vmem [thread:$0]  %s8, 16, %s92, [#allocation12]
    $region37: #{tpu_custom_call.1} parent=1 // pred_fallthru
      _
    // Predicated region
    $region38: #{tpu_custom_call.1} parent=1 // pred_check
      _
    $region39: #{tpu_custom_call.1} parent=1 // pred_check_branch
      %96 = sbr.rel (0) target = $region41
    $region40: #{tpu_custom_call.1} parent=1 // pred_region
      %s98 = ssub.s32 16, 16
      %99 = vsyncadd [#allocation15], %s98
      %s101 = sshll.u32 [#allocation14], 4
      %s102 = int_to_ptr.vmem [resolvable:$true] %s101
      %104 = dma.hbm_to_vmem [thread:$0]  %s9, 16, %s102, [#allocation15]
    $region41: #{tpu_custom_call.1} parent=1 // pred_fallthru
      _
    // Predicated region
    $region42: #{tpu_custom_call.1} parent=1 // pred_check
      _
    $region43: #{tpu_custom_call.1} parent=1 // pred_check_branch
      %106 = sbr.rel (0) target = $region45
    $region44: #{tpu_custom_call.1} parent=1 // pred_region
      %s108 = ssub.s32 16, 16
      %109 = vsyncadd [#allocation15], %s108
      %s111 = sshll.u32 [#allocation16], 4
      %s112 = int_to_ptr.vmem [resolvable:$true] %s111
      %114 = dma.hbm_to_vmem [thread:$0]  %s10, 16, %s112, [#allocation15]
    $region45: #{tpu_custom_call.1} parent=1 // pred_fallthru
      _
    // Predicated region
    $region46: #{tpu_custom_call.1} parent=1 // pred_check
      _
    $region47: #{tpu_custom_call.1} parent=1 // pred_check_branch
      %116 = sbr.rel (0) target = $region49
    $region48: #{tpu_custom_call.1} parent=1 // pred_region
      %s118 = ssub.s32 16, 16
      %119 = vsyncadd [#allocation18], %s118
      %s121 = sshll.u32 [#allocation17], 4
      %s122 = int_to_ptr.vmem [resolvable:$true] %s121
      %124 = dma.hbm_to_vmem [thread:$0]  %s11, 16, %s122, [#allocation18]
    $region49: #{tpu_custom_call.1} parent=1 // pred_fallthru
      _
    // Predicated region
    $region50: #{tpu_custom_call.1} parent=1 // pred_check
      _
    $region51: #{tpu_custom_call.1} parent=1 // pred_check_branch
      %126 = sbr.rel (0) target = $region53
    $region52: #{tpu_custom_call.1} parent=1 // pred_region
      %s128 = ssub.s32 16, 16
      %129 = vsyncadd [#allocation18], %s128
      %s131 = sshll.u32 [#allocation19], 4
      %s132 = int_to_ptr.vmem [resolvable:$true] %s131
      %134 = dma.hbm_to_vmem [thread:$0]  %s12, 16, %s132, [#allocation18]
    $region53: #{tpu_custom_call.1} parent=1 // pred_fallthru
      _
    // Predicated region
    $region54: #{tpu_custom_call.1} parent=1 // pred_check
      _
    $region55: #{tpu_custom_call.1} parent=1 // pred_check_branch
      %136 = sbr.rel (0) target = $region57
    $region56: #{tpu_custom_call.1} parent=1 // pred_region
      _
    $region57: #{tpu_custom_call.1} parent=1 // pred_fallthru
      _
    // Predicated region
    $region58: #{tpu_custom_call.1} parent=1 // pred_check
      _
    $region59: #{tpu_custom_call.1} parent=1 // pred_check_branch
      %138 = sbr.rel (0) target = $region61
    $region60: #{tpu_custom_call.1} parent=1 // pred_region
      %s140 = ssub.s32 256, 256
      %141 = vsyncadd [#allocation21], %s140
      %s142 = sshll.u32 [#allocation20], 4
      %s143 = int_to_ptr.vmem [resolvable:$true] %s142
      %148 = dma.hbm_to_vmem [thread:$0]  %s14, 256, %s143, [#allocation21], 128, 128, 8
    $region61: #{tpu_custom_call.1} parent=1 // pred_fallthru
      _
    // Predicated region
    $region62: #{tpu_custom_call.1} parent=1 // pred_check
      _
    $region63: #{tpu_custom_call.1} parent=1 // pred_check_branch
      %150 = sbr.rel (0) target = $region65
    $region64: #{tpu_custom_call.1} parent=1 // pred_region
      %s152 = ssub.s32 256, 256
      %153 = vsyncadd [#allocation21], %s152
      %s154 = sshll.u32 [#allocation22], 4
      %s155 = int_to_ptr.vmem [resolvable:$true] %s154
      %160 = dma.hbm_to_vmem [thread:$0]  %s15, 256, %s155, [#allocation21], 128, 128, 8
    $region65: #{tpu_custom_call.1} parent=1 // pred_fallthru
      _
    // Predicated region
    $region66: #{tpu_custom_call.1} parent=1 // pred_check
      _
    $region67: #{tpu_custom_call.1} parent=1 // pred_check_branch
      %162 = sbr.rel (0) target = $region69
    $region68: #{tpu_custom_call.1} parent=1 // pred_region
      _
    $region69: #{tpu_custom_call.1} parent=1 // pred_fallthru
      _
    // Predicated region
    $region70: #{tpu_custom_call.1} parent=1 // pred_check
      _
    $region71: #{tpu_custom_call.1} parent=1 // pred_check_branch
      %164 = sbr.rel (0) target = $region73
    $region72: #{tpu_custom_call.1} parent=1 // pred_region
      _
    $region73: #{tpu_custom_call.1} parent=1 // pred_fallthru
      _
    // Predicated region
    $region74: #{tpu_custom_call.1} parent=1 // pred_check
      _
    $region75: #{tpu_custom_call.1} parent=1 // pred_check_branch
      %166 = sbr.rel (0) target = $region77
    $region76: #{tpu_custom_call.1} parent=1 // pred_region
      _
    $region77: #{tpu_custom_call.1} parent=1 // pred_fallthru
      _
    // Predicated region
    $region78: #{tpu_custom_call.1} parent=1 // pred_check
      _
    $region79: #{tpu_custom_call.1} parent=1 // pred_check_branch
      %168 = sbr.rel (0) target = $region81
    $region80: #{tpu_custom_call.1} parent=1 // pred_region
      %169 = dma.done [#allocation6], 512
    $region81: #{tpu_custom_call.1} parent=1 // pred_fallthru
      _
    // Predicated region
    $region82: #{tpu_custom_call.1} parent=1 // pred_check
      _
    $region83: #{tpu_custom_call.1} parent=1 // pred_check_branch
      %171 = sbr.rel (0) target = $region85
    $region84: #{tpu_custom_call.1} parent=1 // pred_region
      %172 = dma.done [#allocation9], 16
    $region85: #{tpu_custom_call.1} parent=1 // pred_fallthru
      _
    // Predicated region
    $region86: #{tpu_custom_call.1} parent=1 // pred_check
      _
    $region87: #{tpu_custom_call.1} parent=1 // pred_check_branch
      %174 = sbr.rel (0) target = $region89
    $region88: #{tpu_custom_call.1} parent=1 // pred_region
      %175 = dma.done [#allocation9], 256
    $region89: #{tpu_custom_call.1} parent=1 // pred_fallthru
      _
    // Predicated region
    $region90: #{tpu_custom_call.1} parent=1 // pred_check
      _
    $region91: #{tpu_custom_call.1} parent=1 // pred_check_branch
      %177 = sbr.rel (0) target = $region93
    $region92: #{tpu_custom_call.1} parent=1 // pred_region
      %178 = dma.done [#allocation12], 16
    $region93: #{tpu_custom_call.1} parent=1 // pred_fallthru
      _
    // Predicated region
    $region94: #{tpu_custom_call.1} parent=1 // pred_check
      _
    $region95: #{tpu_custom_call.1} parent=1 // pred_check_branch
      %180 = sbr.rel (0) target = $region97
    $region96: #{tpu_custom_call.1} parent=1 // pred_region
      %181 = dma.done [#allocation12], 16
    $region97: #{tpu_custom_call.1} parent=1 // pred_fallthru
      _
    // Predicated region
    $region98: #{tpu_custom_call.1} parent=1 // pred_check
      _
    $region99: #{tpu_custom_call.1} parent=1 // pred_check_branch
      %183 = sbr.rel (0) target = $region101
    $region100: #{tpu_custom_call.1} parent=1 // pred_region
      %184 = dma.done [#allocation15], 16
    $region101: #{tpu_custom_call.1} parent=1 // pred_fallthru
      _
    // Predicated region
    $region102: #{tpu_custom_call.1} parent=1 // pred_check
      _
    $region103: #{tpu_custom_call.1} parent=1 // pred_check_branch
      %186 = sbr.rel (0) target = $region105
    $region104: #{tpu_custom_call.1} parent=1 // pred_region
      %187 = dma.done [#allocation15], 16
    $region105: #{tpu_custom_call.1} parent=1 // pred_fallthru
      _
    // Predicated region
    $region106: #{tpu_custom_call.1} parent=1 // pred_check
      _
    $region107: #{tpu_custom_call.1} parent=1 // pred_check_branch
      %189 = sbr.rel (0) target = $region109
    $region108: #{tpu_custom_call.1} parent=1 // pred_region
      %190 = dma.done [#allocation18], 16
    $region109: #{tpu_custom_call.1} parent=1 // pred_fallthru
      _
    // Predicated region
    $region110: #{tpu_custom_call.1} parent=1 // pred_check
      _
    $region111: #{tpu_custom_call.1} parent=1 // pred_check_branch
      %192 = sbr.rel (0) target = $region113
    $region112: #{tpu_custom_call.1} parent=1 // pred_region
      %193 = dma.done [#allocation18], 16
    $region113: #{tpu_custom_call.1} parent=1 // pred_fallthru
      _
    // Predicated region
    $region114: #{tpu_custom_call.1} parent=1 // pred_check
      _
    $region115: #{tpu_custom_call.1} parent=1 // pred_check_branch
      %195 = sbr.rel (0) target = $region117
    $region116: #{tpu_custom_call.1} parent=1 // pred_region
      %196 = dma.done [#allocation21], 256
    $region117: #{tpu_custom_call.1} parent=1 // pred_fallthru
      _
    // Predicated region
    $region118: #{tpu_custom_call.1} parent=1 // pred_check
      _
    $region119: #{tpu_custom_call.1} parent=1 // pred_check_branch
      %198 = sbr.rel (0) target = $region121
    $region120: #{tpu_custom_call.1} parent=1 // pred_region
      %199 = dma.done [#allocation21], 256
    $region121: #{tpu_custom_call.1} parent=1 // pred_fallthru
      _
    %v201 = vld [vmem:[%s1] sm:$0xff]
    %v202 = vld [vmem:[#allocation5] sm:$0xf]
    %v203 = vld [vmem:[#allocation5 + $0x4] sm:$0xf]
    %v204 = vld [vmem:[#allocation5 + $0x8] sm:$0xf]
    %v205 = vld [vmem:[#allocation5 + $0xc] sm:$0xf]
    %v206 = vld [vmem:[#allocation5 + $0x10] sm:$0xf]
    %v207 = vld [vmem:[#allocation5 + $0x14] sm:$0xf]
    %v208 = vld [vmem:[#allocation5 + $0x18] sm:$0xf]
    %v209 = vld [vmem:[#allocation5 + $0x1c] sm:$0xf]
    %v210 = vld [vmem:[%s2] sm:$0xf]
    %v211 = vld [vmem:[%s2 + $0x4] sm:$0xf]
    %v212 = vld [vmem:[%s2 + $0x8] sm:$0xf]
    %v213 = vld [vmem:[%s2 + $0xc] sm:$0xf]
    %v222 = vunpack.c.l.b16 %v202
    %v223 = vunpack.c.l.b16 %v203
    %v224 = vunpack.c.l.b16 %v204
    %v225 = vunpack.c.l.b16 %v205
    %v226 = vunpack.c.l.b16 %v206
    %v227 = vunpack.c.l.b16 %v207
    %v228 = vunpack.c.l.b16 %v208
    %v229 = vunpack.c.l.b16 %v209
    %v230 = vpack.c.b16 %v223, %v222
    %v231 = vpack.c.b16 %v225, %v224
    %v232 = vpack.c.b16 %v227, %v226
    %v233 = vpack.c.b16 %v229, %v228
    %v238 = vunpack.c.l.b16 %v210
    %v239 = vunpack.c.l.b16 %v211
    %v240 = vunpack.c.l.b16 %v212
    %v241 = vunpack.c.l.b16 %v213
    %v242 = vpack.c.b16 %v239, %v238
    %v243 = vpack.c.b16 %v241, %v240
    %vm246 = vcmask 261120
    %v248 = vsel %vm246, %v230, 0
    %v251 = vsel %vm246, %v231, 0
    %v254 = vsel %vm246, %v232, 0
    %v257 = vsel %vm246, %v233, 0
    %259 = vmatprep.subr.bf16.mxu0 0
    %260 = vmatpush1.bf16.msra.mxu0 %v242
    %261 = vmatprep.subr.bf16.mxu0 0
    %262 = vmatpush1.bf16.msra.mxu0 %v243
    %263 = vmatprep.subr.bf16.mxu0 0
    %264 = vmatpush1.bf16.msra.mxu0 0
    %265 = vmatprep.subr.bf16.mxu0 0
    %266 = vmatpush1.bf16.msra.mxu0 0
    %267 = vmatprep.subr.bf16.mxu0 0
    %268 = vmatpush1.bf16.msra.mxu0 0
    %269 = vmatprep.subr.bf16.mxu0 0
    %270 = vmatpush1.bf16.msra.mxu0 0
    %271 = vmatprep.subr.bf16.mxu0 0
    %272 = vmatpush1.bf16.msra.mxu0 0
    %273 = vmatprep.subr.bf16.mxu0 0
    %274 = vmatpush1.bf16.msra.mxu0 0
    %275 = vmatprep.subr.bf16.mxu0 0
    %276 = vmatpush1.bf16.msra.mxu0 0
    %277 = vmatprep.subr.bf16.mxu0 0
    %278 = vmatpush1.bf16.msra.mxu0 0
    %279 = vmatprep.subr.bf16.mxu0 0
    %280 = vmatpush1.bf16.msra.mxu0 0
    %281 = vmatprep.subr.bf16.mxu0 0
    %282 = vmatpush1.bf16.msra.mxu0 0
    %283 = vmatprep.subr.bf16.mxu0 0
    %284 = vmatpush1.bf16.msra.mxu0 0
    %285 = vmatprep.subr.bf16.mxu0 0
    %286 = vmatpush1.bf16.msra.mxu0 0
    %287 = vmatprep.subr.bf16.mxu0 0
    %288 = vmatpush1.bf16.msra.mxu0 0
    %289 = vmatprep.subr.bf16.mxu0 0
    %290 = vmatpush1.bf16.msra.mxu0 0
    %291 = vmatprep.mubr.bf16.mxu0 0
    %292 = vmatmul.mubr.bf16.gmra.mrb[0].mxu0 %v248
    %v293 = vpop.f32.mrb[0].mxu0
    %v294 = vadd.f32 0.0, %v293
    %v295 = vpop.f32.mrb[0].mxu0
    %v296 = vpop.f32.mrb[0].mxu0
    %v297 = vadd.f32 0.0, %v296
    %v298 = vpop.f32.mrb[0].mxu0
    %299 = vmatprep.mubr.bf16.mxu0 0
    %300 = vmatmul.mubr.bf16.gmra.mrb[0].mxu0 %v251
    %v301 = vpop.f32.mrb[0].mxu0
    %v302 = vadd.f32 0.0, %v301
    %v303 = vpop.f32.mrb[0].mxu0
    %v304 = vpop.f32.mrb[0].mxu0
    %v305 = vadd.f32 0.0, %v304
    %v306 = vpop.f32.mrb[0].mxu0
    %307 = vmatprep.mubr.bf16.mxu0 0
    %308 = vmatmul.mubr.bf16.gmra.mrb[0].mxu0 %v254
    %v309 = vpop.f32.mrb[0].mxu0
    %v310 = vadd.f32 0.0, %v309
    %v311 = vpop.f32.mrb[0].mxu0
    %v312 = vpop.f32.mrb[0].mxu0
    %v313 = vadd.f32 0.0, %v312
    %v314 = vpop.f32.mrb[0].mxu0
    %315 = vmatprep.mubr.bf16.mxu0 0
    %316 = vmatmul.mubr.bf16.gmra.mrb[0].mxu0 %v257
    %v317 = vpop.f32.mrb[0].mxu0
    %v318 = vadd.f32 0.0, %v317
    %v319 = vpop.f32.mrb[0].mxu0
    %v320 = vpop.f32.mrb[0].mxu0
    %v321 = vadd.f32 0.0, %v320
    %v322 = vpop.f32.mrb[0].mxu0
    %323 = vdwg.mxu0
    %v324 = vcombine.low %v294, %v302
    %v325 = vcombine.high %v294, %v302
    %v327 = vunpack.c.l.s4 1983009808
    %v328 = vunpack.c.0.s8 %v327
    %v329 = vlaneseq
    %v330 = vshrl.u32 %v329, 7
    %v331 = vsub.s32 %v328, %v330
    %v332 = vrot.slane %v324, %v331
    %v334 = vunpack.c.l.s4 1983009808
    %v335 = vunpack.c.0.s8 %v334
    %v336 = vlaneseq
    %v337 = vshrl.u32 %v336, 7
    %v338 = vsub.s32 %v335, %v337
    %v339 = vrot.slane %v325, %v338
    %v340 = vcombine.low %v297, %v305
    %v341 = vcombine.high %v297, %v305
    %v343 = vunpack.c.l.s4 1983009808
    %v344 = vunpack.c.0.s8 %v343
    %v345 = vlaneseq
    %v346 = vshrl.u32 %v345, 7
    %v347 = vsub.s32 %v344, %v346
    %v348 = vrot.slane %v340, %v347
    %v350 = vunpack.c.l.s4 1983009808
    %v351 = vunpack.c.0.s8 %v350
    %v352 = vlaneseq
    %v353 = vshrl.u32 %v352, 7
    %v354 = vsub.s32 %v351, %v353
    %v355 = vrot.slane %v341, %v354
    %v356 = vcombine.low %v310, %v318
    %v357 = vcombine.high %v310, %v318
    %v359 = vunpack.c.l.s4 1983009808
    %v360 = vunpack.c.0.s8 %v359
    %v361 = vlaneseq
    %v362 = vshrl.u32 %v361, 7
    %v363 = vsub.s32 %v360, %v362
    %v364 = vrot.slane %v356, %v363
    %v366 = vunpack.c.l.s4 1983009808
    %v367 = vunpack.c.0.s8 %v366
    %v368 = vlaneseq
    %v369 = vshrl.u32 %v368, 7
    %v370 = vsub.s32 %v367, %v369
    %v371 = vrot.slane %v357, %v370
    %v372 = vcombine.low %v313, %v321
    %v373 = vcombine.high %v313, %v321
    %v375 = vunpack.c.l.s4 1983009808
    %v376 = vunpack.c.0.s8 %v375
    %v377 = vlaneseq
    %v378 = vshrl.u32 %v377, 7
    %v379 = vsub.s32 %v376, %v378
    %v380 = vrot.slane %v372, %v379
    %v382 = vunpack.c.l.s4 1983009808
    %v383 = vunpack.c.0.s8 %v382
    %v384 = vlaneseq
    %v385 = vshrl.u32 %v384, 7
    %v386 = vsub.s32 %v383, %v385
    %v387 = vrot.slane %v373, %v386
    %v388 = vcombine.low %v332, %v348
    %v389 = vcombine.high %v332, %v348
    %v391 = vunpack.c.l.s4 1934713408
    %v392 = vunpack.c.0.s8 %v391
    %v393 = vlaneseq
    %v394 = vshrl.u32 %v393, 7
    %v395 = vsub.s32 %v392, %v394
    %v396 = vrot.slane %v388, %v395
    %v398 = vunpack.c.l.s4 1934713408
    %v399 = vunpack.c.0.s8 %v398
    %v400 = vlaneseq
    %v401 = vshrl.u32 %v400, 7
    %v402 = vsub.s32 %v399, %v401
    %v403 = vrot.slane %v389, %v402
    %v404 = vcombine.low %v339, %v355
    %v405 = vcombine.high %v339, %v355
    %v407 = vunpack.c.l.s4 1934713408
    %v408 = vunpack.c.0.s8 %v407
    %v409 = vlaneseq
    %v410 = vshrl.u32 %v409, 7
    %v411 = vsub.s32 %v408, %v410
    %v412 = vrot.slane %v404, %v411
    %v414 = vunpack.c.l.s4 1934713408
    %v415 = vunpack.c.0.s8 %v414
    %v416 = vlaneseq
    %v417 = vshrl.u32 %v416, 7
    %v418 = vsub.s32 %v415, %v417
    %v419 = vrot.slane %v405, %v418
    %v420 = vcombine.low %v364, %v380
    %v421 = vcombine.high %v364, %v380
    %v423 = vunpack.c.l.s4 1934713408
    %v424 = vunpack.c.0.s8 %v423
    %v425 = vlaneseq
    %v426 = vshrl.u32 %v425, 7
    %v427 = vsub.s32 %v424, %v426
    %v428 = vrot.slane %v420, %v427
    %v430 = vunpack.c.l.s4 1934713408
    %v431 = vunpack.c.0.s8 %v430
    %v432 = vlaneseq
    %v433 = vshrl.u32 %v432, 7
    %v434 = vsub.s32 %v431, %v433
    %v435 = vrot.slane %v421, %v434
    %v436 = vcombine.low %v371, %v387
    %v437 = vcombine.high %v371, %v387
    %v439 = vunpack.c.l.s4 1934713408
    %v440 = vunpack.c.0.s8 %v439
    %v441 = vlaneseq
    %v442 = vshrl.u32 %v441, 7
    %v443 = vsub.s32 %v440, %v442
    %v444 = vrot.slane %v436, %v443
    %v446 = vunpack.c.l.s4 1934713408
    %v447 = vunpack.c.0.s8 %v446
    %v448 = vlaneseq
    %v449 = vshrl.u32 %v448, 7
    %v450 = vsub.s32 %v447, %v449
    %v451 = vrot.slane %v437, %v450
    %v452 = vcombine.low %v396, %v428
    %v453 = vcombine.high %v396, %v428
    %v454 = vcombine.low %v403, %v435
    %v455 = vcombine.high %v403, %v435
    %v456 = vcombine.low %v412, %v444
    %v457 = vcombine.high %v412, %v444
    %v458 = vcombine.low %v419, %v451
    %v459 = vcombine.high %v419, %v451
    %v460 = vld [vmem:[%s3] sm:$0x1]
    %v462 = vlaneseq
    %v463 = vshrl.u32 %v462, 7
    %v464 = vsub.s32 0, %v463
    %v465 = vrot.slane %v460, %v464
    %v467 = vadd.f32 %v452, %v465
    %v468 = vadd.f32 %v453, %v465
    %v469 = vadd.f32 %v454, %v465
    %v470 = vadd.f32 %v455, %v465
    %v471 = vadd.f32 %v456, %v465
    %v472 = vadd.f32 %v457, %v465
    %v473 = vadd.f32 %v458, %v465
    %v474 = vadd.f32 %v459, %v465
    %v475 = vld [vmem:[#allocation8] sm:$0x1]
    %v477 = vlaneseq
    %v478 = vshrl.u32 %v477, 7
    %v479 = vsub.s32 0, %v478
    %v480 = vrot.slane %v475, %v479
    %481 = vrot.lane.b32.xlu0 %v480, 64
    %v482 = vpop.permute.xlu0 %481
    %v484 = vadd.f32 %v452, %v482
    %v485 = vadd.f32 %v453, %v482
    %v486 = vadd.f32 %v454, %v482
    %v487 = vadd.f32 %v455, %v482
    %v488 = vadd.f32 %v456, %v482
    %v489 = vadd.f32 %v457, %v482
    %v490 = vadd.f32 %v458, %v482
    %v491 = vadd.f32 %v459, %v482
    %v492 = vld [vmem:[#allocation10] sm:$0xff]
    %v493 = vld [vmem:[#allocation10 + $0x8] sm:$0xff]
    %v494 = vld [vmem:[%s6] sm:$0xff]
    %v495 = vld [vmem:[%s6 + $0x8] sm:$0xff]
    %v496 = vld [vmem:[#allocation11] sm:$0x1]
    %v498 = vlaneseq
    %v499 = vshrl.u32 %v498, 7
    %v500 = vsub.s32 0, %v499
    %v501 = vrot.slane %v496, %v500
    %v502 = vld [vmem:[#allocation13] sm:$0x1]
    %v504 = vlaneseq
    %v505 = vshrl.u32 %v504, 7
    %v506 = vsub.s32 0, %v505
    %v507 = vrot.slane %v502, %v506
    %v508 = vld [vmem:[#allocation14] sm:$0x1]
    %v510 = vlaneseq
    %v511 = vshrl.u32 %v510, 7
    %v512 = vsub.s32 0, %v511
    %v513 = vrot.slane %v508, %v512
    %v514 = vld [vmem:[#allocation16] sm:$0x1]
    %v516 = vlaneseq
    %v517 = vshrl.u32 %v516, 7
    %v518 = vsub.s32 0, %v517
    %v519 = vrot.slane %v514, %v518
    %vm520 = vcmask 130048
    %v521 = vsel %vm520, %v501, 0
    %523 = vmatprep.subr.mxu0 0.0
    %524 = vmatpush1.msra.mxu0 %v492
    %525 = vmatprep.subr.mxu0 0.0
    %526 = vmatpush1.msra.mxu0 %v493
    %527 = vmatprep.subr.mxu0 0.0
    %528 = vmatpush1.msra.mxu0 0.0
    %529 = vmatprep.subr.mxu0 0.0
    %530 = vmatpush1.msra.mxu0 0.0
    %531 = vmatprep.subr.mxu0 0.0
    %532 = vmatpush1.msra.mxu0 0.0
    %533 = vmatprep.subr.mxu0 0.0
    %534 = vmatpush1.msra.mxu0 0.0
    %535 = vmatprep.subr.mxu0 0.0
    %536 = vmatpush1.msra.mxu0 0.0
    %537 = vmatprep.subr.mxu0 0.0
    %538 = vmatpush1.msra.mxu0 0.0
    %539 = vmatprep.subr.mxu0 0.0
    %540 = vmatpush1.msra.mxu0 0.0
    %541 = vmatprep.subr.mxu0 0.0
    %542 = vmatpush1.msra.mxu0 0.0
    %543 = vmatprep.subr.mxu0 0.0
    %544 = vmatpush1.msra.mxu0 0.0
    %545 = vmatprep.subr.mxu0 0.0
    %546 = vmatpush1.msra.mxu0 0.0
    %547 = vmatprep.subr.mxu0 0.0
    %548 = vmatpush1.msra.mxu0 0.0
    %549 = vmatprep.subr.mxu0 0.0
    %550 = vmatpush1.msra.mxu0 0.0
    %551 = vmatprep.subr.mxu0 0.0
    %552 = vmatpush1.msra.mxu0 0.0
    %553 = vmatprep.subr.mxu0 0.0
    %554 = vmatpush1.msra.mxu0 0.0
    %555 = vmatprep.subr.mxu0 0.0
    %556 = vmatpush1.msra.mxu0 0.0
    %557 = vmatprep.subr.mxu0 0.0
    %558 = vmatpush1.msra.mxu0 0.0
    %559 = vmatprep.subr.mxu0 0.0
    %560 = vmatpush1.msra.mxu0 0.0
    %561 = vmatprep.subr.mxu0 0.0
    %562 = vmatpush1.msra.mxu0 0.0
    %563 = vmatprep.subr.mxu0 0.0
    %564 = vmatpush1.msra.mxu0 0.0
    %565 = vmatprep.subr.mxu0 0.0
    %566 = vmatpush1.msra.mxu0 0.0
    %567 = vmatprep.subr.mxu0 0.0
    %568 = vmatpush1.msra.mxu0 0.0
    %569 = vmatprep.subr.mxu0 0.0
    %570 = vmatpush1.msra.mxu0 0.0
    %571 = vmatprep.subr.mxu0 0.0
    %572 = vmatpush1.msra.mxu0 0.0
    %573 = vmatprep.subr.mxu0 0.0
    %574 = vmatpush1.msra.mxu0 0.0
    %575 = vmatprep.subr.mxu0 0.0
    %576 = vmatpush1.msra.mxu0 0.0
    %577 = vmatprep.subr.mxu0 0.0
    %578 = vmatpush1.msra.mxu0 0.0
    %579 = vmatprep.subr.mxu0 0.0
    %580 = vmatpush1.msra.mxu0 0.0
    %581 = vmatprep.subr.mxu0 0.0
    %582 = vmatpush1.msra.mxu0 0.0
    %583 = vmatprep.subr.mxu0 0.0
    %584 = vmatpush1.msra.mxu0 0.0
    %585 = vmatprep.subr.mxu0 0.0
    %586 = vmatpush1.msra.mxu0 0.0
    %587 = vmatprep.mubr.f32.mxu0 0.0
    %588 = vmatmul.mubr.f32.gmra.mrb[0].mxu0 %v521
    %v589 = vpop.f32.mrb[0].mxu0
    %v590 = vadd.f32 0.0, %v589
    %v591 = vpop.f32.mrb[0].mxu0
    %592 = vdwg.mxu0
    %v593 = vadd.f32 %v467, %v590
    %v594 = vsel %vm520, %v513, 0
    %596 = vmatprep.subr.mxu0 0.0
    %597 = vmatpush1.msra.mxu0 %v494
    %598 = vmatprep.subr.mxu0 0.0
    %599 = vmatpush1.msra.mxu0 %v495
    %600 = vmatprep.subr.mxu0 0.0
    %601 = vmatpush1.msra.mxu0 0.0
    %602 = vmatprep.subr.mxu0 0.0
    %603 = vmatpush1.msra.mxu0 0.0
    %604 = vmatprep.subr.mxu0 0.0
    %605 = vmatpush1.msra.mxu0 0.0
    %606 = vmatprep.subr.mxu0 0.0
    %607 = vmatpush1.msra.mxu0 0.0
    %608 = vmatprep.subr.mxu0 0.0
    %609 = vmatpush1.msra.mxu0 0.0
    %610 = vmatprep.subr.mxu0 0.0
    %611 = vmatpush1.msra.mxu0 0.0
    %612 = vmatprep.subr.mxu0 0.0
    %613 = vmatpush1.msra.mxu0 0.0
    %614 = vmatprep.subr.mxu0 0.0
    %615 = vmatpush1.msra.mxu0 0.0
    %616 = vmatprep.subr.mxu0 0.0
    %617 = vmatpush1.msra.mxu0 0.0
    %618 = vmatprep.subr.mxu0 0.0
    %619 = vmatpush1.msra.mxu0 0.0
    %620 = vmatprep.subr.mxu0 0.0
    %621 = vmatpush1.msra.mxu0 0.0
    %622 = vmatprep.subr.mxu0 0.0
    %623 = vmatpush1.msra.mxu0 0.0
    %624 = vmatprep.subr.mxu0 0.0
    %625 = vmatpush1.msra.mxu0 0.0
    %626 = vmatprep.subr.mxu0 0.0
    %627 = vmatpush1.msra.mxu0 0.0
    %628 = vmatprep.subr.mxu0 0.0
    %629 = vmatpush1.msra.mxu0 0.0
    %630 = vmatprep.subr.mxu0 0.0
    %631 = vmatpush1.msra.mxu0 0.0
    %632 = vmatprep.subr.mxu0 0.0
    %633 = vmatpush1.msra.mxu0 0.0
    %634 = vmatprep.subr.mxu0 0.0
    %635 = vmatpush1.msra.mxu0 0.0
    %636 = vmatprep.subr.mxu0 0.0
    %637 = vmatpush1.msra.mxu0 0.0
    %638 = vmatprep.subr.mxu0 0.0
    %639 = vmatpush1.msra.mxu0 0.0
    %640 = vmatprep.subr.mxu0 0.0
    %641 = vmatpush1.msra.mxu0 0.0
    %642 = vmatprep.subr.mxu0 0.0
    %643 = vmatpush1.msra.mxu0 0.0
    %644 = vmatprep.subr.mxu0 0.0
    %645 = vmatpush1.msra.mxu0 0.0
    %646 = vmatprep.subr.mxu0 0.0
    %647 = vmatpush1.msra.mxu0 0.0
    %648 = vmatprep.subr.mxu0 0.0
    %649 = vmatpush1.msra.mxu0 0.0
    %650 = vmatprep.subr.mxu0 0.0
    %651 = vmatpush1.msra.mxu0 0.0
    %652 = vmatprep.subr.mxu0 0.0
    %653 = vmatpush1.msra.mxu0 0.0
    %654 = vmatprep.subr.mxu0 0.0
    %655 = vmatpush1.msra.mxu0 0.0
    %656 = vmatprep.subr.mxu0 0.0
    %657 = vmatpush1.msra.mxu0 0.0
    %658 = vmatprep.subr.mxu0 0.0
    %659 = vmatpush1.msra.mxu0 0.0
    %660 = vmatprep.mubr.f32.mxu0 0.0
    %661 = vmatmul.mubr.f32.gmra.mrb[0].mxu0 %v594
    %v662 = vpop.f32.mrb[0].mxu0
    %v663 = vadd.f32 0.0, %v662
    %v664 = vpop.f32.mrb[0].mxu0
    %665 = vdwg.mxu0
    %667 = vrot.lane.b32.xlu0 %v663, 64
    %v668 = vpop.permute.xlu0 %667
    %v670 = vadd.f32 %v491, %v668
    %v671 = vxor.u32 %v593, 2147483648
    %v672 = vmul.f32 %v671, 1.442695
    %v673 = vpow.pop %v672
    %v674 = vadd.f32 %v673, 1.0
    %v675 = vrcp.pop %v674
    %v676 = vmul.f32 1.0, %v675
    %v677 = vtanh.pop %v593
    %678 = vrot.lane.b32.xlu0 %v507, 16
    %v679 = vpop.permute.xlu0 %678
    %v681 = vmul.f32 %v676, %v679
    %683 = vrot.lane.b32.xlu0 %v677, 80
    %v684 = vpop.permute.xlu0 %683
    %v686 = vmul.f32 %v676, %v684
    %688 = vrot.lane.b32.xlu0 %v686, 16
    %v689 = vpop.permute.xlu0 %688
    %v691 = vadd.f32 %v681, %v689
    %v692 = vtanh.pop %v691
    %694 = vrot.lane.b32.xlu0 %v692, 16
    %v695 = vpop.permute.xlu0 %694
    %v697 = vmul.f32 %v676, %v695
    %v698 = vxor.u32 %v670, 2147483648
    %v699 = vmul.f32 %v698, 1.442695
    %v700 = vpow.pop %v699
    %v701 = vadd.f32 %v700, 1.0
    %v702 = vrcp.pop %v701
    %v703 = vmul.f32 1.0, %v702
    %v704 = vtanh.pop %v670
    %705 = vrot.lane.b32.xlu0 %v519, 80
    %v706 = vpop.permute.xlu0 %705
    %v708 = vmul.f32 %v703, %v706
    %710 = vrot.lane.b32.xlu0 %v704, 80
    %v711 = vpop.permute.xlu0 %710
    %v713 = vmul.f32 %v703, %v711
    %715 = vrot.lane.b32.xlu0 %v713, 16
    %v716 = vpop.permute.xlu0 %715
    %v718 = vadd.f32 %v708, %v716
    %v719 = vtanh.pop %v718
    %721 = vrot.lane.b32.xlu0 %v719, 16
    %v722 = vpop.permute.xlu0 %721
    %v724 = vmul.f32 %v703, %v722
    %vm725 = vcmp.gt.s32.totalorder %v201, 0
    %vm726 = vcmp.gt.s32.totalorder %v201, 7
    %v727 = vsel %vm725, 1, 0
    %728 = vset.pattern.permute.xlu0 0
    %729 = vperm.xlu0 %728, %v727
    %v730 = vpop.permute.xlu0 %729
    %vm731 = vcmp.eq.s32.totalorder %v730, 1
    %732 = vrot.lane.b32.xlu0 %v501, 32
    %v733 = vpop.permute.xlu0 %732
    %v735 = vsel %vm731, %v697, %v733
    %v736 = vsel %vm731, %v691, %v679
    %v737 = vsel %vm726, 1, 0
    %738 = vset.pattern.permute.xlu0 0
    %739 = vperm.xlu0 %738, %v737
    %v740 = vpop.permute.xlu0 %739
    %vm741 = vcmp.eq.s32.totalorder %v740, 1
    %742 = vrot.lane.b32.xlu0 %v513, 96
    %v743 = vpop.permute.xlu0 %742
    %v745 = vsel %vm741, %v724, %v743
    %v746 = vsel %vm741, %v718, %v706
    %v747 = vsel %vm731, %v697, 0.0
    %749 = vrot.lane.b32.xlu0 %v747, 96
    %v750 = vpop.permute.xlu0 %749
    %752 = vst.msk [vmem:[#allocation2] sm:$0xff] %vm520, %v750
    %v753 = vsel %vm741, %v724, 0.0
    %755 = vrot.lane.b32.xlu0 %v753, 32
    %v756 = vpop.permute.xlu0 %755
    %s758 = scalar_lea.vmem [#allocation3], 56
    %759 = vst.msk [vmem:[%s758] sm:$0xff] %vm520, %v756
    %761 = vrot.lane.b32.xlu0 %v735, 96
    %v762 = vpop.permute.xlu0 %761
    %v763 = vsel %vm520, %v762, 0
    %765 = vmatprep.subr.mxu0 0.0
    %766 = vmatpush1.msra.mxu0 %v492
    %767 = vmatprep.subr.mxu0 0.0
    %768 = vmatpush1.msra.mxu0 %v493
    %769 = vmatprep.subr.mxu0 0.0
    %770 = vmatpush1.msra.mxu0 0.0
    %771 = vmatprep.subr.mxu0 0.0
    %772 = vmatpush1.msra.mxu0 0.0
    %773 = vmatprep.subr.mxu0 0.0
    %774 = vmatpush1.msra.mxu0 0.0
    %775 = vmatprep.subr.mxu0 0.0
    %776 = vmatpush1.msra.mxu0 0.0
    %777 = vmatprep.subr.mxu0 0.0
    %778 = vmatpush1.msra.mxu0 0.0
    %779 = vmatprep.subr.mxu0 0.0
    %780 = vmatpush1.msra.mxu0 0.0
    %781 = vmatprep.subr.mxu0 0.0
    %782 = vmatpush1.msra.mxu0 0.0
    %783 = vmatprep.subr.mxu0 0.0
    %784 = vmatpush1.msra.mxu0 0.0
    %785 = vmatprep.subr.mxu0 0.0
    %786 = vmatpush1.msra.mxu0 0.0
    %787 = vmatprep.subr.mxu0 0.0
    %788 = vmatpush1.msra.mxu0 0.0
    %789 = vmatprep.subr.mxu0 0.0
    %790 = vmatpush1.msra.mxu0 0.0
    %791 = vmatprep.subr.mxu0 0.0
    %792 = vmatpush1.msra.mxu0 0.0
    %793 = vmatprep.subr.mxu0 0.0
    %794 = vmatpush1.msra.mxu0 0.0
    %795 = vmatprep.subr.mxu0 0.0
    %796 = vmatpush1.msra.mxu0 0.0
    %797 = vmatprep.subr.mxu0 0.0
    %798 = vmatpush1.msra.mxu0 0.0
    %799 = vmatprep.subr.mxu0 0.0
    %800 = vmatpush1.msra.mxu0 0.0
    %801 = vmatprep.subr.mxu0 0.0
    %802 = vmatpush1.msra.mxu0 0.0
    %803 = vmatprep.subr.mxu0 0.0
    %804 = vmatpush1.msra.mxu0 0.0
    %805 = vmatprep.subr.mxu0 0.0
    %806 = vmatpush1.msra.mxu0 0.0
    %807 = vmatprep.subr.mxu0 0.0
    %808 = vmatpush1.msra.mxu0 0.0
    %809 = vmatprep.subr.mxu0 0.0
    %810 = vmatpush1.msra.mxu0 0.0
    %811 = vmatprep.subr.mxu0 0.0
    %812 = vmatpush1.msra.mxu0 0.0
    %813 = vmatprep.subr.mxu0 0.0
    %814 = vmatpush1.msra.mxu0 0.0
    %815 = vmatprep.subr.mxu0 0.0
    %816 = vmatpush1.msra.mxu0 0.0
    %817 = vmatprep.subr.mxu0 0.0
    %818 = vmatpush1.msra.mxu0 0.0
    %819 = vmatprep.subr.mxu0 0.0
    %820 = vmatpush1.msra.mxu0 0.0
    %821 = vmatprep.subr.mxu0 0.0
    %822 = vmatpush1.msra.mxu0 0.0
    %823 = vmatprep.subr.mxu0 0.0
    %824 = vmatpush1.msra.mxu0 0.0
    %825 = vmatprep.subr.mxu0 0.0
    %826 = vmatpush1.msra.mxu0 0.0
    %827 = vmatprep.subr.mxu0 0.0
    %828 = vmatpush1.msra.mxu0 0.0
    %829 = vmatprep.mubr.f32.mxu0 0.0
    %830 = vmatmul.mubr.f32.gmra.mrb[0].mxu0 %v763
    %v831 = vpop.f32.mrb[0].mxu0
    %v832 = vadd.f32 0.0, %v831
    %v833 = vpop.f32.mrb[0].mxu0
    %834 = vdwg.mxu0
    %v835 = vadd.f32 %v468, %v832
    %837 = vrot.lane.b32.xlu0 %v745, 32
    %v838 = vpop.permute.xlu0 %837
    %v839 = vsel %vm520, %v838, 0
    %841 = vmatprep.subr.mxu0 0.0
    %842 = vmatpush1.msra.mxu0 %v494
    %843 = vmatprep.subr.mxu0 0.0
    %844 = vmatpush1.msra.mxu0 %v495
    %845 = vmatprep.subr.mxu0 0.0
    %846 = vmatpush1.msra.mxu0 0.0
    %847 = vmatprep.subr.mxu0 0.0
    %848 = vmatpush1.msra.mxu0 0.0
    %849 = vmatprep.subr.mxu0 0.0
    %850 = vmatpush1.msra.mxu0 0.0
    %851 = vmatprep.subr.mxu0 0.0
    %852 = vmatpush1.msra.mxu0 0.0
    %853 = vmatprep.subr.mxu0 0.0
    %854 = vmatpush1.msra.mxu0 0.0
    %855 = vmatprep.subr.mxu0 0.0
    %856 = vmatpush1.msra.mxu0 0.0
    %857 = vmatprep.subr.mxu0 0.0
    %858 = vmatpush1.msra.mxu0 0.0
    %859 = vmatprep.subr.mxu0 0.0
    %860 = vmatpush1.msra.mxu0 0.0
    %861 = vmatprep.subr.mxu0 0.0
    %862 = vmatpush1.msra.mxu0 0.0
    %863 = vmatprep.subr.mxu0 0.0
    %864 = vmatpush1.msra.mxu0 0.0
    %865 = vmatprep.subr.mxu0 0.0
    %866 = vmatpush1.msra.mxu0 0.0
    %867 = vmatprep.subr.mxu0 0.0
    %868 = vmatpush1.msra.mxu0 0.0
    %869 = vmatprep.subr.mxu0 0.0
    %870 = vmatpush1.msra.mxu0 0.0
    %871 = vmatprep.subr.mxu0 0.0
    %872 = vmatpush1.msra.mxu0 0.0
    %873 = vmatprep.subr.mxu0 0.0
    %874 = vmatpush1.msra.mxu0 0.0
    %875 = vmatprep.subr.mxu0 0.0
    %876 = vmatpush1.msra.mxu0 0.0
    %877 = vmatprep.subr.mxu0 0.0
    %878 = vmatpush1.msra.mxu0 0.0
    %879 = vmatprep.subr.mxu0 0.0
    %880 = vmatpush1.msra.mxu0 0.0
    %881 = vmatprep.subr.mxu0 0.0
    %882 = vmatpush1.msra.mxu0 0.0
    %883 = vmatprep.subr.mxu0 0.0
    %884 = vmatpush1.msra.mxu0 0.0
    %885 = vmatprep.subr.mxu0 0.0
    %886 = vmatpush1.msra.mxu0 0.0
    %887 = vmatprep.subr.mxu0 0.0
    %888 = vmatpush1.msra.mxu0 0.0
    %889 = vmatprep.subr.mxu0 0.0
    %890 = vmatpush1.msra.mxu0 0.0
    %891 = vmatprep.subr.mxu0 0.0
    %892 = vmatpush1.msra.mxu0 0.0
    %893 = vmatprep.subr.mxu0 0.0
    %894 = vmatpush1.msra.mxu0 0.0
    %895 = vmatprep.subr.mxu0 0.0
    %896 = vmatpush1.msra.mxu0 0.0
    %897 = vmatprep.subr.mxu0 0.0
    %898 = vmatpush1.msra.mxu0 0.0
    %899 = vmatprep.subr.mxu0 0.0
    %900 = vmatpush1.msra.mxu0 0.0
    %901 = vmatprep.subr.mxu0 0.0
    %902 = vmatpush1.msra.mxu0 0.0
    %903 = vmatprep.subr.mxu0 0.0
    %904 = vmatpush1.msra.mxu0 0.0
    %905 = vmatprep.mubr.f32.mxu0 0.0
    %906 = vmatmul.mubr.f32.gmra.mrb[0].mxu0 %v839
    %v907 = vpop.f32.mrb[0].mxu0
    %v908 = vadd.f32 0.0, %v907
    %v909 = vpop.f32.mrb[0].mxu0
    %910 = vdwg.mxu0
    %912 = vrot.lane.b32.xlu0 %v908, 64
    %v913 = vpop.permute.xlu0 %912
    %v915 = vadd.f32 %v490, %v913
    %v916 = vxor.u32 %v835, 2147483648
    %v917 = vmul.f32 %v916, 1.442695
    %v918 = vpow.pop %v917
    %v919 = vadd.f32 %v918, 1.0
    %v920 = vrcp.pop %v919
    %v921 = vmul.f32 1.0, %v920
    %v922 = vtanh.pop %v835
    %v923 = vmul.f32 %v921, %v736
    %925 = vrot.lane.b32.xlu0 %v922, 80
    %v926 = vpop.permute.xlu0 %925
    %v928 = vmul.f32 %v921, %v926
    %930 = vrot.lane.b32.xlu0 %v928, 16
    %v931 = vpop.permute.xlu0 %930
    %v933 = vadd.f32 %v923, %v931
    %v934 = vtanh.pop %v933
    %936 = vrot.lane.b32.xlu0 %v934, 16
    %v937 = vpop.permute.xlu0 %936
    %v939 = vmul.f32 %v921, %v937
    %v940 = vxor.u32 %v915, 2147483648
    %v941 = vmul.f32 %v940, 1.442695
    %v942 = vpow.pop %v941
    %v943 = vadd.f32 %v942, 1.0
    %v944 = vrcp.pop %v943
    %v945 = vmul.f32 1.0, %v944
    %v946 = vtanh.pop %v915
    %v947 = vmul.f32 %v945, %v746
    %949 = vrot.lane.b32.xlu0 %v946, 80
    %v950 = vpop.permute.xlu0 %949
    %v952 = vmul.f32 %v945, %v950
    %954 = vrot.lane.b32.xlu0 %v952, 16
    %v955 = vpop.permute.xlu0 %954
    %v957 = vadd.f32 %v947, %v955
    %v958 = vtanh.pop %v957
    %960 = vrot.lane.b32.xlu0 %v958, 16
    %v961 = vpop.permute.xlu0 %960
    %v963 = vmul.f32 %v945, %v961
    %vm964 = vcmp.gt.s32.totalorder %v201, 1
    %vm965 = vcmp.gt.s32.totalorder %v201, 6
    %v966 = vsel %vm964, 1, 0
    %967 = vset.pattern.permute.xlu0 0
    %968 = vperm.xlu0 %967, %v966
    %v969 = vpop.permute.xlu0 %968
    %vm970 = vcmp.eq.s32.totalorder %v969, 1
    %v971 = vsel %vm970, %v939, %v735
    %v972 = vsel %vm970, %v933, %v736
    %v973 = vsel %vm965, 1, 0
    %974 = vset.pattern.permute.xlu0 0
    %975 = vperm.xlu0 %974, %v973
    %v976 = vpop.permute.xlu0 %975
    %vm977 = vcmp.eq.s32.totalorder %v976, 1
    %v978 = vsel %vm977, %v963, %v745
    %v979 = vsel %vm977, %v957, %v746
    %v980 = vsel %vm970, %v939, 0.0
    %982 = vrot.lane.b32.xlu0 %v980, 96
    %v983 = vpop.permute.xlu0 %982
    %s985 = scalar_lea.vmem [#allocation2], 8
    %986 = vst.msk [vmem:[%s985] sm:$0xff] %vm520, %v983
    %v987 = vsel %vm977, %v963, 0.0
    %989 = vrot.lane.b32.xlu0 %v987, 32
    %v990 = vpop.permute.xlu0 %989
    %s992 = scalar_lea.vmem [#allocation3], 48
    %993 = vst.msk [vmem:[%s992] sm:$0xff] %vm520, %v990
    %995 = vrot.lane.b32.xlu0 %v971, 96
    %v996 = vpop.permute.xlu0 %995
    %v997 = vsel %vm520, %v996, 0
    %999 = vmatprep.subr.mxu0 0.0
    %1000 = vmatpush1.msra.mxu0 %v492
    %1001 = vmatprep.subr.mxu0 0.0
    %1002 = vmatpush1.msra.mxu0 %v493
    %1003 = vmatprep.subr.mxu0 0.0
    %1004 = vmatpush1.msra.mxu0 0.0
    %1005 = vmatprep.subr.mxu0 0.0
    %1006 = vmatpush1.msra.mxu0 0.0
    %1007 = vmatprep.subr.mxu0 0.0
    %1008 = vmatpush1.msra.mxu0 0.0
    %1009 = vmatprep.subr.mxu0 0.0
    %1010 = vmatpush1.msra.mxu0 0.0
    %1011 = vmatprep.subr.mxu0 0.0
    %1012 = vmatpush1.msra.mxu0 0.0
    %1013 = vmatprep.subr.mxu0 0.0
    %1014 = vmatpush1.msra.mxu0 0.0
    %1015 = vmatprep.subr.mxu0 0.0
    %1016 = vmatpush1.msra.mxu0 0.0
    %1017 = vmatprep.subr.mxu0 0.0
    %1018 = vmatpush1.msra.mxu0 0.0
    %1019 = vmatprep.subr.mxu0 0.0
    %1020 = vmatpush1.msra.mxu0 0.0
    %1021 = vmatprep.subr.mxu0 0.0
    %1022 = vmatpush1.msra.mxu0 0.0
    %1023 = vmatprep.subr.mxu0 0.0
    %1024 = vmatpush1.msra.mxu0 0.0
    %1025 = vmatprep.subr.mxu0 0.0
    %1026 = vmatpush1.msra.mxu0 0.0
    %1027 = vmatprep.subr.mxu0 0.0
    %1028 = vmatpush1.msra.mxu0 0.0
    %1029 = vmatprep.subr.mxu0 0.0
    %1030 = vmatpush1.msra.mxu0 0.0
    %1031 = vmatprep.subr.mxu0 0.0
    %1032 = vmatpush1.msra.mxu0 0.0
    %1033 = vmatprep.subr.mxu0 0.0
    %1034 = vmatpush1.msra.mxu0 0.0
    %1035 = vmatprep.subr.mxu0 0.0
    %1036 = vmatpush1.msra.mxu0 0.0
    %1037 = vmatprep.subr.mxu0 0.0
    %1038 = vmatpush1.msra.mxu0 0.0
    %1039 = vmatprep.subr.mxu0 0.0
    %1040 = vmatpush1.msra.mxu0 0.0
    %1041 = vmatprep.subr.mxu0 0.0
    %1042 = vmatpush1.msra.mxu0 0.0
    %1043 = vmatprep.subr.mxu0 0.0
    %1044 = vmatpush1.msra.mxu0 0.0
    %1045 = vmatprep.subr.mxu0 0.0
    %1046 = vmatpush1.msra.mxu0 0.0
    %1047 = vmatprep.subr.mxu0 0.0
    %1048 = vmatpush1.msra.mxu0 0.0
    %1049 = vmatprep.subr.mxu0 0.0
    %1050 = vmatpush1.msra.mxu0 0.0
    %1051 = vmatprep.subr.mxu0 0.0
    %1052 = vmatpush1.msra.mxu0 0.0
    %1053 = vmatprep.subr.mxu0 0.0
    %1054 = vmatpush1.msra.mxu0 0.0
    %1055 = vmatprep.subr.mxu0 0.0
    %1056 = vmatpush1.msra.mxu0 0.0
    %1057 = vmatprep.subr.mxu0 0.0
    %1058 = vmatpush1.msra.mxu0 0.0
    %1059 = vmatprep.subr.mxu0 0.0
    %1060 = vmatpush1.msra.mxu0 0.0
    %1061 = vmatprep.subr.mxu0 0.0
    %1062 = vmatpush1.msra.mxu0 0.0
    %1063 = vmatprep.mubr.f32.mxu0 0.0
    %1064 = vmatmul.mubr.f32.gmra.mrb[0].mxu0 %v997
    %v1065 = vpop.f32.mrb[0].mxu0
    %v1066 = vadd.f32 0.0, %v1065
    %v1067 = vpop.f32.mrb[0].mxu0
    %1068 = vdwg.mxu0
    %v1069 = vadd.f32 %v469, %v1066
    %1071 = vrot.lane.b32.xlu0 %v978, 32
    %v1072 = vpop.permute.xlu0 %1071
    %v1073 = vsel %vm520, %v1072, 0
    %1075 = vmatprep.subr.mxu0 0.0
    %1076 = vmatpush1.msra.mxu0 %v494
    %1077 = vmatprep.subr.mxu0 0.0
    %1078 = vmatpush1.msra.mxu0 %v495
    %1079 = vmatprep.subr.mxu0 0.0
    %1080 = vmatpush1.msra.mxu0 0.0
    %1081 = vmatprep.subr.mxu0 0.0
    %1082 = vmatpush1.msra.mxu0 0.0
    %1083 = vmatprep.subr.mxu0 0.0
    %1084 = vmatpush1.msra.mxu0 0.0
    %1085 = vmatprep.subr.mxu0 0.0
    %1086 = vmatpush1.msra.mxu0 0.0
    %1087 = vmatprep.subr.mxu0 0.0
    %1088 = vmatpush1.msra.mxu0 0.0
    %1089 = vmatprep.subr.mxu0 0.0
    %1090 = vmatpush1.msra.mxu0 0.0
    %1091 = vmatprep.subr.mxu0 0.0
    %1092 = vmatpush1.msra.mxu0 0.0
    %1093 = vmatprep.subr.mxu0 0.0
    %1094 = vmatpush1.msra.mxu0 0.0
    %1095 = vmatprep.subr.mxu0 0.0
    %1096 = vmatpush1.msra.mxu0 0.0
    %1097 = vmatprep.subr.mxu0 0.0
    %1098 = vmatpush1.msra.mxu0 0.0
    %1099 = vmatprep.subr.mxu0 0.0
    %1100 = vmatpush1.msra.mxu0 0.0
    %1101 = vmatprep.subr.mxu0 0.0
    %1102 = vmatpush1.msra.mxu0 0.0
    %1103 = vmatprep.subr.mxu0 0.0
    %1104 = vmatpush1.msra.mxu0 0.0
    %1105 = vmatprep.subr.mxu0 0.0
    %1106 = vmatpush1.msra.mxu0 0.0
    %1107 = vmatprep.subr.mxu0 0.0
    %1108 = vmatpush1.msra.mxu0 0.0
    %1109 = vmatprep.subr.mxu0 0.0
    %1110 = vmatpush1.msra.mxu0 0.0
    %1111 = vmatprep.subr.mxu0 0.0
    %1112 = vmatpush1.msra.mxu0 0.0
    %1113 = vmatprep.subr.mxu0 0.0
    %1114 = vmatpush1.msra.mxu0 0.0
    %1115 = vmatprep.subr.mxu0 0.0
    %1116 = vmatpush1.msra.mxu0 0.0
    %1117 = vmatprep.subr.mxu0 0.0
    %1118 = vmatpush1.msra.mxu0 0.0
    %1119 = vmatprep.subr.mxu0 0.0
    %1120 = vmatpush1.msra.mxu0 0.0
    %1121 = vmatprep.subr.mxu0 0.0
    %1122 = vmatpush1.msra.mxu0 0.0
    %1123 = vmatprep.subr.mxu0 0.0
    %1124 = vmatpush1.msra.mxu0 0.0
    %1125 = vmatprep.subr.mxu0 0.0
    %1126 = vmatpush1.msra.mxu0 0.0
    %1127 = vmatprep.subr.mxu0 0.0
    %1128 = vmatpush1.msra.mxu0 0.0
    %1129 = vmatprep.subr.mxu0 0.0
    %1130 = vmatpush1.msra.mxu0 0.0
    %1131 = vmatprep.subr.mxu0 0.0
    %1132 = vmatpush1.msra.mxu0 0.0
    %1133 = vmatprep.subr.mxu0 0.0
    %1134 = vmatpush1.msra.mxu0 0.0
    %1135 = vmatprep.subr.mxu0 0.0
    %1136 = vmatpush1.msra.mxu0 0.0
    %1137 = vmatprep.subr.mxu0 0.0
    %1138 = vmatpush1.msra.mxu0 0.0
    %1139 = vmatprep.mubr.f32.mxu0 0.0
    %1140 = vmatmul.mubr.f32.gmra.mrb[0].mxu0 %v1073
    %v1141 = vpop.f32.mrb[0].mxu0
    %v1142 = vadd.f32 0.0, %v1141
    %v1143 = vpop.f32.mrb[0].mxu0
    %1144 = vdwg.mxu0
    %1146 = vrot.lane.b32.xlu0 %v1142, 64
    %v1147 = vpop.permute.xlu0 %1146
    %v1149 = vadd.f32 %v489, %v1147
    %v1150 = vxor.u32 %v1069, 2147483648
    %v1151 = vmul.f32 %v1150, 1.442695
    %v1152 = vpow.pop %v1151
    %v1153 = vadd.f32 %v1152, 1.0
    %v1154 = vrcp.pop %v1153
    %v1155 = vmul.f32 1.0, %v1154
    %v1156 = vtanh.pop %v1069
    %v1157 = vmul.f32 %v1155, %v972
    %1159 = vrot.lane.b32.xlu0 %v1156, 80
    %v1160 = vpop.permute.xlu0 %1159
    %v1162 = vmul.f32 %v1155, %v1160
    %1164 = vrot.lane.b32.xlu0 %v1162, 16
    %v1165 = vpop.permute.xlu0 %1164
    %v1167 = vadd.f32 %v1157, %v1165
    %v1168 = vtanh.pop %v1167
    %1170 = vrot.lane.b32.xlu0 %v1168, 16
    %v1171 = vpop.permute.xlu0 %1170
    %v1173 = vmul.f32 %v1155, %v1171
    %v1174 = vxor.u32 %v1149, 2147483648
    %v1175 = vmul.f32 %v1174, 1.442695
    %v1176 = vpow.pop %v1175
    %v1177 = vadd.f32 %v1176, 1.0
    %v1178 = vrcp.pop %v1177
    %v1179 = vmul.f32 1.0, %v1178
    %v1180 = vtanh.pop %v1149
    %v1181 = vmul.f32 %v1179, %v979
    %1183 = vrot.lane.b32.xlu0 %v1180, 80
    %v1184 = vpop.permute.xlu0 %1183
    %v1186 = vmul.f32 %v1179, %v1184
    %1188 = vrot.lane.b32.xlu0 %v1186, 16
    %v1189 = vpop.permute.xlu0 %1188
    %v1191 = vadd.f32 %v1181, %v1189
    %v1192 = vtanh.pop %v1191
    %1194 = vrot.lane.b32.xlu0 %v1192, 16
    %v1195 = vpop.permute.xlu0 %1194
    %v1197 = vmul.f32 %v1179, %v1195
    %vm1198 = vcmp.gt.s32.totalorder %v201, 2
    %vm1199 = vcmp.gt.s32.totalorder %v201, 5
    %v1200 = vsel %vm1198, 1, 0
    %1201 = vset.pattern.permute.xlu0 0
    %1202 = vperm.xlu0 %1201, %v1200
    %v1203 = vpop.permute.xlu0 %1202
    %vm1204 = vcmp.eq.s32.totalorder %v1203, 1
    %v1205 = vsel %vm1204, %v1173, %v971
    %v1206 = vsel %vm1204, %v1167, %v972
    %v1207 = vsel %vm1199, 1, 0
    %1208 = vset.pattern.permute.xlu0 0
    %1209 = vperm.xlu0 %1208, %v1207
    %v1210 = vpop.permute.xlu0 %1209
    %vm1211 = vcmp.eq.s32.totalorder %v1210, 1
    %v1212 = vsel %vm1211, %v1197, %v978
    %v1213 = vsel %vm1211, %v1191, %v979
    %v1214 = vsel %vm1204, %v1173, 0.0
    %1216 = vrot.lane.b32.xlu0 %v1214, 96
    %v1217 = vpop.permute.xlu0 %1216
    %s1219 = scalar_lea.vmem [#allocation2], 16
    %1220 = vst.msk [vmem:[%s1219] sm:$0xff] %vm520, %v1217
    %v1221 = vsel %vm1211, %v1197, 0.0
    %1223 = vrot.lane.b32.xlu0 %v1221, 32
    %v1224 = vpop.permute.xlu0 %1223
    %s1226 = scalar_lea.vmem [#allocation3], 40
    %1227 = vst.msk [vmem:[%s1226] sm:$0xff] %vm520, %v1224
    %1229 = vrot.lane.b32.xlu0 %v1205, 96
    %v1230 = vpop.permute.xlu0 %1229
    %v1231 = vsel %vm520, %v1230, 0
    %1233 = vmatprep.subr.mxu0 0.0
    %1234 = vmatpush1.msra.mxu0 %v492
    %1235 = vmatprep.subr.mxu0 0.0
    %1236 = vmatpush1.msra.mxu0 %v493
    %1237 = vmatprep.subr.mxu0 0.0
    %1238 = vmatpush1.msra.mxu0 0.0
    %1239 = vmatprep.subr.mxu0 0.0
    %1240 = vmatpush1.msra.mxu0 0.0
    %1241 = vmatprep.subr.mxu0 0.0
    %1242 = vmatpush1.msra.mxu0 0.0
    %1243 = vmatprep.subr.mxu0 0.0
    %1244 = vmatpush1.msra.mxu0 0.0
    %1245 = vmatprep.subr.mxu0 0.0
    %1246 = vmatpush1.msra.mxu0 0.0
    %1247 = vmatprep.subr.mxu0 0.0
    %1248 = vmatpush1.msra.mxu0 0.0
    %1249 = vmatprep.subr.mxu0 0.0
    %1250 = vmatpush1.msra.mxu0 0.0
    %1251 = vmatprep.subr.mxu0 0.0
    %1252 = vmatpush1.msra.mxu0 0.0
    %1253 = vmatprep.subr.mxu0 0.0
    %1254 = vmatpush1.msra.mxu0 0.0
    %1255 = vmatprep.subr.mxu0 0.0
    %1256 = vmatpush1.msra.mxu0 0.0
    %1257 = vmatprep.subr.mxu0 0.0
    %1258 = vmatpush1.msra.mxu0 0.0
    %1259 = vmatprep.subr.mxu0 0.0
    %1260 = vmatpush1.msra.mxu0 0.0
    %1261 = vmatprep.subr.mxu0 0.0
    %1262 = vmatpush1.msra.mxu0 0.0
    %1263 = vmatprep.subr.mxu0 0.0
    %1264 = vmatpush1.msra.mxu0 0.0
    %1265 = vmatprep.subr.mxu0 0.0
    %1266 = vmatpush1.msra.mxu0 0.0
    %1267 = vmatprep.subr.mxu0 0.0
    %1268 = vmatpush1.msra.mxu0 0.0
    %1269 = vmatprep.subr.mxu0 0.0
    %1270 = vmatpush1.msra.mxu0 0.0
    %1271 = vmatprep.subr.mxu0 0.0
    %1272 = vmatpush1.msra.mxu0 0.0
    %1273 = vmatprep.subr.mxu0 0.0
    %1274 = vmatpush1.msra.mxu0 0.0
    %1275 = vmatprep.subr.mxu0 0.0
    %1276 = vmatpush1.msra.mxu0 0.0
    %1277 = vmatprep.subr.mxu0 0.0
    %1278 = vmatpush1.msra.mxu0 0.0
    %1279 = vmatprep.subr.mxu0 0.0
    %1280 = vmatpush1.msra.mxu0 0.0
    %1281 = vmatprep.subr.mxu0 0.0
    %1282 = vmatpush1.msra.mxu0 0.0
    %1283 = vmatprep.subr.mxu0 0.0
    %1284 = vmatpush1.msra.mxu0 0.0
    %1285 = vmatprep.subr.mxu0 0.0
    %1286 = vmatpush1.msra.mxu0 0.0
    %1287 = vmatprep.subr.mxu0 0.0
    %1288 = vmatpush1.msra.mxu0 0.0
    %1289 = vmatprep.subr.mxu0 0.0
    %1290 = vmatpush1.msra.mxu0 0.0
    %1291 = vmatprep.subr.mxu0 0.0
    %1292 = vmatpush1.msra.mxu0 0.0
    %1293 = vmatprep.subr.mxu0 0.0
    %1294 = vmatpush1.msra.mxu0 0.0
    %1295 = vmatprep.subr.mxu0 0.0
    %1296 = vmatpush1.msra.mxu0 0.0
    %1297 = vmatprep.mubr.f32.mxu0 0.0
    %1298 = vmatmul.mubr.f32.gmra.mrb[0].mxu0 %v1231
    %v1299 = vpop.f32.mrb[0].mxu0
    %v1300 = vadd.f32 0.0, %v1299
    %v1301 = vpop.f32.mrb[0].mxu0
    %1302 = vdwg.mxu0
    %v1303 = vadd.f32 %v470, %v1300
    %1305 = vrot.lane.b32.xlu0 %v1212, 32
    %v1306 = vpop.permute.xlu0 %1305
    %v1307 = vsel %vm520, %v1306, 0
    %1309 = vmatprep.subr.mxu0 0.0
    %1310 = vmatpush1.msra.mxu0 %v494
    %1311 = vmatprep.subr.mxu0 0.0
    %1312 = vmatpush1.msra.mxu0 %v495
    %1313 = vmatprep.subr.mxu0 0.0
    %1314 = vmatpush1.msra.mxu0 0.0
    %1315 = vmatprep.subr.mxu0 0.0
    %1316 = vmatpush1.msra.mxu0 0.0
    %1317 = vmatprep.subr.mxu0 0.0
    %1318 = vmatpush1.msra.mxu0 0.0
    %1319 = vmatprep.subr.mxu0 0.0
    %1320 = vmatpush1.msra.mxu0 0.0
    %1321 = vmatprep.subr.mxu0 0.0
    %1322 = vmatpush1.msra.mxu0 0.0
    %1323 = vmatprep.subr.mxu0 0.0
    %1324 = vmatpush1.msra.mxu0 0.0
    %1325 = vmatprep.subr.mxu0 0.0
    %1326 = vmatpush1.msra.mxu0 0.0
    %1327 = vmatprep.subr.mxu0 0.0
    %1328 = vmatpush1.msra.mxu0 0.0
    %1329 = vmatprep.subr.mxu0 0.0
    %1330 = vmatpush1.msra.mxu0 0.0
    %1331 = vmatprep.subr.mxu0 0.0
    %1332 = vmatpush1.msra.mxu0 0.0
    %1333 = vmatprep.subr.mxu0 0.0
    %1334 = vmatpush1.msra.mxu0 0.0
    %1335 = vmatprep.subr.mxu0 0.0
    %1336 = vmatpush1.msra.mxu0 0.0
    %1337 = vmatprep.subr.mxu0 0.0
    %1338 = vmatpush1.msra.mxu0 0.0
    %1339 = vmatprep.subr.mxu0 0.0
    %1340 = vmatpush1.msra.mxu0 0.0
    %1341 = vmatprep.subr.mxu0 0.0
    %1342 = vmatpush1.msra.mxu0 0.0
    %1343 = vmatprep.subr.mxu0 0.0
    %1344 = vmatpush1.msra.mxu0 0.0
    %1345 = vmatprep.subr.mxu0 0.0
    %1346 = vmatpush1.msra.mxu0 0.0
    %1347 = vmatprep.subr.mxu0 0.0
    %1348 = vmatpush1.msra.mxu0 0.0
    %1349 = vmatprep.subr.mxu0 0.0
    %1350 = vmatpush1.msra.mxu0 0.0
    %1351 = vmatprep.subr.mxu0 0.0
    %1352 = vmatpush1.msra.mxu0 0.0
    %1353 = vmatprep.subr.mxu0 0.0
    %1354 = vmatpush1.msra.mxu0 0.0
    %1355 = vmatprep.subr.mxu0 0.0
    %1356 = vmatpush1.msra.mxu0 0.0
    %1357 = vmatprep.subr.mxu0 0.0
    %1358 = vmatpush1.msra.mxu0 0.0
    %1359 = vmatprep.subr.mxu0 0.0
    %1360 = vmatpush1.msra.mxu0 0.0
    %1361 = vmatprep.subr.mxu0 0.0
    %1362 = vmatpush1.msra.mxu0 0.0
    %1363 = vmatprep.subr.mxu0 0.0
    %1364 = vmatpush1.msra.mxu0 0.0
    %1365 = vmatprep.subr.mxu0 0.0
    %1366 = vmatpush1.msra.mxu0 0.0
    %1367 = vmatprep.subr.mxu0 0.0
    %1368 = vmatpush1.msra.mxu0 0.0
    %1369 = vmatprep.subr.mxu0 0.0
    %1370 = vmatpush1.msra.mxu0 0.0
    %1371 = vmatprep.subr.mxu0 0.0
    %1372 = vmatpush1.msra.mxu0 0.0
    %1373 = vmatprep.mubr.f32.mxu0 0.0
    %1374 = vmatmul.mubr.f32.gmra.mrb[0].mxu0 %v1307
    %v1375 = vpop.f32.mrb[0].mxu0
    %v1376 = vadd.f32 0.0, %v1375
    %v1377 = vpop.f32.mrb[0].mxu0
    %1378 = vdwg.mxu0
    %1380 = vrot.lane.b32.xlu0 %v1376, 64
    %v1381 = vpop.permute.xlu0 %1380
    %v1383 = vadd.f32 %v488, %v1381
    %v1384 = vxor.u32 %v1303, 2147483648
    %v1385 = vmul.f32 %v1384, 1.442695
    %v1386 = vpow.pop %v1385
    %v1387 = vadd.f32 %v1386, 1.0
    %v1388 = vrcp.pop %v1387
    %v1389 = vmul.f32 1.0, %v1388
    %v1390 = vtanh.pop %v1303
    %v1391 = vmul.f32 %v1389, %v1206
    %1393 = vrot.lane.b32.xlu0 %v1390, 80
    %v1394 = vpop.permute.xlu0 %1393
    %v1396 = vmul.f32 %v1389, %v1394
    %1398 = vrot.lane.b32.xlu0 %v1396, 16
    %v1399 = vpop.permute.xlu0 %1398
    %v1401 = vadd.f32 %v1391, %v1399
    %v1402 = vtanh.pop %v1401
    %1404 = vrot.lane.b32.xlu0 %v1402, 16
    %v1405 = vpop.permute.xlu0 %1404
    %v1407 = vmul.f32 %v1389, %v1405
    %v1408 = vxor.u32 %v1383, 2147483648
    %v1409 = vmul.f32 %v1408, 1.442695
    %v1410 = vpow.pop %v1409
    %v1411 = vadd.f32 %v1410, 1.0
    %v1412 = vrcp.pop %v1411
    %v1413 = vmul.f32 1.0, %v1412
    %v1414 = vtanh.pop %v1383
    %v1415 = vmul.f32 %v1413, %v1213
    %1417 = vrot.lane.b32.xlu0 %v1414, 80
    %v1418 = vpop.permute.xlu0 %1417
    %v1420 = vmul.f32 %v1413, %v1418
    %1422 = vrot.lane.b32.xlu0 %v1420, 16
    %v1423 = vpop.permute.xlu0 %1422
    %v1425 = vadd.f32 %v1415, %v1423
    %v1426 = vtanh.pop %v1425
    %1428 = vrot.lane.b32.xlu0 %v1426, 16
    %v1429 = vpop.permute.xlu0 %1428
    %v1431 = vmul.f32 %v1413, %v1429
    %vm1432 = vcmp.gt.s32.totalorder %v201, 3
    %vm1433 = vcmp.gt.s32.totalorder %v201, 4
    %v1434 = vsel %vm1432, 1, 0
    %1435 = vset.pattern.permute.xlu0 0
    %1436 = vperm.xlu0 %1435, %v1434
    %v1437 = vpop.permute.xlu0 %1436
    %vm1438 = vcmp.eq.s32.totalorder %v1437, 1
    %v1439 = vsel %vm1438, %v1407, %v1205
    %v1440 = vsel %vm1438, %v1401, %v1206
    %v1441 = vsel %vm1433, 1, 0
    %1442 = vset.pattern.permute.xlu0 0
    %1443 = vperm.xlu0 %1442, %v1441
    %v1444 = vpop.permute.xlu0 %1443
    %vm1445 = vcmp.eq.s32.totalorder %v1444, 1
    %v1446 = vsel %vm1445, %v1431, %v1212
    %v1447 = vsel %vm1445, %v1425, %v1213
    %v1448 = vsel %vm1438, %v1407, 0.0
    %1450 = vrot.lane.b32.xlu0 %v1448, 96
    %v1451 = vpop.permute.xlu0 %1450
    %s1453 = scalar_lea.vmem [#allocation2], 24
    %1454 = vst.msk [vmem:[%s1453] sm:$0xff] %vm520, %v1451
    %v1455 = vsel %vm1445, %v1431, 0.0
    %1457 = vrot.lane.b32.xlu0 %v1455, 32
    %v1458 = vpop.permute.xlu0 %1457
    %s1460 = scalar_lea.vmem [#allocation3], 32
    %1461 = vst.msk [vmem:[%s1460] sm:$0xff] %vm520, %v1458
    %1463 = vrot.lane.b32.xlu0 %v1439, 96
    %v1464 = vpop.permute.xlu0 %1463
    %v1465 = vsel %vm520, %v1464, 0
    %1467 = vmatprep.subr.mxu0 0.0
    %1468 = vmatpush1.msra.mxu0 %v492
    %1469 = vmatprep.subr.mxu0 0.0
    %1470 = vmatpush1.msra.mxu0 %v493
    %1471 = vmatprep.subr.mxu0 0.0
    %1472 = vmatpush1.msra.mxu0 0.0
    %1473 = vmatprep.subr.mxu0 0.0
    %1474 = vmatpush1.msra.mxu0 0.0
    %1475 = vmatprep.subr.mxu0 0.0
    %1476 = vmatpush1.msra.mxu0 0.0
    %1477 = vmatprep.subr.mxu0 0.0
    %1478 = vmatpush1.msra.mxu0 0.0
    %1479 = vmatprep.subr.mxu0 0.0
    %1480 = vmatpush1.msra.mxu0 0.0
    %1481 = vmatprep.subr.mxu0 0.0
    %1482 = vmatpush1.msra.mxu0 0.0
    %1483 = vmatprep.subr.mxu0 0.0
    %1484 = vmatpush1.msra.mxu0 0.0
    %1485 = vmatprep.subr.mxu0 0.0
    %1486 = vmatpush1.msra.mxu0 0.0
    %1487 = vmatprep.subr.mxu0 0.0
    %1488 = vmatpush1.msra.mxu0 0.0
    %1489 = vmatprep.subr.mxu0 0.0
    %1490 = vmatpush1.msra.mxu0 0.0
    %1491 = vmatprep.subr.mxu0 0.0
    %1492 = vmatpush1.msra.mxu0 0.0
    %1493 = vmatprep.subr.mxu0 0.0
    %1494 = vmatpush1.msra.mxu0 0.0
    %1495 = vmatprep.subr.mxu0 0.0
    %1496 = vmatpush1.msra.mxu0 0.0
    %1497 = vmatprep.subr.mxu0 0.0
    %1498 = vmatpush1.msra.mxu0 0.0
    %1499 = vmatprep.subr.mxu0 0.0
    %1500 = vmatpush1.msra.mxu0 0.0
    %1501 = vmatprep.subr.mxu0 0.0
    %1502 = vmatpush1.msra.mxu0 0.0
    %1503 = vmatprep.subr.mxu0 0.0
    %1504 = vmatpush1.msra.mxu0 0.0
    %1505 = vmatprep.subr.mxu0 0.0
    %1506 = vmatpush1.msra.mxu0 0.0
    %1507 = vmatprep.subr.mxu0 0.0
    %1508 = vmatpush1.msra.mxu0 0.0
    %1509 = vmatprep.subr.mxu0 0.0
    %1510 = vmatpush1.msra.mxu0 0.0
    %1511 = vmatprep.subr.mxu0 0.0
    %1512 = vmatpush1.msra.mxu0 0.0
    %1513 = vmatprep.subr.mxu0 0.0
    %1514 = vmatpush1.msra.mxu0 0.0
    %1515 = vmatprep.subr.mxu0 0.0
    %1516 = vmatpush1.msra.mxu0 0.0
    %1517 = vmatprep.subr.mxu0 0.0
    %1518 = vmatpush1.msra.mxu0 0.0
    %1519 = vmatprep.subr.mxu0 0.0
    %1520 = vmatpush1.msra.mxu0 0.0
    %1521 = vmatprep.subr.mxu0 0.0
    %1522 = vmatpush1.msra.mxu0 0.0
    %1523 = vmatprep.subr.mxu0 0.0
    %1524 = vmatpush1.msra.mxu0 0.0
    %1525 = vmatprep.subr.mxu0 0.0
    %1526 = vmatpush1.msra.mxu0 0.0
    %1527 = vmatprep.subr.mxu0 0.0
    %1528 = vmatpush1.msra.mxu0 0.0
    %1529 = vmatprep.subr.mxu0 0.0
    %1530 = vmatpush1.msra.mxu0 0.0
    %1531 = vmatprep.mubr.f32.mxu0 0.0
    %1532 = vmatmul.mubr.f32.gmra.mrb[0].mxu0 %v1465
    %v1533 = vpop.f32.mrb[0].mxu0
    %v1534 = vadd.f32 0.0, %v1533
    %v1535 = vpop.f32.mrb[0].mxu0
    %1536 = vdwg.mxu0
    %v1537 = vadd.f32 %v471, %v1534
    %1539 = vrot.lane.b32.xlu0 %v1446, 32
    %v1540 = vpop.permute.xlu0 %1539
    %v1541 = vsel %vm520, %v1540, 0
    %1543 = vmatprep.subr.mxu0 0.0
    %1544 = vmatpush1.msra.mxu0 %v494
    %1545 = vmatprep.subr.mxu0 0.0
    %1546 = vmatpush1.msra.mxu0 %v495
    %1547 = vmatprep.subr.mxu0 0.0
    %1548 = vmatpush1.msra.mxu0 0.0
    %1549 = vmatprep.subr.mxu0 0.0
    %1550 = vmatpush1.msra.mxu0 0.0
    %1551 = vmatprep.subr.mxu0 0.0
    %1552 = vmatpush1.msra.mxu0 0.0
    %1553 = vmatprep.subr.mxu0 0.0
    %1554 = vmatpush1.msra.mxu0 0.0
    %1555 = vmatprep.subr.mxu0 0.0
    %1556 = vmatpush1.msra.mxu0 0.0
    %1557 = vmatprep.subr.mxu0 0.0
    %1558 = vmatpush1.msra.mxu0 0.0
    %1559 = vmatprep.subr.mxu0 0.0
    %1560 = vmatpush1.msra.mxu0 0.0
    %1561 = vmatprep.subr.mxu0 0.0
    %1562 = vmatpush1.msra.mxu0 0.0
    %1563 = vmatprep.subr.mxu0 0.0
    %1564 = vmatpush1.msra.mxu0 0.0
    %1565 = vmatprep.subr.mxu0 0.0
    %1566 = vmatpush1.msra.mxu0 0.0
    %1567 = vmatprep.subr.mxu0 0.0
    %1568 = vmatpush1.msra.mxu0 0.0
    %1569 = vmatprep.subr.mxu0 0.0
    %1570 = vmatpush1.msra.mxu0 0.0
    %1571 = vmatprep.subr.mxu0 0.0
    %1572 = vmatpush1.msra.mxu0 0.0
    %1573 = vmatprep.subr.mxu0 0.0
    %1574 = vmatpush1.msra.mxu0 0.0
    %1575 = vmatprep.subr.mxu0 0.0
    %1576 = vmatpush1.msra.mxu0 0.0
    %1577 = vmatprep.subr.mxu0 0.0
    %1578 = vmatpush1.msra.mxu0 0.0
    %1579 = vmatprep.subr.mxu0 0.0
    %1580 = vmatpush1.msra.mxu0 0.0
    %1581 = vmatprep.subr.mxu0 0.0
    %1582 = vmatpush1.msra.mxu0 0.0
    %1583 = vmatprep.subr.mxu0 0.0
    %1584 = vmatpush1.msra.mxu0 0.0
    %1585 = vmatprep.subr.mxu0 0.0
    %1586 = vmatpush1.msra.mxu0 0.0
    %1587 = vmatprep.subr.mxu0 0.0
    %1588 = vmatpush1.msra.mxu0 0.0
    %1589 = vmatprep.subr.mxu0 0.0
    %1590 = vmatpush1.msra.mxu0 0.0
    %1591 = vmatprep.subr.mxu0 0.0
    %1592 = vmatpush1.msra.mxu0 0.0
    %1593 = vmatprep.subr.mxu0 0.0
    %1594 = vmatpush1.msra.mxu0 0.0
    %1595 = vmatprep.subr.mxu0 0.0
    %1596 = vmatpush1.msra.mxu0 0.0
    %1597 = vmatprep.subr.mxu0 0.0
    %1598 = vmatpush1.msra.mxu0 0.0
    %1599 = vmatprep.subr.mxu0 0.0
    %1600 = vmatpush1.msra.mxu0 0.0
    %1601 = vmatprep.subr.mxu0 0.0
    %1602 = vmatpush1.msra.mxu0 0.0
    %1603 = vmatprep.subr.mxu0 0.0
    %1604 = vmatpush1.msra.mxu0 0.0
    %1605 = vmatprep.subr.mxu0 0.0
    %1606 = vmatpush1.msra.mxu0 0.0
    %1607 = vmatprep.mubr.f32.mxu0 0.0
    %1608 = vmatmul.mubr.f32.gmra.mrb[0].mxu0 %v1541
    %v1609 = vpop.f32.mrb[0].mxu0
    %v1610 = vadd.f32 0.0, %v1609
    %v1611 = vpop.f32.mrb[0].mxu0
    %1612 = vdwg.mxu0
    %1614 = vrot.lane.b32.xlu0 %v1610, 64
    %v1615 = vpop.permute.xlu0 %1614
    %v1617 = vadd.f32 %v487, %v1615
    %v1618 = vxor.u32 %v1537, 2147483648
    %v1619 = vmul.f32 %v1618, 1.442695
    %v1620 = vpow.pop %v1619
    %v1621 = vadd.f32 %v1620, 1.0
    %v1622 = vrcp.pop %v1621
    %v1623 = vmul.f32 1.0, %v1622
    %v1624 = vtanh.pop %v1537
    %v1625 = vmul.f32 %v1623, %v1440
    %1627 = vrot.lane.b32.xlu0 %v1624, 80
    %v1628 = vpop.permute.xlu0 %1627
    %v1630 = vmul.f32 %v1623, %v1628
    %1632 = vrot.lane.b32.xlu0 %v1630, 16
    %v1633 = vpop.permute.xlu0 %1632
    %v1635 = vadd.f32 %v1625, %v1633
    %v1636 = vtanh.pop %v1635
    %1638 = vrot.lane.b32.xlu0 %v1636, 16
    %v1639 = vpop.permute.xlu0 %1638
    %v1641 = vmul.f32 %v1623, %v1639
    %v1642 = vxor.u32 %v1617, 2147483648
    %v1643 = vmul.f32 %v1642, 1.442695
    %v1644 = vpow.pop %v1643
    %v1645 = vadd.f32 %v1644, 1.0
    %v1646 = vrcp.pop %v1645
    %v1647 = vmul.f32 1.0, %v1646
    %v1648 = vtanh.pop %v1617
    %v1649 = vmul.f32 %v1647, %v1447
    %1651 = vrot.lane.b32.xlu0 %v1648, 80
    %v1652 = vpop.permute.xlu0 %1651
    %v1654 = vmul.f32 %v1647, %v1652
    %1656 = vrot.lane.b32.xlu0 %v1654, 16
    %v1657 = vpop.permute.xlu0 %1656
    %v1659 = vadd.f32 %v1649, %v1657
    %v1660 = vtanh.pop %v1659
    %1662 = vrot.lane.b32.xlu0 %v1660, 16
    %v1663 = vpop.permute.xlu0 %1662
    %v1665 = vmul.f32 %v1647, %v1663
    %v1666 = vsel %vm1445, %v1641, %v1439
    %v1667 = vsel %vm1445, %v1635, %v1440
    %v1668 = vsel %vm1438, %v1665, %v1446
    %v1669 = vsel %vm1438, %v1659, %v1447
    %v1670 = vsel %vm1445, %v1641, 0.0
    %1672 = vrot.lane.b32.xlu0 %v1670, 96
    %v1673 = vpop.permute.xlu0 %1672
    %s1675 = scalar_lea.vmem [#allocation2], 32
    %1676 = vst.msk [vmem:[%s1675] sm:$0xff] %vm520, %v1673
    %v1677 = vsel %vm1438, %v1665, 0.0
    %1679 = vrot.lane.b32.xlu0 %v1677, 32
    %v1680 = vpop.permute.xlu0 %1679
    %s1682 = scalar_lea.vmem [#allocation3], 24
    %1683 = vst.msk [vmem:[%s1682] sm:$0xff] %vm520, %v1680
    %1685 = vrot.lane.b32.xlu0 %v1666, 96
    %v1686 = vpop.permute.xlu0 %1685
    %v1687 = vsel %vm520, %v1686, 0
    %1689 = vmatprep.subr.mxu0 0.0
    %1690 = vmatpush1.msra.mxu0 %v492
    %1691 = vmatprep.subr.mxu0 0.0
    %1692 = vmatpush1.msra.mxu0 %v493
    %1693 = vmatprep.subr.mxu0 0.0
    %1694 = vmatpush1.msra.mxu0 0.0
    %1695 = vmatprep.subr.mxu0 0.0
    %1696 = vmatpush1.msra.mxu0 0.0
    %1697 = vmatprep.subr.mxu0 0.0
    %1698 = vmatpush1.msra.mxu0 0.0
    %1699 = vmatprep.subr.mxu0 0.0
    %1700 = vmatpush1.msra.mxu0 0.0
    %1701 = vmatprep.subr.mxu0 0.0
    %1702 = vmatpush1.msra.mxu0 0.0
    %1703 = vmatprep.subr.mxu0 0.0
    %1704 = vmatpush1.msra.mxu0 0.0
    %1705 = vmatprep.subr.mxu0 0.0
    %1706 = vmatpush1.msra.mxu0 0.0
    %1707 = vmatprep.subr.mxu0 0.0
    %1708 = vmatpush1.msra.mxu0 0.0
    %1709 = vmatprep.subr.mxu0 0.0
    %1710 = vmatpush1.msra.mxu0 0.0
    %1711 = vmatprep.subr.mxu0 0.0
    %1712 = vmatpush1.msra.mxu0 0.0
    %1713 = vmatprep.subr.mxu0 0.0
    %1714 = vmatpush1.msra.mxu0 0.0
    %1715 = vmatprep.subr.mxu0 0.0
    %1716 = vmatpush1.msra.mxu0 0.0
    %1717 = vmatprep.subr.mxu0 0.0
    %1718 = vmatpush1.msra.mxu0 0.0
    %1719 = vmatprep.subr.mxu0 0.0
    %1720 = vmatpush1.msra.mxu0 0.0
    %1721 = vmatprep.subr.mxu0 0.0
    %1722 = vmatpush1.msra.mxu0 0.0
    %1723 = vmatprep.subr.mxu0 0.0
    %1724 = vmatpush1.msra.mxu0 0.0
    %1725 = vmatprep.subr.mxu0 0.0
    %1726 = vmatpush1.msra.mxu0 0.0
    %1727 = vmatprep.subr.mxu0 0.0
    %1728 = vmatpush1.msra.mxu0 0.0
    %1729 = vmatprep.subr.mxu0 0.0
    %1730 = vmatpush1.msra.mxu0 0.0
    %1731 = vmatprep.subr.mxu0 0.0
    %1732 = vmatpush1.msra.mxu0 0.0
    %1733 = vmatprep.subr.mxu0 0.0
    %1734 = vmatpush1.msra.mxu0 0.0
    %1735 = vmatprep.subr.mxu0 0.0
    %1736 = vmatpush1.msra.mxu0 0.0
    %1737 = vmatprep.subr.mxu0 0.0
    %1738 = vmatpush1.msra.mxu0 0.0
    %1739 = vmatprep.subr.mxu0 0.0
    %1740 = vmatpush1.msra.mxu0 0.0
    %1741 = vmatprep.subr.mxu0 0.0
    %1742 = vmatpush1.msra.mxu0 0.0
    %1743 = vmatprep.subr.mxu0 0.0
    %1744 = vmatpush1.msra.mxu0 0.0
    %1745 = vmatprep.subr.mxu0 0.0
    %1746 = vmatpush1.msra.mxu0 0.0
    %1747 = vmatprep.subr.mxu0 0.0
    %1748 = vmatpush1.msra.mxu0 0.0
    %1749 = vmatprep.subr.mxu0 0.0
    %1750 = vmatpush1.msra.mxu0 0.0
    %1751 = vmatprep.subr.mxu0 0.0
    %1752 = vmatpush1.msra.mxu0 0.0
    %1753 = vmatprep.mubr.f32.mxu0 0.0
    %1754 = vmatmul.mubr.f32.gmra.mrb[0].mxu0 %v1687
    %v1755 = vpop.f32.mrb[0].mxu0
    %v1756 = vadd.f32 0.0, %v1755
    %v1757 = vpop.f32.mrb[0].mxu0
    %1758 = vdwg.mxu0
    %v1759 = vadd.f32 %v472, %v1756
    %1761 = vrot.lane.b32.xlu0 %v1668, 32
    %v1762 = vpop.permute.xlu0 %1761
    %v1763 = vsel %vm520, %v1762, 0
    %1765 = vmatprep.subr.mxu0 0.0
    %1766 = vmatpush1.msra.mxu0 %v494
    %1767 = vmatprep.subr.mxu0 0.0
    %1768 = vmatpush1.msra.mxu0 %v495
    %1769 = vmatprep.subr.mxu0 0.0
    %1770 = vmatpush1.msra.mxu0 0.0
    %1771 = vmatprep.subr.mxu0 0.0
    %1772 = vmatpush1.msra.mxu0 0.0
    %1773 = vmatprep.subr.mxu0 0.0
    %1774 = vmatpush1.msra.mxu0 0.0
    %1775 = vmatprep.subr.mxu0 0.0
    %1776 = vmatpush1.msra.mxu0 0.0
    %1777 = vmatprep.subr.mxu0 0.0
    %1778 = vmatpush1.msra.mxu0 0.0
    %1779 = vmatprep.subr.mxu0 0.0
    %1780 = vmatpush1.msra.mxu0 0.0
    %1781 = vmatprep.subr.mxu0 0.0
    %1782 = vmatpush1.msra.mxu0 0.0
    %1783 = vmatprep.subr.mxu0 0.0
    %1784 = vmatpush1.msra.mxu0 0.0
    %1785 = vmatprep.subr.mxu0 0.0
    %1786 = vmatpush1.msra.mxu0 0.0
    %1787 = vmatprep.subr.mxu0 0.0
    %1788 = vmatpush1.msra.mxu0 0.0
    %1789 = vmatprep.subr.mxu0 0.0
    %1790 = vmatpush1.msra.mxu0 0.0
    %1791 = vmatprep.subr.mxu0 0.0
    %1792 = vmatpush1.msra.mxu0 0.0
    %1793 = vmatprep.subr.mxu0 0.0
    %1794 = vmatpush1.msra.mxu0 0.0
    %1795 = vmatprep.subr.mxu0 0.0
    %1796 = vmatpush1.msra.mxu0 0.0
    %1797 = vmatprep.subr.mxu0 0.0
    %1798 = vmatpush1.msra.mxu0 0.0
    %1799 = vmatprep.subr.mxu0 0.0
    %1800 = vmatpush1.msra.mxu0 0.0
    %1801 = vmatprep.subr.mxu0 0.0
    %1802 = vmatpush1.msra.mxu0 0.0
    %1803 = vmatprep.subr.mxu0 0.0
    %1804 = vmatpush1.msra.mxu0 0.0
    %1805 = vmatprep.subr.mxu0 0.0
    %1806 = vmatpush1.msra.mxu0 0.0
    %1807 = vmatprep.subr.mxu0 0.0
    %1808 = vmatpush1.msra.mxu0 0.0
    %1809 = vmatprep.subr.mxu0 0.0
    %1810 = vmatpush1.msra.mxu0 0.0
    %1811 = vmatprep.subr.mxu0 0.0
    %1812 = vmatpush1.msra.mxu0 0.0
    %1813 = vmatprep.subr.mxu0 0.0
    %1814 = vmatpush1.msra.mxu0 0.0
    %1815 = vmatprep.subr.mxu0 0.0
    %1816 = vmatpush1.msra.mxu0 0.0
    %1817 = vmatprep.subr.mxu0 0.0
    %1818 = vmatpush1.msra.mxu0 0.0
    %1819 = vmatprep.subr.mxu0 0.0
    %1820 = vmatpush1.msra.mxu0 0.0
    %1821 = vmatprep.subr.mxu0 0.0
    %1822 = vmatpush1.msra.mxu0 0.0
    %1823 = vmatprep.subr.mxu0 0.0
    %1824 = vmatpush1.msra.mxu0 0.0
    %1825 = vmatprep.subr.mxu0 0.0
    %1826 = vmatpush1.msra.mxu0 0.0
    %1827 = vmatprep.subr.mxu0 0.0
    %1828 = vmatpush1.msra.mxu0 0.0
    %1829 = vmatprep.mubr.f32.mxu0 0.0
    %1830 = vmatmul.mubr.f32.gmra.mrb[0].mxu0 %v1763
    %v1831 = vpop.f32.mrb[0].mxu0
    %v1832 = vadd.f32 0.0, %v1831
    %v1833 = vpop.f32.mrb[0].mxu0
    %1834 = vdwg.mxu0
    %1836 = vrot.lane.b32.xlu0 %v1832, 64
    %v1837 = vpop.permute.xlu0 %1836
    %v1839 = vadd.f32 %v486, %v1837
    %v1840 = vxor.u32 %v1759, 2147483648
    %v1841 = vmul.f32 %v1840, 1.442695
    %v1842 = vpow.pop %v1841
    %v1843 = vadd.f32 %v1842, 1.0
    %v1844 = vrcp.pop %v1843
    %v1845 = vmul.f32 1.0, %v1844
    %v1846 = vtanh.pop %v1759
    %v1847 = vmul.f32 %v1845, %v1667
    %1849 = vrot.lane.b32.xlu0 %v1846, 80
    %v1850 = vpop.permute.xlu0 %1849
    %v1852 = vmul.f32 %v1845, %v1850
    %1854 = vrot.lane.b32.xlu0 %v1852, 16
    %v1855 = vpop.permute.xlu0 %1854
    %v1857 = vadd.f32 %v1847, %v1855
    %v1858 = vtanh.pop %v1857
    %1860 = vrot.lane.b32.xlu0 %v1858, 16
    %v1861 = vpop.permute.xlu0 %1860
    %v1863 = vmul.f32 %v1845, %v1861
    %v1864 = vxor.u32 %v1839, 2147483648
    %v1865 = vmul.f32 %v1864, 1.442695
    %v1866 = vpow.pop %v1865
    %v1867 = vadd.f32 %v1866, 1.0
    %v1868 = vrcp.pop %v1867
    %v1869 = vmul.f32 1.0, %v1868
    %v1870 = vtanh.pop %v1839
    %v1871 = vmul.f32 %v1869, %v1669
    %1873 = vrot.lane.b32.xlu0 %v1870, 80
    %v1874 = vpop.permute.xlu0 %1873
    %v1876 = vmul.f32 %v1869, %v1874
    %1878 = vrot.lane.b32.xlu0 %v1876, 16
    %v1879 = vpop.permute.xlu0 %1878
    %v1881 = vadd.f32 %v1871, %v1879
    %v1882 = vtanh.pop %v1881
    %1884 = vrot.lane.b32.xlu0 %v1882, 16
    %v1885 = vpop.permute.xlu0 %1884
    %v1887 = vmul.f32 %v1869, %v1885
    %v1888 = vsel %vm1211, %v1863, %v1666
    %v1889 = vsel %vm1211, %v1857, %v1667
    %v1890 = vsel %vm1204, %v1887, %v1668
    %v1891 = vsel %vm1204, %v1881, %v1669
    %v1892 = vsel %vm1211, %v1863, 0.0
    %1894 = vrot.lane.b32.xlu0 %v1892, 96
    %v1895 = vpop.permute.xlu0 %1894
    %s1897 = scalar_lea.vmem [#allocation2], 40
    %1898 = vst.msk [vmem:[%s1897] sm:$0xff] %vm520, %v1895
    %v1899 = vsel %vm1204, %v1887, 0.0
    %1901 = vrot.lane.b32.xlu0 %v1899, 32
    %v1902 = vpop.permute.xlu0 %1901
    %s1904 = scalar_lea.vmem [#allocation3], 16
    %1905 = vst.msk [vmem:[%s1904] sm:$0xff] %vm520, %v1902
    %1907 = vrot.lane.b32.xlu0 %v1888, 96
    %v1908 = vpop.permute.xlu0 %1907
    %v1909 = vsel %vm520, %v1908, 0
    %1911 = vmatprep.subr.mxu0 0.0
    %1912 = vmatpush1.msra.mxu0 %v492
    %1913 = vmatprep.subr.mxu0 0.0
    %1914 = vmatpush1.msra.mxu0 %v493
    %1915 = vmatprep.subr.mxu0 0.0
    %1916 = vmatpush1.msra.mxu0 0.0
    %1917 = vmatprep.subr.mxu0 0.0
    %1918 = vmatpush1.msra.mxu0 0.0
    %1919 = vmatprep.subr.mxu0 0.0
    %1920 = vmatpush1.msra.mxu0 0.0
    %1921 = vmatprep.subr.mxu0 0.0
    %1922 = vmatpush1.msra.mxu0 0.0
    %1923 = vmatprep.subr.mxu0 0.0
    %1924 = vmatpush1.msra.mxu0 0.0
    %1925 = vmatprep.subr.mxu0 0.0
    %1926 = vmatpush1.msra.mxu0 0.0
    %1927 = vmatprep.subr.mxu0 0.0
    %1928 = vmatpush1.msra.mxu0 0.0
    %1929 = vmatprep.subr.mxu0 0.0
    %1930 = vmatpush1.msra.mxu0 0.0
    %1931 = vmatprep.subr.mxu0 0.0
    %1932 = vmatpush1.msra.mxu0 0.0
    %1933 = vmatprep.subr.mxu0 0.0
    %1934 = vmatpush1.msra.mxu0 0.0
    %1935 = vmatprep.subr.mxu0 0.0
    %1936 = vmatpush1.msra.mxu0 0.0
    %1937 = vmatprep.subr.mxu0 0.0
    %1938 = vmatpush1.msra.mxu0 0.0
    %1939 = vmatprep.subr.mxu0 0.0
    %1940 = vmatpush1.msra.mxu0 0.0
    %1941 = vmatprep.subr.mxu0 0.0
    %1942 = vmatpush1.msra.mxu0 0.0
    %1943 = vmatprep.subr.mxu0 0.0
    %1944 = vmatpush1.msra.mxu0 0.0
    %1945 = vmatprep.subr.mxu0 0.0
    %1946 = vmatpush1.msra.mxu0 0.0
    %1947 = vmatprep.subr.mxu0 0.0
    %1948 = vmatpush1.msra.mxu0 0.0
    %1949 = vmatprep.subr.mxu0 0.0
    %1950 = vmatpush1.msra.mxu0 0.0
    %1951 = vmatprep.subr.mxu0 0.0
    %1952 = vmatpush1.msra.mxu0 0.0
    %1953 = vmatprep.subr.mxu0 0.0
    %1954 = vmatpush1.msra.mxu0 0.0
    %1955 = vmatprep.subr.mxu0 0.0
    %1956 = vmatpush1.msra.mxu0 0.0
    %1957 = vmatprep.subr.mxu0 0.0
    %1958 = vmatpush1.msra.mxu0 0.0
    %1959 = vmatprep.subr.mxu0 0.0
    %1960 = vmatpush1.msra.mxu0 0.0
    %1961 = vmatprep.subr.mxu0 0.0
    %1962 = vmatpush1.msra.mxu0 0.0
    %1963 = vmatprep.subr.mxu0 0.0
    %1964 = vmatpush1.msra.mxu0 0.0
    %1965 = vmatprep.subr.mxu0 0.0
    %1966 = vmatpush1.msra.mxu0 0.0
    %1967 = vmatprep.subr.mxu0 0.0
    %1968 = vmatpush1.msra.mxu0 0.0
    %1969 = vmatprep.subr.mxu0 0.0
    %1970 = vmatpush1.msra.mxu0 0.0
    %1971 = vmatprep.subr.mxu0 0.0
    %1972 = vmatpush1.msra.mxu0 0.0
    %1973 = vmatprep.subr.mxu0 0.0
    %1974 = vmatpush1.msra.mxu0 0.0
    %1975 = vmatprep.mubr.f32.mxu0 0.0
    %1976 = vmatmul.mubr.f32.gmra.mrb[0].mxu0 %v1909
    %v1977 = vpop.f32.mrb[0].mxu0
    %v1978 = vadd.f32 0.0, %v1977
    %v1979 = vpop.f32.mrb[0].mxu0
    %1980 = vdwg.mxu0
    %v1981 = vadd.f32 %v473, %v1978
    %1983 = vrot.lane.b32.xlu0 %v1890, 32
    %v1984 = vpop.permute.xlu0 %1983
    %v1985 = vsel %vm520, %v1984, 0
    %1987 = vmatprep.subr.mxu0 0.0
    %1988 = vmatpush1.msra.mxu0 %v494
    %1989 = vmatprep.subr.mxu0 0.0
    %1990 = vmatpush1.msra.mxu0 %v495
    %1991 = vmatprep.subr.mxu0 0.0
    %1992 = vmatpush1.msra.mxu0 0.0
    %1993 = vmatprep.subr.mxu0 0.0
    %1994 = vmatpush1.msra.mxu0 0.0
    %1995 = vmatprep.subr.mxu0 0.0
    %1996 = vmatpush1.msra.mxu0 0.0
    %1997 = vmatprep.subr.mxu0 0.0
    %1998 = vmatpush1.msra.mxu0 0.0
    %1999 = vmatprep.subr.mxu0 0.0
    %2000 = vmatpush1.msra.mxu0 0.0
    %2001 = vmatprep.subr.mxu0 0.0
    %2002 = vmatpush1.msra.mxu0 0.0
    %2003 = vmatprep.subr.mxu0 0.0
    %2004 = vmatpush1.msra.mxu0 0.0
    %2005 = vmatprep.subr.mxu0 0.0
    %2006 = vmatpush1.msra.mxu0 0.0
    %2007 = vmatprep.subr.mxu0 0.0
    %2008 = vmatpush1.msra.mxu0 0.0
    %2009 = vmatprep.subr.mxu0 0.0
    %2010 = vmatpush1.msra.mxu0 0.0
    %2011 = vmatprep.subr.mxu0 0.0
    %2012 = vmatpush1.msra.mxu0 0.0
    %2013 = vmatprep.subr.mxu0 0.0
    %2014 = vmatpush1.msra.mxu0 0.0
    %2015 = vmatprep.subr.mxu0 0.0
    %2016 = vmatpush1.msra.mxu0 0.0
    %2017 = vmatprep.subr.mxu0 0.0
    %2018 = vmatpush1.msra.mxu0 0.0
    %2019 = vmatprep.subr.mxu0 0.0
    %2020 = vmatpush1.msra.mxu0 0.0
    %2021 = vmatprep.subr.mxu0 0.0
    %2022 = vmatpush1.msra.mxu0 0.0
    %2023 = vmatprep.subr.mxu0 0.0
    %2024 = vmatpush1.msra.mxu0 0.0
    %2025 = vmatprep.subr.mxu0 0.0
    %2026 = vmatpush1.msra.mxu0 0.0
    %2027 = vmatprep.subr.mxu0 0.0
    %2028 = vmatpush1.msra.mxu0 0.0
    %2029 = vmatprep.subr.mxu0 0.0
    %2030 = vmatpush1.msra.mxu0 0.0
    %2031 = vmatprep.subr.mxu0 0.0
    %2032 = vmatpush1.msra.mxu0 0.0
    %2033 = vmatprep.subr.mxu0 0.0
    %2034 = vmatpush1.msra.mxu0 0.0
    %2035 = vmatprep.subr.mxu0 0.0
    %2036 = vmatpush1.msra.mxu0 0.0
    %2037 = vmatprep.subr.mxu0 0.0
    %2038 = vmatpush1.msra.mxu0 0.0
    %2039 = vmatprep.subr.mxu0 0.0
    %2040 = vmatpush1.msra.mxu0 0.0
    %2041 = vmatprep.subr.mxu0 0.0
    %2042 = vmatpush1.msra.mxu0 0.0
    %2043 = vmatprep.subr.mxu0 0.0
    %2044 = vmatpush1.msra.mxu0 0.0
    %2045 = vmatprep.subr.mxu0 0.0
    %2046 = vmatpush1.msra.mxu0 0.0
    %2047 = vmatprep.subr.mxu0 0.0
    %2048 = vmatpush1.msra.mxu0 0.0
    %2049 = vmatprep.subr.mxu0 0.0
    %2050 = vmatpush1.msra.mxu0 0.0
    %2051 = vmatprep.mubr.f32.mxu0 0.0
    %2052 = vmatmul.mubr.f32.gmra.mrb[0].mxu0 %v1985
    %v2053 = vpop.f32.mrb[0].mxu0
    %v2054 = vadd.f32 0.0, %v2053
    %v2055 = vpop.f32.mrb[0].mxu0
    %2056 = vdwg.mxu0
    %2058 = vrot.lane.b32.xlu0 %v2054, 64
    %v2059 = vpop.permute.xlu0 %2058
    %v2061 = vadd.f32 %v485, %v2059
    %v2062 = vxor.u32 %v1981, 2147483648
    %v2063 = vmul.f32 %v2062, 1.442695
    %v2064 = vpow.pop %v2063
    %v2065 = vadd.f32 %v2064, 1.0
    %v2066 = vrcp.pop %v2065
    %v2067 = vmul.f32 1.0, %v2066
    %v2068 = vtanh.pop %v1981
    %v2069 = vmul.f32 %v2067, %v1889
    %2071 = vrot.lane.b32.xlu0 %v2068, 80
    %v2072 = vpop.permute.xlu0 %2071
    %v2074 = vmul.f32 %v2067, %v2072
    %2076 = vrot.lane.b32.xlu0 %v2074, 16
    %v2077 = vpop.permute.xlu0 %2076
    %v2079 = vadd.f32 %v2069, %v2077
    %v2080 = vtanh.pop %v2079
    %2082 = vrot.lane.b32.xlu0 %v2080, 16
    %v2083 = vpop.permute.xlu0 %2082
    %v2085 = vmul.f32 %v2067, %v2083
    %v2086 = vxor.u32 %v2061, 2147483648
    %v2087 = vmul.f32 %v2086, 1.442695
    %v2088 = vpow.pop %v2087
    %v2089 = vadd.f32 %v2088, 1.0
    %v2090 = vrcp.pop %v2089
    %v2091 = vmul.f32 1.0, %v2090
    %v2092 = vtanh.pop %v2061
    %v2093 = vmul.f32 %v2091, %v1891
    %2095 = vrot.lane.b32.xlu0 %v2092, 80
    %v2096 = vpop.permute.xlu0 %2095
    %v2098 = vmul.f32 %v2091, %v2096
    %2100 = vrot.lane.b32.xlu0 %v2098, 16
    %v2101 = vpop.permute.xlu0 %2100
    %v2103 = vadd.f32 %v2093, %v2101
    %v2104 = vtanh.pop %v2103
    %2106 = vrot.lane.b32.xlu0 %v2104, 16
    %v2107 = vpop.permute.xlu0 %2106
    %v2109 = vmul.f32 %v2091, %v2107
    %v2110 = vsel %vm977, %v2085, %v1888
    %v2111 = vsel %vm977, %v2079, %v1889
    %v2112 = vsel %vm970, %v2109, %v1890
    %v2113 = vsel %vm970, %v2103, %v1891
    %v2114 = vsel %vm977, %v2085, 0.0
    %2116 = vrot.lane.b32.xlu0 %v2114, 96
    %v2117 = vpop.permute.xlu0 %2116
    %s2119 = scalar_lea.vmem [#allocation2], 48
    %2120 = vst.msk [vmem:[%s2119] sm:$0xff] %vm520, %v2117
    %v2121 = vsel %vm970, %v2109, 0.0
    %2123 = vrot.lane.b32.xlu0 %v2121, 32
    %v2124 = vpop.permute.xlu0 %2123
    %s2126 = scalar_lea.vmem [#allocation3], 8
    %2127 = vst.msk [vmem:[%s2126] sm:$0xff] %vm520, %v2124
    %2129 = vrot.lane.b32.xlu0 %v2110, 96
    %v2130 = vpop.permute.xlu0 %2129
    %v2131 = vsel %vm520, %v2130, 0
    %2133 = vmatprep.subr.mxu0 0.0
    %2134 = vmatpush1.msra.mxu0 %v492
    %2135 = vmatprep.subr.mxu0 0.0
    %2136 = vmatpush1.msra.mxu0 %v493
    %2137 = vmatprep.subr.mxu0 0.0
    %2138 = vmatpush1.msra.mxu0 0.0
    %2139 = vmatprep.subr.mxu0 0.0
    %2140 = vmatpush1.msra.mxu0 0.0
    %2141 = vmatprep.subr.mxu0 0.0
    %2142 = vmatpush1.msra.mxu0 0.0
    %2143 = vmatprep.subr.mxu0 0.0
    %2144 = vmatpush1.msra.mxu0 0.0
    %2145 = vmatprep.subr.mxu0 0.0
    %2146 = vmatpush1.msra.mxu0 0.0
    %2147 = vmatprep.subr.mxu0 0.0
    %2148 = vmatpush1.msra.mxu0 0.0
    %2149 = vmatprep.subr.mxu0 0.0
    %2150 = vmatpush1.msra.mxu0 0.0
    %2151 = vmatprep.subr.mxu0 0.0
    %2152 = vmatpush1.msra.mxu0 0.0
    %2153 = vmatprep.subr.mxu0 0.0
    %2154 = vmatpush1.msra.mxu0 0.0
    %2155 = vmatprep.subr.mxu0 0.0
    %2156 = vmatpush1.msra.mxu0 0.0
    %2157 = vmatprep.subr.mxu0 0.0
    %2158 = vmatpush1.msra.mxu0 0.0
    %2159 = vmatprep.subr.mxu0 0.0
    %2160 = vmatpush1.msra.mxu0 0.0
    %2161 = vmatprep.subr.mxu0 0.0
    %2162 = vmatpush1.msra.mxu0 0.0
    %2163 = vmatprep.subr.mxu0 0.0
    %2164 = vmatpush1.msra.mxu0 0.0
    %2165 = vmatprep.subr.mxu0 0.0
    %2166 = vmatpush1.msra.mxu0 0.0
    %2167 = vmatprep.subr.mxu0 0.0
    %2168 = vmatpush1.msra.mxu0 0.0
    %2169 = vmatprep.subr.mxu0 0.0
    %2170 = vmatpush1.msra.mxu0 0.0
    %2171 = vmatprep.subr.mxu0 0.0
    %2172 = vmatpush1.msra.mxu0 0.0
    %2173 = vmatprep.subr.mxu0 0.0
    %2174 = vmatpush1.msra.mxu0 0.0
    %2175 = vmatprep.subr.mxu0 0.0
    %2176 = vmatpush1.msra.mxu0 0.0
    %2177 = vmatprep.subr.mxu0 0.0
    %2178 = vmatpush1.msra.mxu0 0.0
    %2179 = vmatprep.subr.mxu0 0.0
    %2180 = vmatpush1.msra.mxu0 0.0
    %2181 = vmatprep.subr.mxu0 0.0
    %2182 = vmatpush1.msra.mxu0 0.0
    %2183 = vmatprep.subr.mxu0 0.0
    %2184 = vmatpush1.msra.mxu0 0.0
    %2185 = vmatprep.subr.mxu0 0.0
    %2186 = vmatpush1.msra.mxu0 0.0
    %2187 = vmatprep.subr.mxu0 0.0
    %2188 = vmatpush1.msra.mxu0 0.0
    %2189 = vmatprep.subr.mxu0 0.0
    %2190 = vmatpush1.msra.mxu0 0.0
    %2191 = vmatprep.subr.mxu0 0.0
    %2192 = vmatpush1.msra.mxu0 0.0
    %2193 = vmatprep.subr.mxu0 0.0
    %2194 = vmatpush1.msra.mxu0 0.0
    %2195 = vmatprep.subr.mxu0 0.0
    %2196 = vmatpush1.msra.mxu0 0.0
    %2197 = vmatprep.mubr.f32.mxu0 0.0
    %2198 = vmatmul.mubr.f32.gmra.mrb[0].mxu0 %v2131
    %v2199 = vpop.f32.mrb[0].mxu0
    %v2200 = vadd.f32 0.0, %v2199
    %v2201 = vpop.f32.mrb[0].mxu0
    %2202 = vdwg.mxu0
    %v2203 = vadd.f32 %v474, %v2200
    %2205 = vrot.lane.b32.xlu0 %v2112, 32
    %v2206 = vpop.permute.xlu0 %2205
    %v2207 = vsel %vm520, %v2206, 0
    %2209 = vmatprep.subr.mxu0 0.0
    %2210 = vmatpush1.msra.mxu0 %v494
    %2211 = vmatprep.subr.mxu0 0.0
    %2212 = vmatpush1.msra.mxu0 %v495
    %2213 = vmatprep.subr.mxu0 0.0
    %2214 = vmatpush1.msra.mxu0 0.0
    %2215 = vmatprep.subr.mxu0 0.0
    %2216 = vmatpush1.msra.mxu0 0.0
    %2217 = vmatprep.subr.mxu0 0.0
    %2218 = vmatpush1.msra.mxu0 0.0
    %2219 = vmatprep.subr.mxu0 0.0
    %2220 = vmatpush1.msra.mxu0 0.0
    %2221 = vmatprep.subr.mxu0 0.0
    %2222 = vmatpush1.msra.mxu0 0.0
    %2223 = vmatprep.subr.mxu0 0.0
    %2224 = vmatpush1.msra.mxu0 0.0
    %2225 = vmatprep.subr.mxu0 0.0
    %2226 = vmatpush1.msra.mxu0 0.0
    %2227 = vmatprep.subr.mxu0 0.0
    %2228 = vmatpush1.msra.mxu0 0.0
    %2229 = vmatprep.subr.mxu0 0.0
    %2230 = vmatpush1.msra.mxu0 0.0
    %2231 = vmatprep.subr.mxu0 0.0
    %2232 = vmatpush1.msra.mxu0 0.0
    %2233 = vmatprep.subr.mxu0 0.0
    %2234 = vmatpush1.msra.mxu0 0.0
    %2235 = vmatprep.subr.mxu0 0.0
    %2236 = vmatpush1.msra.mxu0 0.0
    %2237 = vmatprep.subr.mxu0 0.0
    %2238 = vmatpush1.msra.mxu0 0.0
    %2239 = vmatprep.subr.mxu0 0.0
    %2240 = vmatpush1.msra.mxu0 0.0
    %2241 = vmatprep.subr.mxu0 0.0
    %2242 = vmatpush1.msra.mxu0 0.0
    %2243 = vmatprep.subr.mxu0 0.0
    %2244 = vmatpush1.msra.mxu0 0.0
    %2245 = vmatprep.subr.mxu0 0.0
    %2246 = vmatpush1.msra.mxu0 0.0
    %2247 = vmatprep.subr.mxu0 0.0
    %2248 = vmatpush1.msra.mxu0 0.0
    %2249 = vmatprep.subr.mxu0 0.0
    %2250 = vmatpush1.msra.mxu0 0.0
    %2251 = vmatprep.subr.mxu0 0.0
    %2252 = vmatpush1.msra.mxu0 0.0
    %2253 = vmatprep.subr.mxu0 0.0
    %2254 = vmatpush1.msra.mxu0 0.0
    %2255 = vmatprep.subr.mxu0 0.0
    %2256 = vmatpush1.msra.mxu0 0.0
    %2257 = vmatprep.subr.mxu0 0.0
    %2258 = vmatpush1.msra.mxu0 0.0
    %2259 = vmatprep.subr.mxu0 0.0
    %2260 = vmatpush1.msra.mxu0 0.0
    %2261 = vmatprep.subr.mxu0 0.0
    %2262 = vmatpush1.msra.mxu0 0.0
    %2263 = vmatprep.subr.mxu0 0.0
    %2264 = vmatpush1.msra.mxu0 0.0
    %2265 = vmatprep.subr.mxu0 0.0
    %2266 = vmatpush1.msra.mxu0 0.0
    %2267 = vmatprep.subr.mxu0 0.0
    %2268 = vmatpush1.msra.mxu0 0.0
    %2269 = vmatprep.subr.mxu0 0.0
    %2270 = vmatpush1.msra.mxu0 0.0
    %2271 = vmatprep.subr.mxu0 0.0
    %2272 = vmatpush1.msra.mxu0 0.0
    %2273 = vmatprep.mubr.f32.mxu0 0.0
    %2274 = vmatmul.mubr.f32.gmra.mrb[0].mxu0 %v2207
    %v2275 = vpop.f32.mrb[0].mxu0
    %v2276 = vadd.f32 0.0, %v2275
    %v2277 = vpop.f32.mrb[0].mxu0
    %2278 = vdwg.mxu0
    %2280 = vrot.lane.b32.xlu0 %v2276, 64
    %v2281 = vpop.permute.xlu0 %2280
    %v2283 = vadd.f32 %v484, %v2281
    %v2284 = vxor.u32 %v2203, 2147483648
    %v2285 = vmul.f32 %v2284, 1.442695
    %v2286 = vpow.pop %v2285
    %v2287 = vadd.f32 %v2286, 1.0
    %v2288 = vrcp.pop %v2287
    %v2289 = vmul.f32 1.0, %v2288
    %v2290 = vtanh.pop %v2203
    %v2291 = vmul.f32 %v2289, %v2111
    %2293 = vrot.lane.b32.xlu0 %v2290, 80
    %v2294 = vpop.permute.xlu0 %2293
    %v2296 = vmul.f32 %v2289, %v2294
    %2298 = vrot.lane.b32.xlu0 %v2296, 16
    %v2299 = vpop.permute.xlu0 %2298
    %v2301 = vadd.f32 %v2291, %v2299
    %v2302 = vtanh.pop %v2301
    %2304 = vrot.lane.b32.xlu0 %v2302, 16
    %v2305 = vpop.permute.xlu0 %2304
    %v2307 = vmul.f32 %v2289, %v2305
    %v2308 = vxor.u32 %v2283, 2147483648
    %v2309 = vmul.f32 %v2308, 1.442695
    %v2310 = vpow.pop %v2309
    %v2311 = vadd.f32 %v2310, 1.0
    %v2312 = vrcp.pop %v2311
    %v2313 = vmul.f32 1.0, %v2312
    %v2314 = vtanh.pop %v2283
    %v2315 = vmul.f32 %v2313, %v2113
    %2317 = vrot.lane.b32.xlu0 %v2314, 80
    %v2318 = vpop.permute.xlu0 %2317
    %v2320 = vmul.f32 %v2313, %v2318
    %2322 = vrot.lane.b32.xlu0 %v2320, 16
    %v2323 = vpop.permute.xlu0 %2322
    %v2325 = vadd.f32 %v2315, %v2323
    %v2326 = vtanh.pop %v2325
    %2328 = vrot.lane.b32.xlu0 %v2326, 16
    %v2329 = vpop.permute.xlu0 %2328
    %v2331 = vmul.f32 %v2313, %v2329
    %v2332 = vsel %vm741, %v2307, 0.0
    %2334 = vrot.lane.b32.xlu0 %v2332, 96
    %v2335 = vpop.permute.xlu0 %2334
    %s2337 = scalar_lea.vmem [#allocation2], 56
    %2338 = vst.msk [vmem:[%s2337] sm:$0xff] %vm520, %v2335
    %v2339 = vsel %vm731, %v2331, 0.0
    %2341 = vrot.lane.b32.xlu0 %v2339, 32
    %v2342 = vpop.permute.xlu0 %2341
    %2344 = vst.msk [vmem:[#allocation3] sm:$0xff] %vm520, %v2342
    %v2345 = vld [vmem:[#allocation2] sm:$0xff]
    %v2346 = vld [vmem:[#allocation2 + $0x8] sm:$0xff]
    %v2347 = vld [vmem:[#allocation2 + $0x10] sm:$0xff]
    %v2348 = vld [vmem:[#allocation2 + $0x18] sm:$0xff]
    %v2349 = vld [vmem:[#allocation2 + $0x20] sm:$0xff]
    %v2350 = vld [vmem:[#allocation2 + $0x28] sm:$0xff]
    %v2351 = vld [vmem:[#allocation2 + $0x30] sm:$0xff]
    %v2352 = vld [vmem:[#allocation2 + $0x38] sm:$0xff]
    %v2353 = vld [vmem:[#allocation3] sm:$0xff]
    %v2354 = vld [vmem:[#allocation3 + $0x8] sm:$0xff]
    %v2355 = vld [vmem:[#allocation3 + $0x10] sm:$0xff]
    %v2356 = vld [vmem:[#allocation3 + $0x18] sm:$0xff]
    %v2357 = vld [vmem:[#allocation3 + $0x20] sm:$0xff]
    %v2358 = vld [vmem:[#allocation3 + $0x28] sm:$0xff]
    %v2359 = vld [vmem:[#allocation3 + $0x30] sm:$0xff]
    %v2360 = vld [vmem:[#allocation3 + $0x38] sm:$0xff]
    %v2361 = vld [vmem:[#allocation17] sm:$0x1]
    %v2362 = vld [vmem:[#allocation19] sm:$0x1]
    %v2364 = vlaneseq
    %v2365 = vshrl.u32 %v2364, 7
    %v2366 = vsub.s32 0, %v2365
    %v2367 = vrot.slane %v2361, %v2366
    %v2369 = vmul.f32 %v2345, %v2367
    %v2370 = vmul.f32 %v2346, %v2367
    %v2371 = vmul.f32 %v2347, %v2367
    %v2372 = vmul.f32 %v2348, %v2367
    %v2373 = vmul.f32 %v2349, %v2367
    %v2374 = vmul.f32 %v2350, %v2367
    %v2375 = vmul.f32 %v2351, %v2367
    %v2376 = vmul.f32 %v2352, %v2367
    %v2377 = vsel %vm520, %v2369, 0.0
    %2378 = vadd.xlane.f32.xlu0 %v2377
    %v2379 = vpop.xlane.xlu0 %2378
    %v2380 = vsel %vm520, %v2370, 0.0
    %2381 = vadd.xlane.f32.xlu0 %v2380
    %v2382 = vpop.xlane.xlu0 %2381
    %v2383 = vsel %vm520, %v2371, 0.0
    %2384 = vadd.xlane.f32.xlu0 %v2383
    %v2385 = vpop.xlane.xlu0 %2384
    %v2386 = vsel %vm520, %v2372, 0.0
    %2387 = vadd.xlane.f32.xlu0 %v2386
    %v2388 = vpop.xlane.xlu0 %2387
    %v2389 = vsel %vm520, %v2373, 0.0
    %2390 = vadd.xlane.f32.xlu0 %v2389
    %v2391 = vpop.xlane.xlu0 %2390
    %v2392 = vsel %vm520, %v2374, 0.0
    %2393 = vadd.xlane.f32.xlu0 %v2392
    %v2394 = vpop.xlane.xlu0 %2393
    %v2395 = vsel %vm520, %v2375, 0.0
    %2396 = vadd.xlane.f32.xlu0 %v2395
    %v2397 = vpop.xlane.xlu0 %2396
    %v2398 = vsel %vm520, %v2376, 0.0
    %2399 = vadd.xlane.f32.xlu0 %v2398
    %v2400 = vpop.xlane.xlu0 %2399
    %v2402 = vlaneseq
    %v2403 = vshrl.u32 %v2402, 7
    %v2404 = vsub.s32 0, %v2403
    %v2405 = vrot.slane %v2362, %v2404
    %v2407 = vmul.f32 %v2353, %v2405
    %v2408 = vmul.f32 %v2354, %v2405
    %v2409 = vmul.f32 %v2355, %v2405
    %v2410 = vmul.f32 %v2356, %v2405
    %v2411 = vmul.f32 %v2357, %v2405
    %v2412 = vmul.f32 %v2358, %v2405
    %v2413 = vmul.f32 %v2359, %v2405
    %v2414 = vmul.f32 %v2360, %v2405
    %v2415 = vsel %vm520, %v2407, 0.0
    %2416 = vadd.xlane.f32.xlu0 %v2415
    %v2417 = vpop.xlane.xlu0 %2416
    %v2418 = vsel %vm520, %v2408, 0.0
    %2419 = vadd.xlane.f32.xlu0 %v2418
    %v2420 = vpop.xlane.xlu0 %2419
    %v2421 = vsel %vm520, %v2409, 0.0
    %2422 = vadd.xlane.f32.xlu0 %v2421
    %v2423 = vpop.xlane.xlu0 %2422
    %v2424 = vsel %vm520, %v2410, 0.0
    %2425 = vadd.xlane.f32.xlu0 %v2424
    %v2426 = vpop.xlane.xlu0 %2425
    %v2427 = vsel %vm520, %v2411, 0.0
    %2428 = vadd.xlane.f32.xlu0 %v2427
    %v2429 = vpop.xlane.xlu0 %2428
    %v2430 = vsel %vm520, %v2412, 0.0
    %2431 = vadd.xlane.f32.xlu0 %v2430
    %v2432 = vpop.xlane.xlu0 %2431
    %v2433 = vsel %vm520, %v2413, 0.0
    %2434 = vadd.xlane.f32.xlu0 %v2433
    %v2435 = vpop.xlane.xlu0 %2434
    %v2436 = vsel %vm520, %v2414, 0.0
    %2437 = vadd.xlane.f32.xlu0 %v2436
    %v2438 = vpop.xlane.xlu0 %2437
    %v2439 = vadd.f32 %v2379, %v2417
    %v2440 = vadd.f32 %v2382, %v2420
    %v2441 = vadd.f32 %v2385, %v2423
    %v2442 = vadd.f32 %v2388, %v2426
    %v2443 = vadd.f32 %v2391, %v2429
    %v2444 = vadd.f32 %v2394, %v2432
    %v2445 = vadd.f32 %v2397, %v2435
    %v2446 = vadd.f32 %v2400, %v2438
    %v2447 = vld [vmem:[#allocation4] sm:$0x1]
    %v2449 = vlaneseq
    %v2450 = vshrl.u32 %v2449, 7
    %v2451 = vsub.s32 0, %v2450
    %v2452 = vrot.slane %v2447, %v2451
    %v2454 = vadd.f32 %v2439, %v2452
    %v2455 = vadd.f32 %v2440, %v2452
    %v2456 = vadd.f32 %v2441, %v2452
    %v2457 = vadd.f32 %v2442, %v2452
    %v2458 = vadd.f32 %v2443, %v2452
    %v2459 = vadd.f32 %v2444, %v2452
    %v2460 = vadd.f32 %v2445, %v2452
    %v2461 = vadd.f32 %v2446, %v2452
    %v2462 = vsel %vm725, %v2454, -1e+30
    %v2463 = vsel %vm964, %v2455, -1e+30
    %v2464 = vsel %vm1198, %v2456, -1e+30
    %v2465 = vsel %vm1432, %v2457, -1e+30
    %v2466 = vsel %vm1433, %v2458, -1e+30
    %v2467 = vsel %vm1199, %v2459, -1e+30
    %v2468 = vsel %vm965, %v2460, -1e+30
    %v2469 = vsel %vm726, %v2461, -1e+30
    %vm2470 = vcmask 7168
    %v2471 = vsel %vm2470, %v2462, -inf
    %v2472 = vsel %vm2470, %v2463, -inf
    %v2473 = vsel %vm2470, %v2464, -inf
    %v2474 = vsel %vm2470, %v2465, -inf
    %v2475 = vsel %vm2470, %v2466, -inf
    %v2476 = vmax.f32 %v2471, %v2475
    %v2477 = vsel %vm2470, %v2467, -inf
    %v2478 = vmax.f32 %v2472, %v2477
    %v2479 = vsel %vm2470, %v2468, -inf
    %v2480 = vmax.f32 %v2473, %v2479
    %v2481 = vsel %vm2470, %v2469, -inf
    %v2482 = vmax.f32 %v2474, %v2481
    %v2483 = vmax.f32 %v2476, %v2478
    %v2484 = vmax.f32 %v2480, %v2482
    %v2485 = vmax.f32 %v2483, %v2484
    %v2486 = vsub.f32 %v2462, %v2485
    %v2487 = vsub.f32 %v2463, %v2485
    %v2488 = vsub.f32 %v2464, %v2485
    %v2489 = vsub.f32 %v2465, %v2485
    %v2490 = vsub.f32 %v2466, %v2485
    %v2491 = vsub.f32 %v2467, %v2485
    %v2492 = vsub.f32 %v2468, %v2485
    %v2493 = vsub.f32 %v2469, %v2485
    %v2494 = vmul.f32 %v2486, 1.442695
    %v2495 = vpow.pop %v2494
    %v2496 = vmul.f32 %v2487, 1.442695
    %v2497 = vpow.pop %v2496
    %v2498 = vmul.f32 %v2488, 1.442695
    %v2499 = vpow.pop %v2498
    %v2500 = vmul.f32 %v2489, 1.442695
    %v2501 = vpow.pop %v2500
    %v2502 = vmul.f32 %v2490, 1.442695
    %v2503 = vpow.pop %v2502
    %v2504 = vmul.f32 %v2491, 1.442695
    %v2505 = vpow.pop %v2504
    %v2506 = vmul.f32 %v2492, 1.442695
    %v2507 = vpow.pop %v2506
    %v2508 = vmul.f32 %v2493, 1.442695
    %v2509 = vpow.pop %v2508
    %v2510 = vsel %vm725, %v2495, 0.0
    %v2511 = vsel %vm964, %v2497, 0.0
    %v2512 = vsel %vm1198, %v2499, 0.0
    %v2513 = vsel %vm1432, %v2501, 0.0
    %v2514 = vsel %vm1433, %v2503, 0.0
    %v2515 = vsel %vm1199, %v2505, 0.0
    %v2516 = vsel %vm965, %v2507, 0.0
    %v2517 = vsel %vm726, %v2509, 0.0
    %v2518 = vsel %vm2470, %v2510, 0.0
    %v2519 = vsel %vm2470, %v2511, 0.0
    %v2520 = vadd.f32 %v2518, %v2519
    %v2521 = vsel %vm2470, %v2512, 0.0
    %v2522 = vadd.f32 %v2520, %v2521
    %v2523 = vsel %vm2470, %v2513, 0.0
    %v2524 = vadd.f32 %v2522, %v2523
    %v2525 = vsel %vm2470, %v2514, 0.0
    %v2526 = vadd.f32 %v2524, %v2525
    %v2527 = vsel %vm2470, %v2515, 0.0
    %v2528 = vadd.f32 %v2526, %v2527
    %v2529 = vsel %vm2470, %v2516, 0.0
    %v2530 = vadd.f32 %v2528, %v2529
    %v2531 = vsel %vm2470, %v2517, 0.0
    %v2532 = vadd.f32 %v2530, %v2531
    %vm2533 = vcmp.gt.f32.partialorder %v2532, 0.0
    %v2534 = vsel %vm2533, %v2532, 1.0
    %v2535 = vrcp.pop %v2534
    %v2536 = vmul.f32 %v2510, %v2535
    %v2537 = vmul.f32 %v2511, %v2535
    %v2538 = vmul.f32 %v2512, %v2535
    %v2539 = vmul.f32 %v2513, %v2535
    %v2540 = vmul.f32 %v2514, %v2535
    %v2541 = vmul.f32 %v2515, %v2535
    %v2542 = vmul.f32 %v2516, %v2535
    %v2543 = vmul.f32 %v2517, %v2535
    %2545 = vset.pattern.permute.xlu0 0
    %2546 = vperm.xlu0 %2545, %v2536
    %v2547 = vpop.permute.xlu0 %2546
    %2550 = vset.pattern.permute.xlu0 0
    %2551 = vperm.xlu0 %2550, %v2537
    %v2552 = vpop.permute.xlu0 %2551
    %2555 = vset.pattern.permute.xlu0 0
    %2556 = vperm.xlu0 %2555, %v2538
    %v2557 = vpop.permute.xlu0 %2556
    %2560 = vset.pattern.permute.xlu0 0
    %2561 = vperm.xlu0 %2560, %v2539
    %v2562 = vpop.permute.xlu0 %2561
    %2565 = vset.pattern.permute.xlu0 0
    %2566 = vperm.xlu0 %2565, %v2540
    %v2567 = vpop.permute.xlu0 %2566
    %2570 = vset.pattern.permute.xlu0 0
    %2571 = vperm.xlu0 %2570, %v2541
    %v2572 = vpop.permute.xlu0 %2571
    %2575 = vset.pattern.permute.xlu0 0
    %2576 = vperm.xlu0 %2575, %v2542
    %v2577 = vpop.permute.xlu0 %2576
    %2580 = vset.pattern.permute.xlu0 0
    %2581 = vperm.xlu0 %2580, %v2543
    %v2582 = vpop.permute.xlu0 %2581
    %v2584 = vmul.f32 %v2547, %v2345
    %v2585 = vmul.f32 %v2552, %v2346
    %v2586 = vmul.f32 %v2557, %v2347
    %v2587 = vmul.f32 %v2562, %v2348
    %v2588 = vmul.f32 %v2567, %v2349
    %v2589 = vmul.f32 %v2572, %v2350
    %v2590 = vmul.f32 %v2577, %v2351
    %v2591 = vmul.f32 %v2582, %v2352
    %v2592 = vsel %vm520, %v2584, 0.0
    %v2593 = vsel %vm520, %v2585, 0.0
    %v2594 = vadd.f32 %v2592, %v2593
    %v2595 = vsel %vm520, %v2586, 0.0
    %v2596 = vadd.f32 %v2594, %v2595
    %v2597 = vsel %vm520, %v2587, 0.0
    %v2598 = vadd.f32 %v2596, %v2597
    %v2599 = vsel %vm520, %v2588, 0.0
    %v2600 = vadd.f32 %v2598, %v2599
    %v2601 = vsel %vm520, %v2589, 0.0
    %v2602 = vadd.f32 %v2600, %v2601
    %v2603 = vsel %vm520, %v2590, 0.0
    %v2604 = vadd.f32 %v2602, %v2603
    %v2605 = vsel %vm520, %v2591, 0.0
    %v2606 = vadd.f32 %v2604, %v2605
    %v2607 = vmul.f32 %v2547, %v2353
    %v2608 = vmul.f32 %v2552, %v2354
    %v2609 = vmul.f32 %v2557, %v2355
    %v2610 = vmul.f32 %v2562, %v2356
    %v2611 = vmul.f32 %v2567, %v2357
    %v2612 = vmul.f32 %v2572, %v2358
    %v2613 = vmul.f32 %v2577, %v2359
    %v2614 = vmul.f32 %v2582, %v2360
    %v2615 = vsel %vm520, %v2607, 0.0
    %v2616 = vsel %vm520, %v2608, 0.0
    %v2617 = vadd.f32 %v2615, %v2616
    %v2618 = vsel %vm520, %v2609, 0.0
    %v2619 = vadd.f32 %v2617, %v2618
    %v2620 = vsel %vm520, %v2610, 0.0
    %v2621 = vadd.f32 %v2619, %v2620
    %v2622 = vsel %vm520, %v2611, 0.0
    %v2623 = vadd.f32 %v2621, %v2622
    %v2624 = vsel %vm520, %v2612, 0.0
    %v2625 = vadd.f32 %v2623, %v2624
    %v2626 = vsel %vm520, %v2613, 0.0
    %v2627 = vadd.f32 %v2625, %v2626
    %v2628 = vsel %vm520, %v2614, 0.0
    %v2629 = vadd.f32 %v2627, %v2628
    %v2630 = vld [vmem:[#allocation20] sm:$0xff]
    %v2631 = vld [vmem:[#allocation20 + $0x8] sm:$0xff]
    %v2632 = vld [vmem:[#allocation22] sm:$0xff]
    %v2633 = vld [vmem:[#allocation22 + $0x8] sm:$0xff]
    %v2635 = vsel %vm520, %v2629, 0
    %2637 = vmatprep.subr.mxu0 0.0
    %2638 = vmatpush1.msra.mxu0 %v2632
    %2639 = vmatprep.subr.mxu0 0.0
    %2640 = vmatpush1.msra.mxu0 %v2633
    %2641 = vmatprep.subr.mxu0 0.0
    %2642 = vmatpush1.msra.mxu0 0.0
    %2643 = vmatprep.subr.mxu0 0.0
    %2644 = vmatpush1.msra.mxu0 0.0
    %2645 = vmatprep.subr.mxu0 0.0
    %2646 = vmatpush1.msra.mxu0 0.0
    %2647 = vmatprep.subr.mxu0 0.0
    %2648 = vmatpush1.msra.mxu0 0.0
    %2649 = vmatprep.subr.mxu0 0.0
    %2650 = vmatpush1.msra.mxu0 0.0
    %2651 = vmatprep.subr.mxu0 0.0
    %2652 = vmatpush1.msra.mxu0 0.0
    %2653 = vmatprep.subr.mxu0 0.0
    %2654 = vmatpush1.msra.mxu0 0.0
    %2655 = vmatprep.subr.mxu0 0.0
    %2656 = vmatpush1.msra.mxu0 0.0
    %2657 = vmatprep.subr.mxu0 0.0
    %2658 = vmatpush1.msra.mxu0 0.0
    %2659 = vmatprep.subr.mxu0 0.0
    %2660 = vmatpush1.msra.mxu0 0.0
    %2661 = vmatprep.subr.mxu0 0.0
    %2662 = vmatpush1.msra.mxu0 0.0
    %2663 = vmatprep.subr.mxu0 0.0
    %2664 = vmatpush1.msra.mxu0 0.0
    %2665 = vmatprep.subr.mxu0 0.0
    %2666 = vmatpush1.msra.mxu0 0.0
    %2667 = vmatprep.subr.mxu0 0.0
    %2668 = vmatpush1.msra.mxu0 0.0
    %2669 = vmatprep.subr.mxu0 0.0
    %2670 = vmatpush1.msra.mxu0 0.0
    %2671 = vmatprep.subr.mxu0 0.0
    %2672 = vmatpush1.msra.mxu0 0.0
    %2673 = vmatprep.subr.mxu0 0.0
    %2674 = vmatpush1.msra.mxu0 0.0
    %2675 = vmatprep.subr.mxu0 0.0
    %2676 = vmatpush1.msra.mxu0 0.0
    %2677 = vmatprep.subr.mxu0 0.0
    %2678 = vmatpush1.msra.mxu0 0.0
    %2679 = vmatprep.subr.mxu0 0.0
    %2680 = vmatpush1.msra.mxu0 0.0
    %2681 = vmatprep.subr.mxu0 0.0
    %2682 = vmatpush1.msra.mxu0 0.0
    %2683 = vmatprep.subr.mxu0 0.0
    %2684 = vmatpush1.msra.mxu0 0.0
    %2685 = vmatprep.subr.mxu0 0.0
    %2686 = vmatpush1.msra.mxu0 0.0
    %2687 = vmatprep.subr.mxu0 0.0
    %2688 = vmatpush1.msra.mxu0 0.0
    %2689 = vmatprep.subr.mxu0 0.0
    %2690 = vmatpush1.msra.mxu0 0.0
    %2691 = vmatprep.subr.mxu0 0.0
    %2692 = vmatpush1.msra.mxu0 0.0
    %2693 = vmatprep.subr.mxu0 0.0
    %2694 = vmatpush1.msra.mxu0 0.0
    %2695 = vmatprep.subr.mxu0 0.0
    %2696 = vmatpush1.msra.mxu0 0.0
    %2697 = vmatprep.subr.mxu0 0.0
    %2698 = vmatpush1.msra.mxu0 0.0
    %2699 = vmatprep.subr.mxu0 0.0
    %2700 = vmatpush1.msra.mxu0 0.0
    %2701 = vmatprep.mubr.f32.mxu0 0.0
    %2702 = vmatmul.mubr.f32.gmra.mrb[0].mxu0 %v2635
    %v2703 = vpop.f32.mrb[0].mxu0
    %v2704 = vadd.f32 0.0, %v2703
    %v2705 = vpop.f32.mrb[0].mxu0
    %2706 = vdwg.mxu0
    %v2708 = vsel %vm520, %v2606, 0
    %2710 = vmatprep.subr.mxu0 0.0
    %2711 = vmatpush1.msra.mxu0 %v2630
    %2712 = vmatprep.subr.mxu0 0.0
    %2713 = vmatpush1.msra.mxu0 %v2631
    %2714 = vmatprep.subr.mxu0 0.0
    %2715 = vmatpush1.msra.mxu0 0.0
    %2716 = vmatprep.subr.mxu0 0.0
    %2717 = vmatpush1.msra.mxu0 0.0
    %2718 = vmatprep.subr.mxu0 0.0
    %2719 = vmatpush1.msra.mxu0 0.0
    %2720 = vmatprep.subr.mxu0 0.0
    %2721 = vmatpush1.msra.mxu0 0.0
    %2722 = vmatprep.subr.mxu0 0.0
    %2723 = vmatpush1.msra.mxu0 0.0
    %2724 = vmatprep.subr.mxu0 0.0
    %2725 = vmatpush1.msra.mxu0 0.0
    %2726 = vmatprep.subr.mxu0 0.0
    %2727 = vmatpush1.msra.mxu0 0.0
    %2728 = vmatprep.subr.mxu0 0.0
    %2729 = vmatpush1.msra.mxu0 0.0
    %2730 = vmatprep.subr.mxu0 0.0
    %2731 = vmatpush1.msra.mxu0 0.0
    %2732 = vmatprep.subr.mxu0 0.0
    %2733 = vmatpush1.msra.mxu0 0.0
    %2734 = vmatprep.subr.mxu0 0.0
    %2735 = vmatpush1.msra.mxu0 0.0
    %2736 = vmatprep.subr.mxu0 0.0
    %2737 = vmatpush1.msra.mxu0 0.0
    %2738 = vmatprep.subr.mxu0 0.0
    %2739 = vmatpush1.msra.mxu0 0.0
    %2740 = vmatprep.subr.mxu0 0.0
    %2741 = vmatpush1.msra.mxu0 0.0
    %2742 = vmatprep.subr.mxu0 0.0
    %2743 = vmatpush1.msra.mxu0 0.0
    %2744 = vmatprep.subr.mxu0 0.0
    %2745 = vmatpush1.msra.mxu0 0.0
    %2746 = vmatprep.subr.mxu0 0.0
    %2747 = vmatpush1.msra.mxu0 0.0
    %2748 = vmatprep.subr.mxu0 0.0
    %2749 = vmatpush1.msra.mxu0 0.0
    %2750 = vmatprep.subr.mxu0 0.0
    %2751 = vmatpush1.msra.mxu0 0.0
    %2752 = vmatprep.subr.mxu0 0.0
    %2753 = vmatpush1.msra.mxu0 0.0
    %2754 = vmatprep.subr.mxu0 0.0
    %2755 = vmatpush1.msra.mxu0 0.0
    %2756 = vmatprep.subr.mxu0 0.0
    %2757 = vmatpush1.msra.mxu0 0.0
    %2758 = vmatprep.subr.mxu0 0.0
    %2759 = vmatpush1.msra.mxu0 0.0
    %2760 = vmatprep.subr.mxu0 0.0
    %2761 = vmatpush1.msra.mxu0 0.0
    %2762 = vmatprep.subr.mxu0 0.0
    %2763 = vmatpush1.msra.mxu0 0.0
    %2764 = vmatprep.subr.mxu0 0.0
    %2765 = vmatpush1.msra.mxu0 0.0
    %2766 = vmatprep.subr.mxu0 0.0
    %2767 = vmatpush1.msra.mxu0 0.0
    %2768 = vmatprep.subr.mxu0 0.0
    %2769 = vmatpush1.msra.mxu0 0.0
    %2770 = vmatprep.subr.mxu0 0.0
    %2771 = vmatpush1.msra.mxu0 0.0
    %2772 = vmatprep.subr.mxu0 0.0
    %2773 = vmatpush1.msra.mxu0 0.0
    %2774 = vmatprep.mubr.f32.mxu0 0.0
    %2775 = vmatmul.mubr.f32.gmra.mrb[0].mxu0 %v2708
    %v2776 = vpop.f32.mrb[0].mxu0
    %v2777 = vadd.f32 %v2704, %v2776
    %v2778 = vpop.f32.mrb[0].mxu0
    %2779 = vdwg.mxu0
    %v2780 = vld [vmem:[%s16] sm:$0x1]
    %v2782 = vlaneseq
    %v2783 = vshrl.u32 %v2782, 7
    %v2784 = vsub.s32 0, %v2783
    %v2785 = vrot.slane %v2780, %v2784
    %v2787 = vadd.f32 %v2777, %v2785
    %v2788 = vtanh.pop %v2787
    %v2789 = vld [vmem:[%s17] sm:$0xff]
    %v2790 = vld [vmem:[%s17 + $0x8] sm:$0xff]
    %v2791 = vld [vmem:[%s17 + $0x10] sm:$0xff]
    %v2792 = vld [vmem:[%s17 + $0x18] sm:$0xff]
    %v2793 = vld [vmem:[%s18] sm:$0x1]
    %v2795 = vlaneseq
    %v2796 = vshrl.u32 %v2795, 7
    %v2797 = vsub.s32 0, %v2796
    %v2798 = vrot.slane %v2793, %v2797
    %v2801 = vsel %vm246, %v2788, 0
    %2803 = vmatprep.subr.mxu0 0.0
    %2804 = vmatpush1.msra.mxu0 %v2789
    %2805 = vmatprep.subr.mxu0 0.0
    %2806 = vmatpush1.msra.mxu0 %v2790
    %2807 = vmatprep.subr.mxu0 0.0
    %2808 = vmatpush1.msra.mxu0 %v2791
    %2809 = vmatprep.subr.mxu0 0.0
    %2810 = vmatpush1.msra.mxu0 %v2792
    %2811 = vmatprep.subr.mxu0 0.0
    %2812 = vmatpush1.msra.mxu0 0.0
    %2813 = vmatprep.subr.mxu0 0.0
    %2814 = vmatpush1.msra.mxu0 0.0
    %2815 = vmatprep.subr.mxu0 0.0
    %2816 = vmatpush1.msra.mxu0 0.0
    %2817 = vmatprep.subr.mxu0 0.0
    %2818 = vmatpush1.msra.mxu0 0.0
    %2819 = vmatprep.subr.mxu0 0.0
    %2820 = vmatpush1.msra.mxu0 0.0
    %2821 = vmatprep.subr.mxu0 0.0
    %2822 = vmatpush1.msra.mxu0 0.0
    %2823 = vmatprep.subr.mxu0 0.0
    %2824 = vmatpush1.msra.mxu0 0.0
    %2825 = vmatprep.subr.mxu0 0.0
    %2826 = vmatpush1.msra.mxu0 0.0
    %2827 = vmatprep.subr.mxu0 0.0
    %2828 = vmatpush1.msra.mxu0 0.0
    %2829 = vmatprep.subr.mxu0 0.0
    %2830 = vmatpush1.msra.mxu0 0.0
    %2831 = vmatprep.subr.mxu0 0.0
    %2832 = vmatpush1.msra.mxu0 0.0
    %2833 = vmatprep.subr.mxu0 0.0
    %2834 = vmatpush1.msra.mxu0 0.0
    %2835 = vmatprep.subr.mxu0 0.0
    %2836 = vmatpush1.msra.mxu0 0.0
    %2837 = vmatprep.subr.mxu0 0.0
    %2838 = vmatpush1.msra.mxu0 0.0
    %2839 = vmatprep.subr.mxu0 0.0
    %2840 = vmatpush1.msra.mxu0 0.0
    %2841 = vmatprep.subr.mxu0 0.0
    %2842 = vmatpush1.msra.mxu0 0.0
    %2843 = vmatprep.subr.mxu0 0.0
    %2844 = vmatpush1.msra.mxu0 0.0
    %2845 = vmatprep.subr.mxu0 0.0
    %2846 = vmatpush1.msra.mxu0 0.0
    %2847 = vmatprep.subr.mxu0 0.0
    %2848 = vmatpush1.msra.mxu0 0.0
    %2849 = vmatprep.subr.mxu0 0.0
    %2850 = vmatpush1.msra.mxu0 0.0
    %2851 = vmatprep.subr.mxu0 0.0
    %2852 = vmatpush1.msra.mxu0 0.0
    %2853 = vmatprep.subr.mxu0 0.0
    %2854 = vmatpush1.msra.mxu0 0.0
    %2855 = vmatprep.subr.mxu0 0.0
    %2856 = vmatpush1.msra.mxu0 0.0
    %2857 = vmatprep.subr.mxu0 0.0
    %2858 = vmatpush1.msra.mxu0 0.0
    %2859 = vmatprep.subr.mxu0 0.0
    %2860 = vmatpush1.msra.mxu0 0.0
    %2861 = vmatprep.subr.mxu0 0.0
    %2862 = vmatpush1.msra.mxu0 0.0
    %2863 = vmatprep.subr.mxu0 0.0
    %2864 = vmatpush1.msra.mxu0 0.0
    %2865 = vmatprep.subr.mxu0 0.0
    %2866 = vmatpush1.msra.mxu0 0.0
    %2867 = vmatprep.mubr.f32.mxu0 0.0
    %2868 = vmatmul.mubr.f32.gmra.mrb[0].mxu0 %v2801
    %v2869 = vpop.f32.mrb[0].mxu0
    %v2870 = vadd.f32 %v2798, %v2869
    %v2871 = vpop.f32.mrb[0].mxu0
    %2872 = vdwg.mxu0
    %2873 = vst [vmem:[#allocation23] sm:$0xff] %v2870
    // Predicated region
    $region122: #{tpu_custom_call.1} parent=1 // pred_check
      _
    $region123: #{tpu_custom_call.1} parent=1 // pred_check_branch
      %2875 = sbr.rel (0) target = $region125
    $region124: #{tpu_custom_call.1} parent=1 // pred_region
      %s2877 = ssub.s32 128, 128
      %2878 = vsyncadd [#allocation7], %s2877
      %s2880 = sshll.u32 [#allocation23], 4
      %s2881 = int_to_ptr.vmem [resolvable:$true] %s2880
      %2883 = dma.vmem_to_hbm [thread:$0]  %s2881, 128, %s19, [#allocation7]
    $region125: #{tpu_custom_call.1} parent=1 // pred_fallthru
      _
    // Predicated region
    $region126: #{tpu_custom_call.1} parent=1 // pred_check
      _
    $region127: #{tpu_custom_call.1} parent=1 // pred_check_branch
      %2885 = sbr.rel (0) target = $region129
    $region128: #{tpu_custom_call.1} parent=1 // pred_region
      %2886 = dma.done [#allocation7], 128
    $region129: #{tpu_custom_call.1} parent=1 // pred_fallthru
      _
    %2887 = vsyncpa [#allocation6], 1
    %2888 = vsyncpa [#allocation9], 1
    %2889 = vsyncpa [#allocation12], 1
    %2890 = vsyncpa [#allocation15], 1
    %2891 = vsyncpa [#allocation18], 1
    %2892 = vsyncpa [#allocation21], 1
    %2893 = vsyncpa [#allocation7], 1

</llo_original>
